<compile_context>
chip_gen: v7x
topology: tpu7x:2x2x1
jax: 0.10.0
libtpu: 0.0.40
codegen_flags: <defaults>
</compile_context>

<pallas_src>
import functools
import math

import jax
import jax.numpy as jnp
from jax.experimental import pallas as pl
from jax.experimental.pallas import tpu as pltpu

# ----------------------------- config -----------------------------
VOCAB = 64          # num_embedding
D_MODEL = 32        # embedding_dim
NHEAD = 2
HEAD_DIM = D_MODEL // NHEAD
PAD_ID = 0
BOS_ID = 1
LN_EPS = 1e-5
NEG_INF = -1e30
LANES = 128

_W_MATS = [
    "e_wq", "e_wk", "e_wv", "e_wo", "e_w1", "e_w2",
    "d_sa_wq", "d_sa_wk", "d_sa_wv", "d_sa_wo",
    "d_ca_wq", "d_ca_wk", "d_ca_wv", "d_ca_wo",
    "d_w1", "d_w2",
]
_VECS = [
    "e_ln1_g", "e_ln1_b", "e_bq", "e_bk", "e_bv", "e_bo",
    "e_ln2_g", "e_ln2_b", "e_b1", "e_b2", "enc_ng", "enc_nb",
    "d_ln1_g", "d_ln1_b", "d_sa_bq", "d_sa_bk", "d_sa_bv", "d_sa_bo",
    "d_ln2_g", "d_ln2_b", "d_ca_bq", "d_ca_bk", "d_ca_bv", "d_ca_bo",
    "d_ln3_g", "d_ln3_b", "d_b1", "d_b2", "dec_ng", "dec_nb",
]


def _build_layout():
    layout = {}
    off = 0

    def add(name, rows, cols):
        nonlocal off
        layout[name] = (off, rows, cols)
        off += rows

    add("emb", VOCAB, D_MODEL)
    for n in _W_MATS:
        add(n, D_MODEL, D_MODEL)
    add("head_w", D_MODEL, LANES)          # padded to 128 lanes (cols >= VOCAB are zero)
    for n in _VECS:
        add(n, 1, D_MODEL)
    add("head_b", 1, LANES)
    rows = ((off + 7) // 8) * 8
    return layout, rows


LAYOUT, SLAB_ROWS = _build_layout()


# ----------------------------- fused kernel -----------------------------
def _fused_kernel(tok_ref, pads_ref, slab_ref, logits_ref, part_ref, *, S, T):
    f32 = jnp.float32
    D = D_MODEL
    scale = 1.0 / math.sqrt(HEAD_DIM)

    def W(name):
        r, n, c = LAYOUT[name]
        return slab_ref[r:r + n, 0:c]

    def ln(x, g, b):
        mu = jnp.mean(x, axis=-1, keepdims=True)
        var = jnp.mean((x - mu) ** 2, axis=-1, keepdims=True)
        return (x - mu) * jax.lax.rsqrt(var + LN_EPS) * W(g) + W(b)

    # constant per-head lane masks (avoid per-head lane slicing / relayouts)
    dlane = jax.lax.broadcasted_iota(jnp.int32, (1, D), 1)
    head_masks = [
        ((dlane >= h * HEAD_DIM) & (dlane < (h + 1) * HEAD_DIM)).astype(f32)
        for h in range(NHEAD)
    ]

    def mha(xq, xkv, p, add_mask):
        # add_mask: (1, Mk) additive key-padding mask or None
        q = (jnp.dot(xq, W(p + "_wq"), preferred_element_type=f32) + W(p + "_bq")) * scale
        k = jnp.dot(xkv, W(p + "_wk"), preferred_element_type=f32) + W(p + "_bk")
        v = jnp.dot(xkv, W(p + "_wv"), preferred_element_type=f32) + W(p + "_bv")
        concat = None
        for hm in head_masks:
            s = jax.lax.dot_general(q * hm, k, (((1,), (1,)), ((), ())),
                                    preferred_element_type=f32)         # (Mq, Mk)
            if add_mask is not None:
                s = s + add_mask
            s = s - jnp.max(s, axis=-1, keepdims=True)
            e = jnp.exp(s)
            prob = e / jnp.sum(e, axis=-1, keepdims=True)
            o = jnp.dot(prob, v * hm, preferred_element_type=f32)        # head lanes only
            concat = o if concat is None else concat + o
        return jnp.dot(concat, W(p + "_wo"), preferred_element_type=f32) + W(p + "_bo")

    def ffn(x, w1, b1, w2, b2):
        z = jnp.maximum(jnp.dot(x, W(w1), preferred_element_type=f32) + W(b1), 0.0)
        return jnp.dot(z, W(w2), preferred_element_type=f32) + W(b2)

    # ---- fused embedding lookup (src + tgt in one one-hot matmul) ----
    ids = tok_ref[0, 0:S + T, :]                                        # (S+T, 1) int32
    iota_v = jax.lax.broadcasted_iota(jnp.int32, (S + T, VOCAB), 1)
    onehot = (iota_v == ids).astype(f32)
    emb_all = jnp.dot(onehot, W("emb"), preferred_element_type=f32)     # (S+T, D)
    src = emb_all[0:S]
    tgt = emb_all[S:S + T]

    add_x = pads_ref[0, 0:1, 0:S]                                       # (1, S) additive
    add_y = pads_ref[0, 1:2, 0:T]                                       # (1, T) additive

    # ---- encoder (pre-LN) ----
    x = src
    h = ln(x, "e_ln1_g", "e_ln1_b")
    x = x + mha(h, h, "e", add_x)
    x = x + ffn(ln(x, "e_ln2_g", "e_ln2_b"), "e_w1", "e_b1", "e_w2", "e_b2")
    mem = ln(x, "enc_ng", "enc_nb")

    # ---- decoder (pre-LN); reference passes no causal mask / no memory kpm ----
    y = tgt
    h = ln(y, "d_ln1_g", "d_ln1_b")
    y = y + mha(h, h, "d_sa", add_y)
    y = y + mha(ln(y, "d_ln2_g", "d_ln2_b"), mem, "d_ca", None)
    y = y + ffn(ln(y, "d_ln3_g", "d_ln3_b"), "d_w1", "d_b1", "d_w2", "d_b2")
    dec = ln(y, "dec_ng", "dec_nb")

    # ---- head (lane-dense, 128 cols) + cross-entropy partials ----
    logits = jnp.dot(dec, W("head_w"), preferred_element_type=f32) + W("head_b")  # (T,128)
    logits_ref[0, :, :] = logits

    lane = jax.lax.broadcasted_iota(jnp.int32, (T, LANES), 1)
    col_valid = lane < VOCAB
    tgt_ids = tok_ref[0, S + T:S + 2 * T, :]                            # (T,1) int32
    mx = jnp.max(jnp.where(col_valid, logits, NEG_INF), axis=-1, keepdims=True)
    sumexp = jnp.sum(jnp.where(col_valid, jnp.exp(logits - mx), 0.0),
                     axis=-1, keepdims=True)
    lse = jnp.log(sumexp) + mx
    tgt_logit = jnp.sum(jnp.where(lane == tgt_ids, logits, 0.0), axis=-1, keepdims=True)
    nll = lse - tgt_logit                                               # (T,1)
    valid = (tgt_ids != PAD_ID).astype(f32)
    num = jnp.sum(nll * valid, axis=0, keepdims=True)                   # (1,1)
    den = jnp.sum(valid, axis=0, keepdims=True)                         # (1,1)
    lane1 = jax.lax.broadcasted_iota(jnp.int32, (1, LANES), 1)
    part_ref[0, :, :] = (jnp.where(lane1 == 0, num, 0.0)
                         + jnp.where(lane1 == 1, den, 0.0))


# ----------------------------- wrapper -----------------------------
def model_forward(slab, x_ids, x_mask, y_ids, y_mask):
    """Mirrors Model.forward (eval path). Masks: True == padded position."""
    B, S = x_ids.shape
    T = y_ids.shape[1] - 1

    y_in = y_ids[:, :-1]
    target = y_ids[:, 1:]
    y_in_mask = y_mask[:, :-1]

    tok = jnp.concatenate(
        [x_ids.astype(jnp.int32), y_in.astype(jnp.int32), target.astype(jnp.int32)],
        axis=1)[:, :, None]                                             # (B, S+2T, 1)

    add_x = jnp.where(x_mask, NEG_INF, 0.0).astype(jnp.float32)         # (B, S)
    add_y = jnp.where(y_in_mask, NEG_INF, 0.0).astype(jnp.float32)      # (B, T)
    pads = jnp.stack([jnp.pad(add_x, ((0, 0), (0, LANES - S))),
                      jnp.pad(add_y, ((0, 0), (0, LANES - T)))], axis=1)  # (B, 2, 128)

    kernel = functools.partial(_fused_kernel, S=S, T=T)
    logits_pad, parts = pl.pallas_call(
        kernel,
        out_shape=(
            jax.ShapeDtypeStruct((B, T, LANES), jnp.float32),
            jax.ShapeDtypeStruct((B, 1, LANES), jnp.float32),
        ),
        grid=(B,),
        in_specs=[
            pl.BlockSpec((1, S + 2 * T, 1), lambda b: (b, 0, 0)),        # token data
            pl.BlockSpec((1, 2, LANES), lambda b: (b, 0, 0)),            # additive pad rows
            pl.BlockSpec((SLAB_ROWS, LANES), lambda b: (0, 0)),          # weight slab (once)
        ],
        out_specs=(
            pl.BlockSpec((1, T, LANES), lambda b: (b, 0, 0)),
            pl.BlockSpec((1, 1, LANES), lambda b: (b, 0, 0)),
        ),
        compiler_params=pltpu.CompilerParams(dimension_semantics=("parallel",)),
    )(tok, pads, slab)

    prediction = logits_pad[:, :, :VOCAB]
    num = jnp.sum(parts[:, 0, 0])
    den = jnp.maximum(jnp.sum(parts[:, 0, 1]), 1.0)
    return prediction, num / den


# TODO(synk): the teacher-forcing branch (host random.random() gate + python decode loop)
# is host-side control flow and is not implemented as a kernel.

# ----------------------------- params -----------------------------
def init_params(key):
    ks = jax.random.split(key, len(_W_MATS) + 2)
    s = 0.05
    D, V = D_MODEL, VOCAB

    params = {}
    emb = jax.random.normal(ks[0], (V, D), jnp.float32) / math.sqrt(D)   # nn.Embedding /sqrt(D)
    params["emb"] = emb.at[PAD_ID].set(0.0)                              # padding_idx row
    for i, n in enumerate(_W_MATS):
        params[n] = jax.random.normal(ks[i + 1], (D, D), jnp.float32) * s
    params["head_w"] = jax.random.normal(ks[-1], (D, V), jnp.float32) * s / math.sqrt(D)
    params["head_b"] = jnp.zeros((1, V), jnp.float32)
    for n in _VECS:
        is_gain = n.endswith("_g") or n.endswith("ng")
        params[n] = jnp.ones((1, D), jnp.float32) if is_gain else jnp.zeros((1, D), jnp.float32)
    return params


def pack_params(params):
    """Pack all parameters into a single (SLAB_ROWS, 128) f32 slab (done once, host-side)."""
    slab = jnp.zeros((SLAB_ROWS, LANES), jnp.float32)
    for name, (r, _rows, _cols) in LAYOUT.items():
        arr = jnp.asarray(params[name], jnp.float32)
        slab = slab.at[r:r + arr.shape[0], 0:arr.shape[1]].set(arr)
    return slab


# ----------------------------- main -----------------------------
if __name__ == "__main__":
    key = jax.random.PRNGKey(0)
    kp, kx, ky = jax.random.split(key, 3)

    B, S, TY = 2, 8, 9  # source len 8, target len 9 (decoder sees 8, predicts 8)

    params = init_params(kp)
    slab = jax.block_until_ready(pack_params(params))   # pack once

    x_ids = jax.random.randint(kx, (B, S), 2, VOCAB, dtype=jnp.int32)
    x_ids = x_ids.at[1, -2:].set(PAD_ID)                 # pad tail of second source
    x_mask = x_ids == PAD_ID                             # True == padded

    y_ids = jax.random.randint(ky, (B, TY), 2, VOCAB, dtype=jnp.int32)
    y_ids = y_ids.at[:, 0].set(BOS_ID)
    y_ids = y_ids.at[0, -1:].set(PAD_ID)                 # pad tail of first target
    y_mask = y_ids == PAD_ID

    fwd = jax.jit(model_forward)
    prediction, loss = fwd(slab, x_ids, x_mask, y_ids, y_mask)
    jax.block_until_ready((prediction, loss))

    assert prediction.shape == (B, TY - 1, VOCAB)
    assert bool(jnp.isfinite(loss))
    print("KERNEL_OK")
</pallas_src>

<mosaic_0001>
module attributes {stable_mosaic.version = 11 : i64} {
  func.func @_fused_kernel(%arg0: i32, %arg1: memref<1x24x1xi32, #tpu.memory_space<vmem>>, %arg2: memref<1x2x128xf32, #tpu.memory_space<vmem>>, %arg3: memref<640x128xf32, #tpu.memory_space<vmem>>, %arg4: memref<1x8x128xf32, #tpu.memory_space<vmem>>, %arg5: memref<1x1x128xf32, #tpu.memory_space<vmem>>) attributes {dimension_semantics = [#tpu.dimension_semantics<parallel>], iteration_bounds = array<i64: 2>, scalar_prefetch = 0 : i64, scratch_operands = 0 : i64, tpu.core_type = #tpu.core_type<tc>, window_params = [{transform_indices = @transform_0, window_bounds = array<i64: 1, 24, 1>}, {transform_indices = @transform_1, window_bounds = array<i64: 1, 2, 128>}, {pipeline_mode = #tpu.pipeline_mode<synchronous>, transform_indices = @transform_2, window_bounds = array<i64: 640, 128>}, {transform_indices = @transform_3, window_bounds = array<i64: 1, 8, 128>}, {transform_indices = @transform_4, window_bounds = array<i64: 1, 1, 128>}]} {
    %0 = tpu.iota {dimensions = array<i32: 1>} : vector<1x32xi32>
    %c0_i32 = arith.constant 0 : i32
    %1 = vector.broadcast %c0_i32 : i32 to vector<1x32xi32>
    %2 = arith.cmpi sge, %0, %1 : vector<1x32xi32>
    %c16_i32 = arith.constant 16 : i32
    %3 = vector.broadcast %c16_i32 : i32 to vector<1x32xi32>
    %4 = arith.cmpi slt, %0, %3 : vector<1x32xi32>
    %5 = arith.andi %2, %4 : vector<1x32xi1>
    %6 = arith.extui %5 : vector<1x32xi1> to vector<1x32xi32>
    %7 = arith.sitofp %6 : vector<1x32xi32> to vector<1x32xf32>
    %c16_i32_0 = arith.constant 16 : i32
    %8 = vector.broadcast %c16_i32_0 : i32 to vector<1x32xi32>
    %9 = arith.cmpi sge, %0, %8 : vector<1x32xi32>
    %c32_i32 = arith.constant 32 : i32
    %10 = vector.broadcast %c32_i32 : i32 to vector<1x32xi32>
    %11 = arith.cmpi slt, %0, %10 : vector<1x32xi32>
    %12 = arith.andi %9, %11 : vector<1x32xi1>
    %13 = arith.extui %12 : vector<1x32xi1> to vector<1x32xi32>
    %14 = arith.sitofp %13 : vector<1x32xi32> to vector<1x32xf32>
    %c0 = arith.constant 0 : index
    %c0_1 = arith.constant 0 : index
    %c0_2 = arith.constant 0 : index
    %15 = vector.load %arg1[%c0, %c0_1, %c0_2] : memref<1x24x1xi32, #tpu.memory_space<vmem>>, vector<1x16x1xi32>
    %16 = vector.shape_cast %15 : vector<1x16x1xi32> to vector<16x1xi32>
    %17 = tpu.iota {dimensions = array<i32: 1>} : vector<16x64xi32>
    %18 = vector.broadcast %16 : vector<16x1xi32> to vector<16x64xi32>
    %19 = arith.cmpi eq, %17, %18 : vector<16x64xi32>
    %20 = arith.extui %19 : vector<16x64xi1> to vector<16x64xi32>
    %21 = arith.sitofp %20 : vector<16x64xi32> to vector<16x64xf32>
    %c0_3 = arith.constant 0 : index
    %c0_4 = arith.constant 0 : index
    %22 = vector.load %arg3[%c0_3, %c0_4] : memref<640x128xf32, #tpu.memory_space<vmem>>, vector<64x32xf32>
    %cst = arith.constant dense<0.000000e+00> : vector<16x32xf32>
    %23 = tpu.matmul %21, %22, %cst {dimension_numbers = #tpu.dot_dimension_numbers<[1], [0], [0], [1], [0, 0, 1, 1], [], []>} : vector<16x64xf32>, vector<64x32xf32>, vector<16x32xf32> -> vector<16x32xf32>
    %24 = vector.extract_strided_slice %23 {offsets = [0, 0], sizes = [8, 32], strides = [1, 1]} : vector<16x32xf32> to vector<8x32xf32>
    %25 = vector.extract_strided_slice %23 {offsets = [8, 0], sizes = [8, 32], strides = [1, 1]} : vector<16x32xf32> to vector<8x32xf32>
    %c0_5 = arith.constant 0 : index
    %c0_6 = arith.constant 0 : index
    %c0_7 = arith.constant 0 : index
    %26 = vector.load %arg2[%c0_5, %c0_6, %c0_7] : memref<1x2x128xf32, #tpu.memory_space<vmem>>, vector<1x1x8xf32>
    %27 = vector.shape_cast %26 : vector<1x1x8xf32> to vector<1x8xf32>
    %c0_8 = arith.constant 0 : index
    %c1 = arith.constant 1 : index
    %c0_9 = arith.constant 0 : index
    %28 = vector.load %arg2[%c0_8, %c1, %c0_9] : memref<1x2x128xf32, #tpu.memory_space<vmem>>, vector<1x1x8xf32>
    %29 = vector.shape_cast %28 : vector<1x1x8xf32> to vector<1x8xf32>
    %cst_10 = arith.constant dense<0.000000e+00> : vector<8xf32>
    %30 = vector.multi_reduction <add>, %24, %cst_10 [1] : vector<8x32xf32> to vector<8xf32>
    %31 = vector.shape_cast %30 : vector<8xf32> to vector<8x1xf32>
    %cst_11 = arith.constant 3.200000e+01 : f32
    %32 = vector.broadcast %cst_11 : f32 to vector<8x1xf32>
    %33 = arith.divf %31, %32 : vector<8x1xf32>
    %34 = vector.broadcast %33 : vector<8x1xf32> to vector<8x32xf32>
    %35 = arith.subf %24, %34 : vector<8x32xf32>
    %36 = arith.mulf %35, %35 : vector<8x32xf32>
    %cst_12 = arith.constant dense<0.000000e+00> : vector<8xf32>
    %37 = vector.multi_reduction <add>, %36, %cst_12 [1] : vector<8x32xf32> to vector<8xf32>
    %38 = vector.shape_cast %37 : vector<8xf32> to vector<8x1xf32>
    %cst_13 = arith.constant 3.200000e+01 : f32
    %39 = vector.broadcast %cst_13 : f32 to vector<8x1xf32>
    %40 = arith.divf %38, %39 : vector<8x1xf32>
    %41 = vector.broadcast %33 : vector<8x1xf32> to vector<8x32xf32>
    %42 = arith.subf %24, %41 : vector<8x32xf32>
    %cst_14 = arith.constant 9.99999974E-6 : f32
    %43 = vector.broadcast %cst_14 : f32 to vector<8x1xf32>
    %44 = arith.addf %40, %43 : vector<8x1xf32>
    %45 = math.rsqrt %44 : vector<8x1xf32>
    %46 = vector.broadcast %45 : vector<8x1xf32> to vector<8x32xf32>
    %47 = arith.mulf %42, %46 : vector<8x32xf32>
    %c608 = arith.constant 608 : index
    %c0_15 = arith.constant 0 : index
    %48 = vector.load %arg3[%c608, %c0_15] : memref<640x128xf32, #tpu.memory_space<vmem>>, vector<1x32xf32>
    %49 = vector.broadcast %48 : vector<1x32xf32> to vector<8x32xf32>
    %50 = arith.mulf %47, %49 : vector<8x32xf32>
    %c609 = arith.constant 609 : index
    %c0_16 = arith.constant 0 : index
    %51 = vector.load %arg3[%c609, %c0_16] : memref<640x128xf32, #tpu.memory_space<vmem>>, vector<1x32xf32>
    %52 = vector.broadcast %51 : vector<1x32xf32> to vector<8x32xf32>
    %53 = arith.addf %50, %52 : vector<8x32xf32>
    %c64 = arith.constant 64 : index
    %c0_17 = arith.constant 0 : index
    %54 = vector.load %arg3[%c64, %c0_17] : memref<640x128xf32, #tpu.memory_space<vmem>>, vector<32x32xf32>
    %cst_18 = arith.constant dense<0.000000e+00> : vector<8x32xf32>
    %55 = tpu.matmul %53, %54, %cst_18 {dimension_numbers = #tpu.dot_dimension_numbers<[1], [0], [0], [1], [0, 0, 1, 1], [], []>} : vector<8x32xf32>, vector<32x32xf32>, vector<8x32xf32> -> vector<8x32xf32>
    %c610 = arith.constant 610 : index
    %c0_19 = arith.constant 0 : index
    %56 = vector.load %arg3[%c610, %c0_19] : memref<640x128xf32, #tpu.memory_space<vmem>>, vector<1x32xf32>
    %57 = vector.broadcast %56 : vector<1x32xf32> to vector<8x32xf32>
    %58 = arith.addf %55, %57 : vector<8x32xf32>
    %cst_20 = arith.constant 2.500000e-01 : f32
    %59 = vector.broadcast %cst_20 : f32 to vector<8x32xf32>
    %60 = arith.mulf %58, %59 : vector<8x32xf32>
    %c96 = arith.constant 96 : index
    %c0_21 = arith.constant 0 : index
    %61 = vector.load %arg3[%c96, %c0_21] : memref<640x128xf32, #tpu.memory_space<vmem>>, vector<32x32xf32>
    %cst_22 = arith.constant dense<0.000000e+00> : vector<8x32xf32>
    %62 = tpu.matmul %53, %61, %cst_22 {dimension_numbers = #tpu.dot_dimension_numbers<[1], [0], [0], [1], [0, 0, 1, 1], [], []>} : vector<8x32xf32>, vector<32x32xf32>, vector<8x32xf32> -> vector<8x32xf32>
    %c611 = arith.constant 611 : index
    %c0_23 = arith.constant 0 : index
    %63 = vector.load %arg3[%c611, %c0_23] : memref<640x128xf32, #tpu.memory_space<vmem>>, vector<1x32xf32>
    %64 = vector.broadcast %63 : vector<1x32xf32> to vector<8x32xf32>
    %65 = arith.addf %62, %64 : vector<8x32xf32>
    %c128 = arith.constant 128 : index
    %c0_24 = arith.constant 0 : index
    %66 = vector.load %arg3[%c128, %c0_24] : memref<640x128xf32, #tpu.memory_space<vmem>>, vector<32x32xf32>
    %cst_25 = arith.constant dense<0.000000e+00> : vector<8x32xf32>
    %67 = tpu.matmul %53, %66, %cst_25 {dimension_numbers = #tpu.dot_dimension_numbers<[1], [0], [0], [1], [0, 0, 1, 1], [], []>} : vector<8x32xf32>, vector<32x32xf32>, vector<8x32xf32> -> vector<8x32xf32>
    %c612 = arith.constant 612 : index
    %c0_26 = arith.constant 0 : index
    %68 = vector.load %arg3[%c612, %c0_26] : memref<640x128xf32, #tpu.memory_space<vmem>>, vector<1x32xf32>
    %69 = vector.broadcast %68 : vector<1x32xf32> to vector<8x32xf32>
    %70 = arith.addf %67, %69 : vector<8x32xf32>
    %71 = vector.broadcast %7 : vector<1x32xf32> to vector<8x32xf32>
    %72 = arith.mulf %60, %71 : vector<8x32xf32>
    %cst_27 = arith.constant dense<0.000000e+00> : vector<8x8xf32>
    %73 = tpu.matmul %72, %65, %cst_27 {dimension_numbers = #tpu.dot_dimension_numbers<[1], [1], [0], [0], [0, 0, 1, 0], [], []>} : vector<8x32xf32>, vector<8x32xf32>, vector<8x8xf32> -> vector<8x8xf32>
    %74 = vector.broadcast %27 : vector<1x8xf32> to vector<8x8xf32>
    %75 = arith.addf %73, %74 : vector<8x8xf32>
    %cst_28 = arith.constant dense<0xFF800000> : vector<8xf32>
    %76 = vector.multi_reduction <maximumf>, %75, %cst_28 [1] : vector<8x8xf32> to vector<8xf32>
    %77 = vector.shape_cast %76 : vector<8xf32> to vector<8x1xf32>
    %78 = vector.broadcast %77 : vector<8x1xf32> to vector<8x8xf32>
    %79 = arith.subf %75, %78 : vector<8x8xf32>
    %80 = math.exp %79 : vector<8x8xf32>
    %cst_29 = arith.constant dense<0.000000e+00> : vector<8xf32>
    %81 = vector.multi_reduction <add>, %80, %cst_29 [1] : vector<8x8xf32> to vector<8xf32>
    %82 = vector.shape_cast %81 : vector<8xf32> to vector<8x1xf32>
    %83 = vector.broadcast %82 : vector<8x1xf32> to vector<8x8xf32>
    %84 = arith.divf %80, %83 : vector<8x8xf32>
    %85 = vector.broadcast %7 : vector<1x32xf32> to vector<8x32xf32>
    %86 = arith.mulf %70, %85 : vector<8x32xf32>
    %cst_30 = arith.constant dense<0.000000e+00> : vector<8x32xf32>
    %87 = tpu.matmul %84, %86, %cst_30 {dimension_numbers = #tpu.dot_dimension_numbers<[1], [0], [0], [1], [0, 0, 1, 1], [], []>} : vector<8x8xf32>, vector<8x32xf32>, vector<8x32xf32> -> vector<8x32xf32>
    %88 = vector.broadcast %14 : vector<1x32xf32> to vector<8x32xf32>
    %89 = arith.mulf %60, %88 : vector<8x32xf32>
    %cst_31 = arith.constant dense<0.000000e+00> : vector<8x8xf32>
    %90 = tpu.matmul %89, %65, %cst_31 {dimension_numbers = #tpu.dot_dimension_numbers<[1], [1], [0], [0], [0, 0, 1, 0], [], []>} : vector<8x32xf32>, vector<8x32xf32>, vector<8x8xf32> -> vector<8x8xf32>
    %91 = vector.broadcast %27 : vector<1x8xf32> to vector<8x8xf32>
    %92 = arith.addf %90, %91 : vector<8x8xf32>
    %cst_32 = arith.constant dense<0xFF800000> : vector<8xf32>
    %93 = vector.multi_reduction <maximumf>, %92, %cst_32 [1] : vector<8x8xf32> to vector<8xf32>
    %94 = vector.shape_cast %93 : vector<8xf32> to vector<8x1xf32>
    %95 = vector.broadcast %94 : vector<8x1xf32> to vector<8x8xf32>
    %96 = arith.subf %92, %95 : vector<8x8xf32>
    %97 = math.exp %96 : vector<8x8xf32>
    %cst_33 = arith.constant dense<0.000000e+00> : vector<8xf32>
    %98 = vector.multi_reduction <add>, %97, %cst_33 [1] : vector<8x8xf32> to vector<8xf32>
    %99 = vector.shape_cast %98 : vector<8xf32> to vector<8x1xf32>
    %100 = vector.broadcast %99 : vector<8x1xf32> to vector<8x8xf32>
    %101 = arith.divf %97, %100 : vector<8x8xf32>
    %102 = vector.broadcast %14 : vector<1x32xf32> to vector<8x32xf32>
    %103 = arith.mulf %70, %102 : vector<8x32xf32>
    %cst_34 = arith.constant dense<0.000000e+00> : vector<8x32xf32>
    %104 = tpu.matmul %101, %103, %cst_34 {dimension_numbers = #tpu.dot_dimension_numbers<[1], [0], [0], [1], [0, 0, 1, 1], [], []>} : vector<8x8xf32>, vector<8x32xf32>, vector<8x32xf32> -> vector<8x32xf32>
    %105 = arith.addf %87, %104 : vector<8x32xf32>
    %c160 = arith.constant 160 : index
    %c0_35 = arith.constant 0 : index
    %106 = vector.load %arg3[%c160, %c0_35] : memref<640x128xf32, #tpu.memory_space<vmem>>, vector<32x32xf32>
    %cst_36 = arith.constant dense<0.000000e+00> : vector<8x32xf32>
    %107 = tpu.matmul %105, %106, %cst_36 {dimension_numbers = #tpu.dot_dimension_numbers<[1], [0], [0], [1], [0, 0, 1, 1], [], []>} : vector<8x32xf32>, vector<32x32xf32>, vector<8x32xf32> -> vector<8x32xf32>
    %c613 = arith.constant 613 : index
    %c0_37 = arith.constant 0 : index
    %108 = vector.load %arg3[%c613, %c0_37] : memref<640x128xf32, #tpu.memory_space<vmem>>, vector<1x32xf32>
    %109 = vector.broadcast %108 : vector<1x32xf32> to vector<8x32xf32>
    %110 = arith.addf %107, %109 : vector<8x32xf32>
    %111 = arith.addf %24, %110 : vector<8x32xf32>
    %cst_38 = arith.constant dense<0.000000e+00> : vector<8xf32>
    %112 = vector.multi_reduction <add>, %111, %cst_38 [1] : vector<8x32xf32> to vector<8xf32>
    %113 = vector.shape_cast %112 : vector<8xf32> to vector<8x1xf32>
    %cst_39 = arith.constant 3.200000e+01 : f32
    %114 = vector.broadcast %cst_39 : f32 to vector<8x1xf32>
    %115 = arith.divf %113, %114 : vector<8x1xf32>
    %116 = vector.broadcast %115 : vector<8x1xf32> to vector<8x32xf32>
    %117 = arith.subf %111, %116 : vector<8x32xf32>
    %118 = arith.mulf %117, %117 : vector<8x32xf32>
    %cst_40 = arith.constant dense<0.000000e+00> : vector<8xf32>
    %119 = vector.multi_reduction <add>, %118, %cst_40 [1] : vector<8x32xf32> to vector<8xf32>
    %120 = vector.shape_cast %119 : vector<8xf32> to vector<8x1xf32>
    %cst_41 = arith.constant 3.200000e+01 : f32
    %121 = vector.broadcast %cst_41 : f32 to vector<8x1xf32>
    %122 = arith.divf %120, %121 : vector<8x1xf32>
    %123 = vector.broadcast %115 : vector<8x1xf32> to vector<8x32xf32>
    %124 = arith.subf %111, %123 : vector<8x32xf32>
    %cst_42 = arith.constant 9.99999974E-6 : f32
    %125 = vector.broadcast %cst_42 : f32 to vector<8x1xf32>
    %126 = arith.addf %122, %125 : vector<8x1xf32>
    %127 = math.rsqrt %126 : vector<8x1xf32>
    %128 = vector.broadcast %127 : vector<8x1xf32> to vector<8x32xf32>
    %129 = arith.mulf %124, %128 : vector<8x32xf32>
    %c614 = arith.constant 614 : index
    %c0_43 = arith.constant 0 : index
    %130 = vector.load %arg3[%c614, %c0_43] : memref<640x128xf32, #tpu.memory_space<vmem>>, vector<1x32xf32>
    %131 = vector.broadcast %130 : vector<1x32xf32> to vector<8x32xf32>
    %132 = arith.mulf %129, %131 : vector<8x32xf32>
    %c615 = arith.constant 615 : index
    %c0_44 = arith.constant 0 : index
    %133 = vector.load %arg3[%c615, %c0_44] : memref<640x128xf32, #tpu.memory_space<vmem>>, vector<1x32xf32>
    %134 = vector.broadcast %133 : vector<1x32xf32> to vector<8x32xf32>
    %135 = arith.addf %132, %134 : vector<8x32xf32>
    %c192 = arith.constant 192 : index
    %c0_45 = arith.constant 0 : index
    %136 = vector.load %arg3[%c192, %c0_45] : memref<640x128xf32, #tpu.memory_space<vmem>>, vector<32x32xf32>
    %cst_46 = arith.constant dense<0.000000e+00> : vector<8x32xf32>
    %137 = tpu.matmul %135, %136, %cst_46 {dimension_numbers = #tpu.dot_dimension_numbers<[1], [0], [0], [1], [0, 0, 1, 1], [], []>} : vector<8x32xf32>, vector<32x32xf32>, vector<8x32xf32> -> vector<8x32xf32>
    %c616 = arith.constant 616 : index
    %c0_47 = arith.constant 0 : index
    %138 = vector.load %arg3[%c616, %c0_47] : memref<640x128xf32, #tpu.memory_space<vmem>>, vector<1x32xf32>
    %139 = vector.broadcast %138 : vector<1x32xf32> to vector<8x32xf32>
    %140 = arith.addf %137, %139 : vector<8x32xf32>
    %cst_48 = arith.constant 0.000000e+00 : f32
    %141 = vector.broadcast %cst_48 : f32 to vector<8x32xf32>
    %142 = arith.maximumf %140, %141 : vector<8x32xf32>
    %c224 = arith.constant 224 : index
    %c0_49 = arith.constant 0 : index
    %143 = vector.load %arg3[%c224, %c0_49] : memref<640x128xf32, #tpu.memory_space<vmem>>, vector<32x32xf32>
    %cst_50 = arith.constant dense<0.000000e+00> : vector<8x32xf32>
    %144 = tpu.matmul %142, %143, %cst_50 {dimension_numbers = #tpu.dot_dimension_numbers<[1], [0], [0], [1], [0, 0, 1, 1], [], []>} : vector<8x32xf32>, vector<32x32xf32>, vector<8x32xf32> -> vector<8x32xf32>
    %c617 = arith.constant 617 : index
    %c0_51 = arith.constant 0 : index
    %145 = vector.load %arg3[%c617, %c0_51] : memref<640x128xf32, #tpu.memory_space<vmem>>, vector<1x32xf32>
    %146 = vector.broadcast %145 : vector<1x32xf32> to vector<8x32xf32>
    %147 = arith.addf %144, %146 : vector<8x32xf32>
    %148 = arith.addf %111, %147 : vector<8x32xf32>
    %cst_52 = arith.constant dense<0.000000e+00> : vector<8xf32>
    %149 = vector.multi_reduction <add>, %148, %cst_52 [1] : vector<8x32xf32> to vector<8xf32>
    %150 = vector.shape_cast %149 : vector<8xf32> to vector<8x1xf32>
    %cst_53 = arith.constant 3.200000e+01 : f32
    %151 = vector.broadcast %cst_53 : f32 to vector<8x1xf32>
    %152 = arith.divf %150, %151 : vector<8x1xf32>
    %153 = vector.broadcast %152 : vector<8x1xf32> to vector<8x32xf32>
    %154 = arith.subf %148, %153 : vector<8x32xf32>
    %155 = arith.mulf %154, %154 : vector<8x32xf32>
    %cst_54 = arith.constant dense<0.000000e+00> : vector<8xf32>
    %156 = vector.multi_reduction <add>, %155, %cst_54 [1] : vector<8x32xf32> to vector<8xf32>
    %157 = vector.shape_cast %156 : vector<8xf32> to vector<8x1xf32>
    %cst_55 = arith.constant 3.200000e+01 : f32
    %158 = vector.broadcast %cst_55 : f32 to vector<8x1xf32>
    %159 = arith.divf %157, %158 : vector<8x1xf32>
    %160 = vector.broadcast %152 : vector<8x1xf32> to vector<8x32xf32>
    %161 = arith.subf %148, %160 : vector<8x32xf32>
    %cst_56 = arith.constant 9.99999974E-6 : f32
    %162 = vector.broadcast %cst_56 : f32 to vector<8x1xf32>
    %163 = arith.addf %159, %162 : vector<8x1xf32>
    %164 = math.rsqrt %163 : vector<8x1xf32>
    %165 = vector.broadcast %164 : vector<8x1xf32> to vector<8x32xf32>
    %166 = arith.mulf %161, %165 : vector<8x32xf32>
    %c618 = arith.constant 618 : index
    %c0_57 = arith.constant 0 : index
    %167 = vector.load %arg3[%c618, %c0_57] : memref<640x128xf32, #tpu.memory_space<vmem>>, vector<1x32xf32>
    %168 = vector.broadcast %167 : vector<1x32xf32> to vector<8x32xf32>
    %169 = arith.mulf %166, %168 : vector<8x32xf32>
    %c619 = arith.constant 619 : index
    %c0_58 = arith.constant 0 : index
    %170 = vector.load %arg3[%c619, %c0_58] : memref<640x128xf32, #tpu.memory_space<vmem>>, vector<1x32xf32>
    %171 = vector.broadcast %170 : vector<1x32xf32> to vector<8x32xf32>
    %172 = arith.addf %169, %171 : vector<8x32xf32>
    %cst_59 = arith.constant dense<0.000000e+00> : vector<8xf32>
    %173 = vector.multi_reduction <add>, %25, %cst_59 [1] : vector<8x32xf32> to vector<8xf32>
    %174 = vector.shape_cast %173 : vector<8xf32> to vector<8x1xf32>
    %cst_60 = arith.constant 3.200000e+01 : f32
    %175 = vector.broadcast %cst_60 : f32 to vector<8x1xf32>
    %176 = arith.divf %174, %175 : vector<8x1xf32>
    %177 = vector.broadcast %176 : vector<8x1xf32> to vector<8x32xf32>
    %178 = arith.subf %25, %177 : vector<8x32xf32>
    %179 = arith.mulf %178, %178 : vector<8x32xf32>
    %cst_61 = arith.constant dense<0.000000e+00> : vector<8xf32>
    %180 = vector.multi_reduction <add>, %179, %cst_61 [1] : vector<8x32xf32> to vector<8xf32>
    %181 = vector.shape_cast %180 : vector<8xf32> to vector<8x1xf32>
    %cst_62 = arith.constant 3.200000e+01 : f32
    %182 = vector.broadcast %cst_62 : f32 to vector<8x1xf32>
    %183 = arith.divf %181, %182 : vector<8x1xf32>
    %184 = vector.broadcast %176 : vector<8x1xf32> to vector<8x32xf32>
    %185 = arith.subf %25, %184 : vector<8x32xf32>
    %cst_63 = arith.constant 9.99999974E-6 : f32
    %186 = vector.broadcast %cst_63 : f32 to vector<8x1xf32>
    %187 = arith.addf %183, %186 : vector<8x1xf32>
    %188 = math.rsqrt %187 : vector<8x1xf32>
    %189 = vector.broadcast %188 : vector<8x1xf32> to vector<8x32xf32>
    %190 = arith.mulf %185, %189 : vector<8x32xf32>
    %c620 = arith.constant 620 : index
    %c0_64 = arith.constant 0 : index
    %191 = vector.load %arg3[%c620, %c0_64] : memref<640x128xf32, #tpu.memory_space<vmem>>, vector<1x32xf32>
    %192 = vector.broadcast %191 : vector<1x32xf32> to vector<8x32xf32>
    %193 = arith.mulf %190, %192 : vector<8x32xf32>
    %c621 = arith.constant 621 : index
    %c0_65 = arith.constant 0 : index
    %194 = vector.load %arg3[%c621, %c0_65] : memref<640x128xf32, #tpu.memory_space<vmem>>, vector<1x32xf32>
    %195 = vector.broadcast %194 : vector<1x32xf32> to vector<8x32xf32>
    %196 = arith.addf %193, %195 : vector<8x32xf32>
    %c256 = arith.constant 256 : index
    %c0_66 = arith.constant 0 : index
    %197 = vector.load %arg3[%c256, %c0_66] : memref<640x128xf32, #tpu.memory_space<vmem>>, vector<32x32xf32>
    %cst_67 = arith.constant dense<0.000000e+00> : vector<8x32xf32>
    %198 = tpu.matmul %196, %197, %cst_67 {dimension_numbers = #tpu.dot_dimension_numbers<[1], [0], [0], [1], [0, 0, 1, 1], [], []>} : vector<8x32xf32>, vector<32x32xf32>, vector<8x32xf32> -> vector<8x32xf32>
    %c622 = arith.constant 622 : index
    %c0_68 = arith.constant 0 : index
    %199 = vector.load %arg3[%c622, %c0_68] : memref<640x128xf32, #tpu.memory_space<vmem>>, vector<1x32xf32>
    %200 = vector.broadcast %199 : vector<1x32xf32> to vector<8x32xf32>
    %201 = arith.addf %198, %200 : vector<8x32xf32>
    %cst_69 = arith.constant 2.500000e-01 : f32
    %202 = vector.broadcast %cst_69 : f32 to vector<8x32xf32>
    %203 = arith.mulf %201, %202 : vector<8x32xf32>
    %c288 = arith.constant 288 : index
    %c0_70 = arith.constant 0 : index
    %204 = vector.load %arg3[%c288, %c0_70] : memref<640x128xf32, #tpu.memory_space<vmem>>, vector<32x32xf32>
    %cst_71 = arith.constant dense<0.000000e+00> : vector<8x32xf32>
    %205 = tpu.matmul %196, %204, %cst_71 {dimension_numbers = #tpu.dot_dimension_numbers<[1], [0], [0], [1], [0, 0, 1, 1], [], []>} : vector<8x32xf32>, vector<32x32xf32>, vector<8x32xf32> -> vector<8x32xf32>
    %c623 = arith.constant 623 : index
    %c0_72 = arith.constant 0 : index
    %206 = vector.load %arg3[%c623, %c0_72] : memref<640x128xf32, #tpu.memory_space<vmem>>, vector<1x32xf32>
    %207 = vector.broadcast %206 : vector<1x32xf32> to vector<8x32xf32>
    %208 = arith.addf %205, %207 : vector<8x32xf32>
    %c320 = arith.constant 320 : index
    %c0_73 = arith.constant 0 : index
    %209 = vector.load %arg3[%c320, %c0_73] : memref<640x128xf32, #tpu.memory_space<vmem>>, vector<32x32xf32>
    %cst_74 = arith.constant dense<0.000000e+00> : vector<8x32xf32>
    %210 = tpu.matmul %196, %209, %cst_74 {dimension_numbers = #tpu.dot_dimension_numbers<[1], [0], [0], [1], [0, 0, 1, 1], [], []>} : vector<8x32xf32>, vector<32x32xf32>, vector<8x32xf32> -> vector<8x32xf32>
    %c624 = arith.constant 624 : index
    %c0_75 = arith.constant 0 : index
    %211 = vector.load %arg3[%c624, %c0_75] : memref<640x128xf32, #tpu.memory_space<vmem>>, vector<1x32xf32>
    %212 = vector.broadcast %211 : vector<1x32xf32> to vector<8x32xf32>
    %213 = arith.addf %210, %212 : vector<8x32xf32>
    %214 = vector.broadcast %7 : vector<1x32xf32> to vector<8x32xf32>
    %215 = arith.mulf %203, %214 : vector<8x32xf32>
    %cst_76 = arith.constant dense<0.000000e+00> : vector<8x8xf32>
    %216 = tpu.matmul %215, %208, %cst_76 {dimension_numbers = #tpu.dot_dimension_numbers<[1], [1], [0], [0], [0, 0, 1, 0], [], []>} : vector<8x32xf32>, vector<8x32xf32>, vector<8x8xf32> -> vector<8x8xf32>
    %217 = vector.broadcast %29 : vector<1x8xf32> to vector<8x8xf32>
    %218 = arith.addf %216, %217 : vector<8x8xf32>
    %cst_77 = arith.constant dense<0xFF800000> : vector<8xf32>
    %219 = vector.multi_reduction <maximumf>, %218, %cst_77 [1] : vector<8x8xf32> to vector<8xf32>
    %220 = vector.shape_cast %219 : vector<8xf32> to vector<8x1xf32>
    %221 = vector.broadcast %220 : vector<8x1xf32> to vector<8x8xf32>
    %222 = arith.subf %218, %221 : vector<8x8xf32>
    %223 = math.exp %222 : vector<8x8xf32>
    %cst_78 = arith.constant dense<0.000000e+00> : vector<8xf32>
    %224 = vector.multi_reduction <add>, %223, %cst_78 [1] : vector<8x8xf32> to vector<8xf32>
    %225 = vector.shape_cast %224 : vector<8xf32> to vector<8x1xf32>
    %226 = vector.broadcast %225 : vector<8x1xf32> to vector<8x8xf32>
    %227 = arith.divf %223, %226 : vector<8x8xf32>
    %228 = vector.broadcast %7 : vector<1x32xf32> to vector<8x32xf32>
    %229 = arith.mulf %213, %228 : vector<8x32xf32>
    %cst_79 = arith.constant dense<0.000000e+00> : vector<8x32xf32>
    %230 = tpu.matmul %227, %229, %cst_79 {dimension_numbers = #tpu.dot_dimension_numbers<[1], [0], [0], [1], [0, 0, 1, 1], [], []>} : vector<8x8xf32>, vector<8x32xf32>, vector<8x32xf32> -> vector<8x32xf32>
    %231 = vector.broadcast %14 : vector<1x32xf32> to vector<8x32xf32>
    %232 = arith.mulf %203, %231 : vector<8x32xf32>
    %cst_80 = arith.constant dense<0.000000e+00> : vector<8x8xf32>
    %233 = tpu.matmul %232, %208, %cst_80 {dimension_numbers = #tpu.dot_dimension_numbers<[1], [1], [0], [0], [0, 0, 1, 0], [], []>} : vector<8x32xf32>, vector<8x32xf32>, vector<8x8xf32> -> vector<8x8xf32>
    %234 = vector.broadcast %29 : vector<1x8xf32> to vector<8x8xf32>
    %235 = arith.addf %233, %234 : vector<8x8xf32>
    %cst_81 = arith.constant dense<0xFF800000> : vector<8xf32>
    %236 = vector.multi_reduction <maximumf>, %235, %cst_81 [1] : vector<8x8xf32> to vector<8xf32>
    %237 = vector.shape_cast %236 : vector<8xf32> to vector<8x1xf32>
    %238 = vector.broadcast %237 : vector<8x1xf32> to vector<8x8xf32>
    %239 = arith.subf %235, %238 : vector<8x8xf32>
    %240 = math.exp %239 : vector<8x8xf32>
    %cst_82 = arith.constant dense<0.000000e+00> : vector<8xf32>
    %241 = vector.multi_reduction <add>, %240, %cst_82 [1] : vector<8x8xf32> to vector<8xf32>
    %242 = vector.shape_cast %241 : vector<8xf32> to vector<8x1xf32>
    %243 = vector.broadcast %242 : vector<8x1xf32> to vector<8x8xf32>
    %244 = arith.divf %240, %243 : vector<8x8xf32>
    %245 = vector.broadcast %14 : vector<1x32xf32> to vector<8x32xf32>
    %246 = arith.mulf %213, %245 : vector<8x32xf32>
    %cst_83 = arith.constant dense<0.000000e+00> : vector<8x32xf32>
    %247 = tpu.matmul %244, %246, %cst_83 {dimension_numbers = #tpu.dot_dimension_numbers<[1], [0], [0], [1], [0, 0, 1, 1], [], []>} : vector<8x8xf32>, vector<8x32xf32>, vector<8x32xf32> -> vector<8x32xf32>
    %248 = arith.addf %230, %247 : vector<8x32xf32>
    %c352 = arith.constant 352 : index
    %c0_84 = arith.constant 0 : index
    %249 = vector.load %arg3[%c352, %c0_84] : memref<640x128xf32, #tpu.memory_space<vmem>>, vector<32x32xf32>
    %cst_85 = arith.constant dense<0.000000e+00> : vector<8x32xf32>
    %250 = tpu.matmul %248, %249, %cst_85 {dimension_numbers = #tpu.dot_dimension_numbers<[1], [0], [0], [1], [0, 0, 1, 1], [], []>} : vector<8x32xf32>, vector<32x32xf32>, vector<8x32xf32> -> vector<8x32xf32>
    %c625 = arith.constant 625 : index
    %c0_86 = arith.constant 0 : index
    %251 = vector.load %arg3[%c625, %c0_86] : memref<640x128xf32, #tpu.memory_space<vmem>>, vector<1x32xf32>
    %252 = vector.broadcast %251 : vector<1x32xf32> to vector<8x32xf32>
    %253 = arith.addf %250, %252 : vector<8x32xf32>
    %254 = arith.addf %25, %253 : vector<8x32xf32>
    %cst_87 = arith.constant dense<0.000000e+00> : vector<8xf32>
    %255 = vector.multi_reduction <add>, %254, %cst_87 [1] : vector<8x32xf32> to vector<8xf32>
    %256 = vector.shape_cast %255 : vector<8xf32> to vector<8x1xf32>
    %cst_88 = arith.constant 3.200000e+01 : f32
    %257 = vector.broadcast %cst_88 : f32 to vector<8x1xf32>
    %258 = arith.divf %256, %257 : vector<8x1xf32>
    %259 = vector.broadcast %258 : vector<8x1xf32> to vector<8x32xf32>
    %260 = arith.subf %254, %259 : vector<8x32xf32>
    %261 = arith.mulf %260, %260 : vector<8x32xf32>
    %cst_89 = arith.constant dense<0.000000e+00> : vector<8xf32>
    %262 = vector.multi_reduction <add>, %261, %cst_89 [1] : vector<8x32xf32> to vector<8xf32>
    %263 = vector.shape_cast %262 : vector<8xf32> to vector<8x1xf32>
    %cst_90 = arith.constant 3.200000e+01 : f32
    %264 = vector.broadcast %cst_90 : f32 to vector<8x1xf32>
    %265 = arith.divf %263, %264 : vector<8x1xf32>
    %266 = vector.broadcast %258 : vector<8x1xf32> to vector<8x32xf32>
    %267 = arith.subf %254, %266 : vector<8x32xf32>
    %cst_91 = arith.constant 9.99999974E-6 : f32
    %268 = vector.broadcast %cst_91 : f32 to vector<8x1xf32>
    %269 = arith.addf %265, %268 : vector<8x1xf32>
    %270 = math.rsqrt %269 : vector<8x1xf32>
    %271 = vector.broadcast %270 : vector<8x1xf32> to vector<8x32xf32>
    %272 = arith.mulf %267, %271 : vector<8x32xf32>
    %c626 = arith.constant 626 : index
    %c0_92 = arith.constant 0 : index
    %273 = vector.load %arg3[%c626, %c0_92] : memref<640x128xf32, #tpu.memory_space<vmem>>, vector<1x32xf32>
    %274 = vector.broadcast %273 : vector<1x32xf32> to vector<8x32xf32>
    %275 = arith.mulf %272, %274 : vector<8x32xf32>
    %c627 = arith.constant 627 : index
    %c0_93 = arith.constant 0 : index
    %276 = vector.load %arg3[%c627, %c0_93] : memref<640x128xf32, #tpu.memory_space<vmem>>, vector<1x32xf32>
    %277 = vector.broadcast %276 : vector<1x32xf32> to vector<8x32xf32>
    %278 = arith.addf %275, %277 : vector<8x32xf32>
    %c384 = arith.constant 384 : index
    %c0_94 = arith.constant 0 : index
    %279 = vector.load %arg3[%c384, %c0_94] : memref<640x128xf32, #tpu.memory_space<vmem>>, vector<32x32xf32>
    %cst_95 = arith.constant dense<0.000000e+00> : vector<8x32xf32>
    %280 = tpu.matmul %278, %279, %cst_95 {dimension_numbers = #tpu.dot_dimension_numbers<[1], [0], [0], [1], [0, 0, 1, 1], [], []>} : vector<8x32xf32>, vector<32x32xf32>, vector<8x32xf32> -> vector<8x32xf32>
    %c628 = arith.constant 628 : index
    %c0_96 = arith.constant 0 : index
    %281 = vector.load %arg3[%c628, %c0_96] : memref<640x128xf32, #tpu.memory_space<vmem>>, vector<1x32xf32>
    %282 = vector.broadcast %281 : vector<1x32xf32> to vector<8x32xf32>
    %283 = arith.addf %280, %282 : vector<8x32xf32>
    %cst_97 = arith.constant 2.500000e-01 : f32
    %284 = vector.broadcast %cst_97 : f32 to vector<8x32xf32>
    %285 = arith.mulf %283, %284 : vector<8x32xf32>
    %c416 = arith.constant 416 : index
    %c0_98 = arith.constant 0 : index
    %286 = vector.load %arg3[%c416, %c0_98] : memref<640x128xf32, #tpu.memory_space<vmem>>, vector<32x32xf32>
    %cst_99 = arith.constant dense<0.000000e+00> : vector<8x32xf32>
    %287 = tpu.matmul %172, %286, %cst_99 {dimension_numbers = #tpu.dot_dimension_numbers<[1], [0], [0], [1], [0, 0, 1, 1], [], []>} : vector<8x32xf32>, vector<32x32xf32>, vector<8x32xf32> -> vector<8x32xf32>
    %c629 = arith.constant 629 : index
    %c0_100 = arith.constant 0 : index
    %288 = vector.load %arg3[%c629, %c0_100] : memref<640x128xf32, #tpu.memory_space<vmem>>, vector<1x32xf32>
    %289 = vector.broadcast %288 : vector<1x32xf32> to vector<8x32xf32>
    %290 = arith.addf %287, %289 : vector<8x32xf32>
    %c448 = arith.constant 448 : index
    %c0_101 = arith.constant 0 : index
    %291 = vector.load %arg3[%c448, %c0_101] : memref<640x128xf32, #tpu.memory_space<vmem>>, vector<32x32xf32>
    %cst_102 = arith.constant dense<0.000000e+00> : vector<8x32xf32>
    %292 = tpu.matmul %172, %291, %cst_102 {dimension_numbers = #tpu.dot_dimension_numbers<[1], [0], [0], [1], [0, 0, 1, 1], [], []>} : vector<8x32xf32>, vector<32x32xf32>, vector<8x32xf32> -> vector<8x32xf32>
    %c630 = arith.constant 630 : index
    %c0_103 = arith.constant 0 : index
    %293 = vector.load %arg3[%c630, %c0_103] : memref<640x128xf32, #tpu.memory_space<vmem>>, vector<1x32xf32>
    %294 = vector.broadcast %293 : vector<1x32xf32> to vector<8x32xf32>
    %295 = arith.addf %292, %294 : vector<8x32xf32>
    %296 = vector.broadcast %7 : vector<1x32xf32> to vector<8x32xf32>
    %297 = arith.mulf %285, %296 : vector<8x32xf32>
    %cst_104 = arith.constant dense<0.000000e+00> : vector<8x8xf32>
    %298 = tpu.matmul %297, %290, %cst_104 {dimension_numbers = #tpu.dot_dimension_numbers<[1], [1], [0], [0], [0, 0, 1, 0], [], []>} : vector<8x32xf32>, vector<8x32xf32>, vector<8x8xf32> -> vector<8x8xf32>
    %cst_105 = arith.constant dense<0xFF800000> : vector<8xf32>
    %299 = vector.multi_reduction <maximumf>, %298, %cst_105 [1] : vector<8x8xf32> to vector<8xf32>
    %300 = vector.shape_cast %299 : vector<8xf32> to vector<8x1xf32>
    %301 = vector.broadcast %300 : vector<8x1xf32> to vector<8x8xf32>
    %302 = arith.subf %298, %301 : vector<8x8xf32>
    %303 = math.exp %302 : vector<8x8xf32>
    %cst_106 = arith.constant dense<0.000000e+00> : vector<8xf32>
    %304 = vector.multi_reduction <add>, %303, %cst_106 [1] : vector<8x8xf32> to vector<8xf32>
    %305 = vector.shape_cast %304 : vector<8xf32> to vector<8x1xf32>
    %306 = vector.broadcast %305 : vector<8x1xf32> to vector<8x8xf32>
    %307 = arith.divf %303, %306 : vector<8x8xf32>
    %308 = vector.broadcast %7 : vector<1x32xf32> to vector<8x32xf32>
    %309 = arith.mulf %295, %308 : vector<8x32xf32>
    %cst_107 = arith.constant dense<0.000000e+00> : vector<8x32xf32>
    %310 = tpu.matmul %307, %309, %cst_107 {dimension_numbers = #tpu.dot_dimension_numbers<[1], [0], [0], [1], [0, 0, 1, 1], [], []>} : vector<8x8xf32>, vector<8x32xf32>, vector<8x32xf32> -> vector<8x32xf32>
    %311 = vector.broadcast %14 : vector<1x32xf32> to vector<8x32xf32>
    %312 = arith.mulf %285, %311 : vector<8x32xf32>
    %cst_108 = arith.constant dense<0.000000e+00> : vector<8x8xf32>
    %313 = tpu.matmul %312, %290, %cst_108 {dimension_numbers = #tpu.dot_dimension_numbers<[1], [1], [0], [0], [0, 0, 1, 0], [], []>} : vector<8x32xf32>, vector<8x32xf32>, vector<8x8xf32> -> vector<8x8xf32>
    %cst_109 = arith.constant dense<0xFF800000> : vector<8xf32>
    %314 = vector.multi_reduction <maximumf>, %313, %cst_109 [1] : vector<8x8xf32> to vector<8xf32>
    %315 = vector.shape_cast %314 : vector<8xf32> to vector<8x1xf32>
    %316 = vector.broadcast %315 : vector<8x1xf32> to vector<8x8xf32>
    %317 = arith.subf %313, %316 : vector<8x8xf32>
    %318 = math.exp %317 : vector<8x8xf32>
    %cst_110 = arith.constant dense<0.000000e+00> : vector<8xf32>
    %319 = vector.multi_reduction <add>, %318, %cst_110 [1] : vector<8x8xf32> to vector<8xf32>
    %320 = vector.shape_cast %319 : vector<8xf32> to vector<8x1xf32>
    %321 = vector.broadcast %320 : vector<8x1xf32> to vector<8x8xf32>
    %322 = arith.divf %318, %321 : vector<8x8xf32>
    %323 = vector.broadcast %14 : vector<1x32xf32> to vector<8x32xf32>
    %324 = arith.mulf %295, %323 : vector<8x32xf32>
    %cst_111 = arith.constant dense<0.000000e+00> : vector<8x32xf32>
    %325 = tpu.matmul %322, %324, %cst_111 {dimension_numbers = #tpu.dot_dimension_numbers<[1], [0], [0], [1], [0, 0, 1, 1], [], []>} : vector<8x8xf32>, vector<8x32xf32>, vector<8x32xf32> -> vector<8x32xf32>
    %326 = arith.addf %310, %325 : vector<8x32xf32>
    %c480 = arith.constant 480 : index
    %c0_112 = arith.constant 0 : index
    %327 = vector.load %arg3[%c480, %c0_112] : memref<640x128xf32, #tpu.memory_space<vmem>>, vector<32x32xf32>
    %cst_113 = arith.constant dense<0.000000e+00> : vector<8x32xf32>
    %328 = tpu.matmul %326, %327, %cst_113 {dimension_numbers = #tpu.dot_dimension_numbers<[1], [0], [0], [1], [0, 0, 1, 1], [], []>} : vector<8x32xf32>, vector<32x32xf32>, vector<8x32xf32> -> vector<8x32xf32>
    %c631 = arith.constant 631 : index
    %c0_114 = arith.constant 0 : index
    %329 = vector.load %arg3[%c631, %c0_114] : memref<640x128xf32, #tpu.memory_space<vmem>>, vector<1x32xf32>
    %330 = vector.broadcast %329 : vector<1x32xf32> to vector<8x32xf32>
    %331 = arith.addf %328, %330 : vector<8x32xf32>
    %332 = arith.addf %254, %331 : vector<8x32xf32>
    %cst_115 = arith.constant dense<0.000000e+00> : vector<8xf32>
    %333 = vector.multi_reduction <add>, %332, %cst_115 [1] : vector<8x32xf32> to vector<8xf32>
    %334 = vector.shape_cast %333 : vector<8xf32> to vector<8x1xf32>
    %cst_116 = arith.constant 3.200000e+01 : f32
    %335 = vector.broadcast %cst_116 : f32 to vector<8x1xf32>
    %336 = arith.divf %334, %335 : vector<8x1xf32>
    %337 = vector.broadcast %336 : vector<8x1xf32> to vector<8x32xf32>
    %338 = arith.subf %332, %337 : vector<8x32xf32>
    %339 = arith.mulf %338, %338 : vector<8x32xf32>
    %cst_117 = arith.constant dense<0.000000e+00> : vector<8xf32>
    %340 = vector.multi_reduction <add>, %339, %cst_117 [1] : vector<8x32xf32> to vector<8xf32>
    %341 = vector.shape_cast %340 : vector<8xf32> to vector<8x1xf32>
    %cst_118 = arith.constant 3.200000e+01 : f32
    %342 = vector.broadcast %cst_118 : f32 to vector<8x1xf32>
    %343 = arith.divf %341, %342 : vector<8x1xf32>
    %344 = vector.broadcast %336 : vector<8x1xf32> to vector<8x32xf32>
    %345 = arith.subf %332, %344 : vector<8x32xf32>
    %cst_119 = arith.constant 9.99999974E-6 : f32
    %346 = vector.broadcast %cst_119 : f32 to vector<8x1xf32>
    %347 = arith.addf %343, %346 : vector<8x1xf32>
    %348 = math.rsqrt %347 : vector<8x1xf32>
    %349 = vector.broadcast %348 : vector<8x1xf32> to vector<8x32xf32>
    %350 = arith.mulf %345, %349 : vector<8x32xf32>
    %c632 = arith.constant 632 : index
    %c0_120 = arith.constant 0 : index
    %351 = vector.load %arg3[%c632, %c0_120] : memref<640x128xf32, #tpu.memory_space<vmem>>, vector<1x32xf32>
    %352 = vector.broadcast %351 : vector<1x32xf32> to vector<8x32xf32>
    %353 = arith.mulf %350, %352 : vector<8x32xf32>
    %c633 = arith.constant 633 : index
    %c0_121 = arith.constant 0 : index
    %354 = vector.load %arg3[%c633, %c0_121] : memref<640x128xf32, #tpu.memory_space<vmem>>, vector<1x32xf32>
    %355 = vector.broadcast %354 : vector<1x32xf32> to vector<8x32xf32>
    %356 = arith.addf %353, %355 : vector<8x32xf32>
    %c512 = arith.constant 512 : index
    %c0_122 = arith.constant 0 : index
    %357 = vector.load %arg3[%c512, %c0_122] : memref<640x128xf32, #tpu.memory_space<vmem>>, vector<32x32xf32>
    %cst_123 = arith.constant dense<0.000000e+00> : vector<8x32xf32>
    %358 = tpu.matmul %356, %357, %cst_123 {dimension_numbers = #tpu.dot_dimension_numbers<[1], [0], [0], [1], [0, 0, 1, 1], [], []>} : vector<8x32xf32>, vector<32x32xf32>, vector<8x32xf32> -> vector<8x32xf32>
    %c634 = arith.constant 634 : index
    %c0_124 = arith.constant 0 : index
    %359 = vector.load %arg3[%c634, %c0_124] : memref<640x128xf32, #tpu.memory_space<vmem>>, vector<1x32xf32>
    %360 = vector.broadcast %359 : vector<1x32xf32> to vector<8x32xf32>
    %361 = arith.addf %358, %360 : vector<8x32xf32>
    %cst_125 = arith.constant 0.000000e+00 : f32
    %362 = vector.broadcast %cst_125 : f32 to vector<8x32xf32>
    %363 = arith.maximumf %361, %362 : vector<8x32xf32>
    %c544 = arith.constant 544 : index
    %c0_126 = arith.constant 0 : index
    %364 = vector.load %arg3[%c544, %c0_126] : memref<640x128xf32, #tpu.memory_space<vmem>>, vector<32x32xf32>
    %cst_127 = arith.constant dense<0.000000e+00> : vector<8x32xf32>
    %365 = tpu.matmul %363, %364, %cst_127 {dimension_numbers = #tpu.dot_dimension_numbers<[1], [0], [0], [1], [0, 0, 1, 1], [], []>} : vector<8x32xf32>, vector<32x32xf32>, vector<8x32xf32> -> vector<8x32xf32>
    %c635 = arith.constant 635 : index
    %c0_128 = arith.constant 0 : index
    %366 = vector.load %arg3[%c635, %c0_128] : memref<640x128xf32, #tpu.memory_space<vmem>>, vector<1x32xf32>
    %367 = vector.broadcast %366 : vector<1x32xf32> to vector<8x32xf32>
    %368 = arith.addf %365, %367 : vector<8x32xf32>
    %369 = arith.addf %332, %368 : vector<8x32xf32>
    %cst_129 = arith.constant dense<0.000000e+00> : vector<8xf32>
    %370 = vector.multi_reduction <add>, %369, %cst_129 [1] : vector<8x32xf32> to vector<8xf32>
    %371 = vector.shape_cast %370 : vector<8xf32> to vector<8x1xf32>
    %cst_130 = arith.constant 3.200000e+01 : f32
    %372 = vector.broadcast %cst_130 : f32 to vector<8x1xf32>
    %373 = arith.divf %371, %372 : vector<8x1xf32>
    %374 = vector.broadcast %373 : vector<8x1xf32> to vector<8x32xf32>
    %375 = arith.subf %369, %374 : vector<8x32xf32>
    %376 = arith.mulf %375, %375 : vector<8x32xf32>
    %cst_131 = arith.constant dense<0.000000e+00> : vector<8xf32>
    %377 = vector.multi_reduction <add>, %376, %cst_131 [1] : vector<8x32xf32> to vector<8xf32>
    %378 = vector.shape_cast %377 : vector<8xf32> to vector<8x1xf32>
    %cst_132 = arith.constant 3.200000e+01 : f32
    %379 = vector.broadcast %cst_132 : f32 to vector<8x1xf32>
    %380 = arith.divf %378, %379 : vector<8x1xf32>
    %381 = vector.broadcast %373 : vector<8x1xf32> to vector<8x32xf32>
    %382 = arith.subf %369, %381 : vector<8x32xf32>
    %cst_133 = arith.constant 9.99999974E-6 : f32
    %383 = vector.broadcast %cst_133 : f32 to vector<8x1xf32>
    %384 = arith.addf %380, %383 : vector<8x1xf32>
    %385 = math.rsqrt %384 : vector<8x1xf32>
    %386 = vector.broadcast %385 : vector<8x1xf32> to vector<8x32xf32>
    %387 = arith.mulf %382, %386 : vector<8x32xf32>
    %c636 = arith.constant 636 : index
    %c0_134 = arith.constant 0 : index
    %388 = vector.load %arg3[%c636, %c0_134] : memref<640x128xf32, #tpu.memory_space<vmem>>, vector<1x32xf32>
    %389 = vector.broadcast %388 : vector<1x32xf32> to vector<8x32xf32>
    %390 = arith.mulf %387, %389 : vector<8x32xf32>
    %c637 = arith.constant 637 : index
    %c0_135 = arith.constant 0 : index
    %391 = vector.load %arg3[%c637, %c0_135] : memref<640x128xf32, #tpu.memory_space<vmem>>, vector<1x32xf32>
    %392 = vector.broadcast %391 : vector<1x32xf32> to vector<8x32xf32>
    %393 = arith.addf %390, %392 : vector<8x32xf32>
    %c576 = arith.constant 576 : index
    %c0_136 = arith.constant 0 : index
    %394 = vector.load %arg3[%c576, %c0_136] : memref<640x128xf32, #tpu.memory_space<vmem>>, vector<32x128xf32>
    %cst_137 = arith.constant dense<0.000000e+00> : vector<8x128xf32>
    %395 = tpu.matmul %393, %394, %cst_137 {dimension_numbers = #tpu.dot_dimension_numbers<[1], [0], [0], [1], [0, 0, 1, 1], [], []>} : vector<8x32xf32>, vector<32x128xf32>, vector<8x128xf32> -> vector<8x128xf32>
    %c638 = arith.constant 638 : index
    %c0_138 = arith.constant 0 : index
    %396 = vector.load %arg3[%c638, %c0_138] : memref<640x128xf32, #tpu.memory_space<vmem>>, vector<1x128xf32>
    %397 = vector.broadcast %396 : vector<1x128xf32> to vector<8x128xf32>
    %398 = arith.addf %395, %397 : vector<8x128xf32>
    %c0_139 = arith.constant 0 : index
    %c0_140 = arith.constant 0 : index
    %c0_141 = arith.constant 0 : index
    %399 = vector.load %arg4[%c0_139, %c0_140, %c0_141] : memref<1x8x128xf32, #tpu.memory_space<vmem>>, vector<1x8x128xf32>
    %400 = vector.shape_cast %399 : vector<1x8x128xf32> to vector<8x128xf32>
    %401 = vector.shape_cast %398 : vector<8x128xf32> to vector<1x8x128xf32>
    tpu.vector_store %arg4[%c0_139, %c0_140, %c0_141], %401 {strides = array<i32>} : memref<1x8x128xf32, #tpu.memory_space<vmem>>, vector<1x8x128xf32>,
    %402 = tpu.iota {dimensions = array<i32: 1>} : vector<8x128xi32>
    %c64_i32 = arith.constant 64 : i32
    %403 = vector.broadcast %c64_i32 : i32 to vector<8x128xi32>
    %404 = arith.cmpi slt, %402, %403 : vector<8x128xi32>
    %c0_142 = arith.constant 0 : index
    %c16 = arith.constant 16 : index
    %c0_143 = arith.constant 0 : index
    %405 = vector.load %arg1[%c0_142, %c16, %c0_143] : memref<1x24x1xi32, #tpu.memory_space<vmem>>, vector<1x8x1xi32>
    %406 = vector.shape_cast %405 : vector<1x8x1xi32> to vector<8x1xi32>
    %cst_144 = arith.constant -1.000000e+30 : f32
    %407 = vector.broadcast %cst_144 : f32 to vector<8x128xf32>
    %408 = arith.select %404, %398, %407 : vector<8x128xi1>, vector<8x128xf32>
    %cst_145 = arith.constant dense<0xFF800000> : vector<8xf32>
    %409 = vector.multi_reduction <maximumf>, %408, %cst_145 [1] : vector<8x128xf32> to vector<8xf32>
    %410 = vector.shape_cast %409 : vector<8xf32> to vector<8x1xf32>
    %411 = vector.broadcast %410 : vector<8x1xf32> to vector<8x128xf32>
    %412 = arith.subf %398, %411 : vector<8x128xf32>
    %413 = math.exp %412 : vector<8x128xf32>
    %cst_146 = arith.constant 0.000000e+00 : f32
    %414 = vector.broadcast %cst_146 : f32 to vector<8x128xf32>
    %415 = arith.select %404, %413, %414 : vector<8x128xi1>, vector<8x128xf32>
    %cst_147 = arith.constant dense<0.000000e+00> : vector<8xf32>
    %416 = vector.multi_reduction <add>, %415, %cst_147 [1] : vector<8x128xf32> to vector<8xf32>
    %417 = vector.shape_cast %416 : vector<8xf32> to vector<8x1xf32>
    %418 = math.log %417 : vector<8x1xf32>
    %419 = arith.addf %418, %410 : vector<8x1xf32>
    %420 = vector.broadcast %406 : vector<8x1xi32> to vector<8x128xi32>
    %421 = arith.cmpi eq, %402, %420 : vector<8x128xi32>
    %cst_148 = arith.constant 0.000000e+00 : f32
    %422 = vector.broadcast %cst_148 : f32 to vector<8x128xf32>
    %423 = arith.select %421, %398, %422 : vector<8x128xi1>, vector<8x128xf32>
    %cst_149 = arith.constant dense<0.000000e+00> : vector<8xf32>
    %424 = vector.multi_reduction <add>, %423, %cst_149 [1] : vector<8x128xf32> to vector<8xf32>
    %425 = vector.shape_cast %424 : vector<8xf32> to vector<8x1xf32>
    %426 = arith.subf %419, %425 : vector<8x1xf32>
    %c0_i32_150 = arith.constant 0 : i32
    %427 = vector.broadcast %c0_i32_150 : i32 to vector<8x1xi32>
    %428 = arith.cmpi ne, %406, %427 : vector<8x1xi32>
    %429 = arith.extui %428 : vector<8x1xi1> to vector<8x1xi32>
    %430 = arith.sitofp %429 : vector<8x1xi32> to vector<8x1xf32>
    %431 = arith.mulf %426, %430 : vector<8x1xf32>
    %cst_151 = arith.constant dense<0.000000e+00> : vector<1xf32>
    %432 = vector.multi_reduction <add>, %431, %cst_151 [0] : vector<8x1xf32> to vector<1xf32>
    %433 = vector.shape_cast %432 : vector<1xf32> to vector<1x1xf32>
    %cst_152 = arith.constant dense<0.000000e+00> : vector<1xf32>
    %434 = vector.multi_reduction <add>, %430, %cst_152 [0] : vector<8x1xf32> to vector<1xf32>
    %435 = vector.shape_cast %434 : vector<1xf32> to vector<1x1xf32>
    %436 = tpu.iota {dimensions = array<i32: 1>} : vector<1x128xi32>
    %c0_i32_153 = arith.constant 0 : i32
    %437 = vector.broadcast %c0_i32_153 : i32 to vector<1x128xi32>
    %438 = arith.cmpi eq, %436, %437 : vector<1x128xi32>
    %cst_154 = arith.constant 0.000000e+00 : f32
    %439 = vector.shape_cast %433 : vector<1x1xf32> to vector<1x1xf32>
    %440 = vector.broadcast %439 : vector<1x1xf32> to vector<1x128xf32>
    %441 = vector.broadcast %cst_154 : f32 to vector<1x128xf32>
    %442 = arith.select %438, %440, %441 : vector<1x128xi1>, vector<1x128xf32>
    %c1_i32 = arith.constant 1 : i32
    %443 = vector.broadcast %c1_i32 : i32 to vector<1x128xi32>
    %444 = arith.cmpi eq, %436, %443 : vector<1x128xi32>
    %cst_155 = arith.constant 0.000000e+00 : f32
    %445 = vector.shape_cast %435 : vector<1x1xf32> to vector<1x1xf32>
    %446 = vector.broadcast %445 : vector<1x1xf32> to vector<1x128xf32>
    %447 = vector.broadcast %cst_155 : f32 to vector<1x128xf32>
    %448 = arith.select %444, %446, %447 : vector<1x128xi1>, vector<1x128xf32>
    %449 = arith.addf %442, %448 : vector<1x128xf32>
    %c0_156 = arith.constant 0 : index
    %c0_157 = arith.constant 0 : index
    %c0_158 = arith.constant 0 : index
    %450 = vector.load %arg5[%c0_156, %c0_157, %c0_158] : memref<1x1x128xf32, #tpu.memory_space<vmem>>, vector<1x1x128xf32>
    %451 = vector.shape_cast %450 : vector<1x1x128xf32> to vector<1x128xf32>
    %452 = vector.shape_cast %449 : vector<1x128xf32> to vector<1x1x128xf32>
    tpu.vector_store %arg5[%c0_156, %c0_157, %c0_158], %452 {strides = array<i32>} : memref<1x1x128xf32, #tpu.memory_space<vmem>>, vector<1x1x128xf32>,
    return
  }
  func.func @transform_0(%arg0: i32) -> (i32, i32, i32) {
    %c0_i32 = arith.constant 0 : i32
    %c0_i32_0 = arith.constant 0 : i32
    %c0_i32_1 = arith.constant 0 : i32
    return %arg0, %c0_i32, %c0_i32_0 : i32, i32, i32
  }
  func.func @transform_1(%arg0: i32) -> (i32, i32, i32) {
    %c0_i32 = arith.constant 0 : i32
    %c0_i32_0 = arith.constant 0 : i32
    %c0_i32_1 = arith.constant 0 : i32
    return %arg0, %c0_i32, %c0_i32_0 : i32, i32, i32
  }
  func.func @transform_2(%arg0: i32) -> (i32, i32) {
    %c0_i32 = arith.constant 0 : i32
    %c0_i32_0 = arith.constant 0 : i32
    %c0_i32_1 = arith.constant 0 : i32
    return %c0_i32, %c0_i32_0 : i32, i32
  }
  func.func @transform_3(%arg0: i32) -> (i32, i32, i32) {
    %c0_i32 = arith.constant 0 : i32
    %c0_i32_0 = arith.constant 0 : i32
    %c0_i32_1 = arith.constant 0 : i32
    return %arg0, %c0_i32, %c0_i32_0 : i32, i32, i32
  }
  func.func @transform_4(%arg0: i32) -> (i32, i32, i32) {
    %c0_i32 = arith.constant 0 : i32
    %c0_i32_0 = arith.constant 0 : i32
    %c0_i32_1 = arith.constant 0 : i32
    return %arg0, %c0_i32, %c0_i32_0 : i32, i32, i32
  }
}

</mosaic_0001>

<llo_original>
// kernel: model_forward.1
$region0: #{model_forward.1}
  #allocation0 [shape = 'u32[]', space=smem, size = 0x4, offset = 0x4, fixed_abs, tag = 'smem constant byte address 0x4 - core index']
  #allocation1 [shape = 'u32[144,128]{1,0:T(1,128)}', space=vmem, size = 0x12000, scoped, tag = 'internal scratch']
  %s0 = inlined_call_operand.vmem [shape: s32[2,24,1], index: 0, kind: input, shape index: {}]
  %s1 = inlined_call_operand.vmem [shape: f32[2,2,128], index: 1, kind: input, shape index: {}]
  %s2 = inlined_call_operand.hbm [shape: f32[640,128], index: 2, kind: input, shape index: {}]
  %s3 = inlined_call_operand.hbm [shape: f32[2,8,128], index: 3, kind: output, shape index: {0}]
  %s4 = inlined_call_operand.vmem [shape: f32[2,1,128], index: 4, kind: output, shape index: {1}]
  %5 = xla_tuple %s3, %s4
  %s6 = sld [smem:[#allocation0]]
  $region57: #{model_forward.1} parent=0
    _
  %s8 = ssub.s32 1, %s6
  %s9 = scalar_select 0, %s8, %s6
  $region1: #{model_forward.1} parent=0
    #allocation2 [shape = 'u8[327680]{0}', space=vmem, size = 0x50000, scoped, tag = 'input window, operand 2, single buffered']
    #allocation3 [shape = 's32[2]{0}', space=sflag, size = 0x8, scoped, tag = 'scoped memory for model_forward.1']
    #allocation4 [shape = 's32[2]{0}', space=sflag, size = 0x8, scoped, tag = 'scoped memory for model_forward.1']
    #allocation5 [shape = 'u8[8192]{0}', space=vmem, size = 0x2000, scoped, tag = 'output window, operand 0']
    %10 = vsyncpa [#allocation3], 0
    %11 = vsyncpa [#allocation4], 0
    %s12 = scalar_lea.sflag [#allocation4], 1
    %13 = vsyncpa %s12, 0
    loop: start=0, step=1, limit=4
    $region2: #{model_forward.1} parent=1 // loop_pre_header
      _
    $region3: #{model_forward.1} parent=1 // loop_header
      %s15 = sphi 0, %s19
      %p16 = scmp.ge.s32.totalorder %s15, 4
      %s25 = sphi 0, %s27
      %s28 = sphi 0, %s25
      %s29 = sphi 0, %s28
      %s45 = sphi 0, %s29
      %s51 = sphi 0, %s53
      %s54 = sphi 0, %s51
      %s55 = sphi 0, %s54
      %s71 = sphi 0, %s55
      %s75 = sphi 0, %s75
      %s77 = sphi 0, %s75
      %s78 = sphi 0, %s77
      %s92 = sphi 0, %s78
      %s98 = sphi 0, %s100
      %s101 = sphi 0, %s98
      %s102 = sphi 0, %s101
      %s118 = sphi 0, %s102
      %s124 = sphi 0, %s126
      %s127 = sphi 0, %s124
      %s128 = sphi 0, %s127
      %s144 = sphi 0, %s128
    $region4: #{model_forward.1} parent=1 // loop_header_branch
      %18 = sbr.rel (%p16) target = $region8
    $region5: #{model_forward.1} parent=1 // loop_body
      %s20 = ssub.s32 %s15, 1
      %s21 = ssub.s32 %s15, 2
      %s22 = sadd.s32 %s15, 1
      %s23 = ssub.s32 %s15, %s22
      %p24 = scmp.eq.s32.totalorder %s23, 0
      %s26 = sadd.s32 %s25, 1
      %s27 = scalar_select %p24, %s25, %s26
      %p30 = pneg %p24
      %p31 = scmp.eq.s32.totalorder %s15, 1
      %p32 = por %p30, %p31
      %p33 = scmp.ne.s32.totalorder %s25, %s28
      %p34 = scmp.eq.s32.totalorder %s15, 0
      %p35 = por %p33, %p34
      %p36 = scmp.ne.s32.totalorder %s25, %s28
      %p37 = scmp.eq.s32.totalorder %s20, 1
      %p38 = por %p36, %p37
      %p39 = scmp.ne.s32.totalorder %s28, %s29
      %p40 = scmp.eq.s32.totalorder %s20, 0
      %p41 = por %p39, %p40
      %p42 = scmp.ne.s32.totalorder %s28, %s29
      %p43 = scmp.eq.s32.totalorder %s21, 1
      %p44 = por %p42, %p43
      %p46 = scmp.ne.s32.totalorder %s29, %s45
      %p47 = scmp.eq.s32.totalorder %s21, 0
      %p48 = por %p46, %p47
      %s49 = ssub.s32 %s15, %s22
      %p50 = scmp.eq.s32.totalorder %s49, 0
      %s52 = sadd.s32 %s51, 1
      %s53 = scalar_select %p50, %s51, %s52
      %p56 = pneg %p50
      %p57 = scmp.eq.s32.totalorder %s15, 1
      %p58 = por %p56, %p57
      %p59 = scmp.ne.s32.totalorder %s51, %s54
      %p60 = scmp.eq.s32.totalorder %s15, 0
      %p61 = por %p59, %p60
      %p62 = scmp.ne.s32.totalorder %s51, %s54
      %p63 = scmp.eq.s32.totalorder %s20, 1
      %p64 = por %p62, %p63
      %p65 = scmp.ne.s32.totalorder %s54, %s55
      %p66 = scmp.eq.s32.totalorder %s20, 0
      %p67 = por %p65, %p66
      %p68 = scmp.ne.s32.totalorder %s54, %s55
      %p69 = scmp.eq.s32.totalorder %s21, 1
      %p70 = por %p68, %p69
      %p72 = scmp.ne.s32.totalorder %s55, %s71
      %p73 = scmp.eq.s32.totalorder %s21, 0
      %p74 = por %p72, %p73
      %s76 = sadd.s32 %s75, 1
      %p79 = scmp.eq.s32.totalorder %s15, 1
      %p80 = scmp.ne.s32.totalorder %s75, %s77
      %p81 = scmp.eq.s32.totalorder %s15, 0
      %p82 = por %p80, %p81
      %p83 = scmp.ne.s32.totalorder %s75, %s77
      %p84 = scmp.eq.s32.totalorder %s20, 1
      %p85 = por %p83, %p84
      %p86 = scmp.ne.s32.totalorder %s77, %s78
      %p87 = scmp.eq.s32.totalorder %s20, 0
      %p88 = por %p86, %p87
      %p89 = scmp.ne.s32.totalorder %s77, %s78
      %p90 = scmp.eq.s32.totalorder %s21, 1
      %p91 = por %p89, %p90
      %p93 = scmp.ne.s32.totalorder %s78, %s92
      %p94 = scmp.eq.s32.totalorder %s21, 0
      %p95 = por %p93, %p94
      %s96 = ssub.s32 %s15, %s22
      %p97 = scmp.eq.s32.totalorder %s96, 0
      %s99 = sadd.s32 %s98, 1
      %s100 = scalar_select %p97, %s98, %s99
      %p103 = pneg %p97
      %p104 = scmp.eq.s32.totalorder %s15, 1
      %p105 = por %p103, %p104
      %p106 = scmp.ne.s32.totalorder %s98, %s101
      %p107 = scmp.eq.s32.totalorder %s15, 0
      %p108 = por %p106, %p107
      %p109 = scmp.ne.s32.totalorder %s98, %s101
      %p110 = scmp.eq.s32.totalorder %s20, 1
      %p111 = por %p109, %p110
      %p112 = scmp.ne.s32.totalorder %s101, %s102
      %p113 = scmp.eq.s32.totalorder %s20, 0
      %p114 = por %p112, %p113
      %p115 = scmp.ne.s32.totalorder %s101, %s102
      %p116 = scmp.eq.s32.totalorder %s21, 1
      %p117 = por %p115, %p116
      %p119 = scmp.ne.s32.totalorder %s102, %s118
      %p120 = scmp.eq.s32.totalorder %s21, 0
      %p121 = por %p119, %p120
      %s122 = ssub.s32 %s15, %s22
      %p123 = scmp.eq.s32.totalorder %s122, 0
      %s125 = sadd.s32 %s124, 1
      %s126 = scalar_select %p123, %s124, %s125
      %p129 = pneg %p123
      %p130 = scmp.eq.s32.totalorder %s15, 1
      %p131 = por %p129, %p130
      %p132 = scmp.ne.s32.totalorder %s124, %s127
      %p133 = scmp.eq.s32.totalorder %s15, 0
      %p134 = por %p132, %p133
      %p135 = scmp.ne.s32.totalorder %s124, %s127
      %p136 = scmp.eq.s32.totalorder %s20, 1
      %p137 = por %p135, %p136
      %p138 = scmp.ne.s32.totalorder %s127, %s128
      %p139 = scmp.eq.s32.totalorder %s20, 0
      %p140 = por %p138, %p139
      %p141 = scmp.ne.s32.totalorder %s127, %s128
      %p142 = scmp.eq.s32.totalorder %s21, 1
      %p143 = por %p141, %p142
      %p145 = scmp.ne.s32.totalorder %s128, %s144
      %p146 = scmp.eq.s32.totalorder %s21, 0
      %p147 = por %p145, %p146
      %p148 = scmp.le.s32.totalorder 1, %s15
      %p149 = scmp.lt.s32.totalorder %s15, 3
      %p150 = pnand %p148, %p149
      %p151 = pneg %p150
      // Predicated region
      $region9: #{model_forward.1} parent=5 // pred_check
        _
      $region10: #{model_forward.1} parent=5 // pred_check_branch
        %153 = sbr.rel (%p150) target = $region12
      $region11: #{model_forward.1} parent=5 // pred_region
        %s154 = ssub.s32 %s15, 1
        // Predicated region
        $region13: #{model_forward.1} parent=11 // pred_check
          %p155 = pneg %p88
        $region14: #{model_forward.1} parent=11 // pred_check_branch
          %157 = sbr.rel (%p155) target = $region16
        $region15: #{model_forward.1} parent=11 // pred_region
          %s159 = ssub.s32 10240, 10240
          %160 = vsyncadd [#allocation3], %s159
          %s161 = sshll.u32 [#allocation2], 4
          %s162 = int_to_ptr.vmem [resolvable:$true] %s161
          %167 = dma.hbm_to_vmem [thread:$0]  %s2, 10240, %s162, [#allocation3], 128, 128, 8
        $region16: #{model_forward.1} parent=11 // pred_fallthru
          _
      $region12: #{model_forward.1} parent=5 // pred_fallthru
        _
      %p168 = scmp.lt.s32.totalorder %s15, 2
      // Predicated region
      $region17: #{model_forward.1} parent=5 // pred_check
        %p169 = pneg %p168
      $region18: #{model_forward.1} parent=5 // pred_check_branch
        %171 = sbr.rel (%p169) target = $region20
      $region19: #{model_forward.1} parent=5 // pred_region
        // Predicated region
        $region21: #{model_forward.1} parent=19 // pred_check
          %p172 = pneg %p35
        $region22: #{model_forward.1} parent=19 // pred_check_branch
          %174 = sbr.rel (%p172) target = $region24
        $region23: #{model_forward.1} parent=19 // pred_region
          %p175 = scmp.lt.s32.totalorder %s15, 1
          %s176 = scalar_select %p175, %s15, 1
          %s177 = smul.addr %s176, 3
          %s178 = smul.addr %s177, 8
          %s179 = scalar_lea.vmem %s0, %s178
        $region24: #{model_forward.1} parent=19 // pred_fallthru
          _
        // Predicated region
        $region25: #{model_forward.1} parent=19 // pred_check
          %p180 = pneg %p61
        $region26: #{model_forward.1} parent=19 // pred_check_branch
          %182 = sbr.rel (%p180) target = $region28
        $region27: #{model_forward.1} parent=19 // pred_region
          %p183 = scmp.lt.s32.totalorder %s15, 1
          %s184 = scalar_select %p183, %s15, 1
          %s185 = smul.addr %s184, 2
          %s186 = scalar_lea.vmem %s1, %s185
        $region28: #{model_forward.1} parent=19 // pred_fallthru
          _
      $region20: #{model_forward.1} parent=5 // pred_fallthru
        _
      %p187 = scmp.le.s32.totalorder 1, %s15
      %p188 = scmp.lt.s32.totalorder %s15, 3
      %p189 = pnand %p187, %p188
      %p190 = pneg %p189
      // Predicated region
      $region29: #{model_forward.1} parent=5 // pred_check
        _
      $region30: #{model_forward.1} parent=5 // pred_check_branch
        %192 = sbr.rel (%p189) target = $region32
      $region31: #{model_forward.1} parent=5 // pred_region
        %s193 = ssub.s32 %s15, 1
        // Predicated region
        $region33: #{model_forward.1} parent=31 // pred_check
          %p194 = pneg %p88
        $region34: #{model_forward.1} parent=31 // pred_check_branch
          %196 = sbr.rel (%p194) target = $region36
        $region35: #{model_forward.1} parent=31 // pred_region
          %197 = dma.done [#allocation3], 10240
        $region36: #{model_forward.1} parent=31 // pred_fallthru
          _
        %p198 = scmp.lt.s32.totalorder %s20, 1
        %s199 = scalar_select %p198, %s20, 1
        %s200 = smul.addr %s199, 3
        %s201 = smul.addr %s200, 8
        %s202 = scalar_lea.vmem %s0, %s201
        %p203 = pneg %p41
        %p204 = pneg %p38
        %p205 = scmp.lt.s32.totalorder %s20, 1
        %s206 = scalar_select %p205, %s20, 1
        %s207 = smul.addr %s206, 2
        %s208 = scalar_lea.vmem %s1, %s207
        %p209 = pneg %p67
        %p210 = pneg %p64
        %p211 = pneg %p88
        %p212 = pneg %p85
        %p213 = pneg %p114
        %p214 = pneg %p111
        %s215 = sand.u32 %s101, 1
        %s216 = scalar_lea.sflag [#allocation4], %s215
        %s217 = sand.u32 %s101, 1
        %s218 = smul.addr %s217, 8
        %s219 = scalar_lea.vmem [#allocation5], %s218
        %p220 = pneg %p140
        %p221 = pneg %p137
        %p222 = scmp.lt.s32.totalorder %s20, 1
        %s223 = scalar_select %p222, %s20, 1
        %s224 = scalar_lea.vmem %s4, %s223
        %p225 = scmp.lt.s32.totalorder %s20, 1
        %s226 = scalar_select %p225, %s20, 1
        %s227 = smul.addr %s226, 3
        %s228 = smul.addr %s227, 8
        %s229 = scalar_lea.vmem %s0, %s228
        %p230 = scmp.lt.s32.totalorder %s20, 1
        %s231 = scalar_select %p230, %s20, 1
        %s232 = smul.addr %s231, 2
        %s233 = scalar_lea.vmem %s1, %s232
        %p234 = scmp.lt.s32.totalorder %s20, 1
        %s235 = scalar_select %p234, %s20, 1
        %s236 = scalar_lea.vmem %s4, %s235
        %v237 = vlaneseq
        %v238 = vand.u32 %v237, 127
        %vm239 = vcmp.ge.s32.totalorder %v238, 0
        %vm240 = vcmp.lt.s32.totalorder %v238, 16
        %vm241 = vmand %vm239, %vm240
        %v242 = vsel %vm241, 1, 0
        %v243 = vcvt.s32.f32 %v242
        %vm244 = vcmp.ge.s32.totalorder %v238, 16
        %vm245 = vcmp.lt.s32.totalorder %v238, 32
        %vm246 = vmand %vm244, %vm245
        %v247 = vsel %vm246, 1, 0
        %v248 = vcvt.s32.f32 %v247
        %v249 = vld [vmem:[%s229] sm:$0xff]
        %v250 = vld [vmem:[%s229 + $0x8] sm:$0xff]
        %251 = vset.pattern.permute.xlu0 0
        %252 = vperm.xlu0 %251, %v249
        %v253 = vpop.permute.xlu0 %252
        %254 = vset.pattern.permute.xlu0 0
        %255 = vperm.xlu0 %254, %v250
        %v256 = vpop.permute.xlu0 %255
        %vm257 = vcmp.eq.s32.totalorder %v238, %v253
        %vm258 = vcmp.eq.s32.totalorder %v238, %v256
        %v259 = vsel %vm257, 1, 0
        %v260 = vsel %vm258, 1, 0
        %v261 = vcvt.s32.f32 %v259
        %v262 = vcvt.s32.f32 %v260
        %v263 = vld [vmem:[#allocation2] sm:$0xff]
        %v264 = vld [vmem:[#allocation2 + $0x8] sm:$0xff]
        %v265 = vld [vmem:[#allocation2 + $0x10] sm:$0xff]
        %v266 = vld [vmem:[#allocation2 + $0x18] sm:$0xff]
        %v267 = vld [vmem:[#allocation2 + $0x20] sm:$0xff]
        %v268 = vld [vmem:[#allocation2 + $0x28] sm:$0xff]
        %v269 = vld [vmem:[#allocation2 + $0x30] sm:$0xff]
        %v270 = vld [vmem:[#allocation2 + $0x38] sm:$0xff]
        %vm271 = vcmask 523264
        %v273 = vsel %vm271, %v261, 0
        %v276 = vsel %vm271, %v262, 0
        %278 = vmatprep.subr.mxu0 0.0
        %279 = vmatpush1.msra.mxu0 %v263
        %280 = vmatprep.subr.mxu0 0.0
        %281 = vmatpush1.msra.mxu0 %v264
        %282 = vmatprep.subr.mxu0 0.0
        %283 = vmatpush1.msra.mxu0 %v265
        %284 = vmatprep.subr.mxu0 0.0
        %285 = vmatpush1.msra.mxu0 %v266
        %286 = vmatprep.subr.mxu0 0.0
        %287 = vmatpush1.msra.mxu0 %v267
        %288 = vmatprep.subr.mxu0 0.0
        %289 = vmatpush1.msra.mxu0 %v268
        %290 = vmatprep.subr.mxu0 0.0
        %291 = vmatpush1.msra.mxu0 %v269
        %292 = vmatprep.subr.mxu0 0.0
        %293 = vmatpush1.msra.mxu0 %v270
        %294 = vmatprep.subr.mxu0 0.0
        %295 = vmatpush1.msra.mxu0 0.0
        %296 = vmatprep.subr.mxu0 0.0
        %297 = vmatpush1.msra.mxu0 0.0
        %298 = vmatprep.subr.mxu0 0.0
        %299 = vmatpush1.msra.mxu0 0.0
        %300 = vmatprep.subr.mxu0 0.0
        %301 = vmatpush1.msra.mxu0 0.0
        %302 = vmatprep.subr.mxu0 0.0
        %303 = vmatpush1.msra.mxu0 0.0
        %304 = vmatprep.subr.mxu0 0.0
        %305 = vmatpush1.msra.mxu0 0.0
        %306 = vmatprep.subr.mxu0 0.0
        %307 = vmatpush1.msra.mxu0 0.0
        %308 = vmatprep.subr.mxu0 0.0
        %309 = vmatpush1.msra.mxu0 0.0
        %310 = vmatprep.subr.mxu0 0.0
        %311 = vmatpush1.msra.mxu0 0.0
        %312 = vmatprep.subr.mxu0 0.0
        %313 = vmatpush1.msra.mxu0 0.0
        %314 = vmatprep.subr.mxu0 0.0
        %315 = vmatpush1.msra.mxu0 0.0
        %316 = vmatprep.subr.mxu0 0.0
        %317 = vmatpush1.msra.mxu0 0.0
        %318 = vmatprep.subr.mxu0 0.0
        %319 = vmatpush1.msra.mxu0 0.0
        %320 = vmatprep.subr.mxu0 0.0
        %321 = vmatpush1.msra.mxu0 0.0
        %322 = vmatprep.subr.mxu0 0.0
        %323 = vmatpush1.msra.mxu0 0.0
        %324 = vmatprep.subr.mxu0 0.0
        %325 = vmatpush1.msra.mxu0 0.0
        %326 = vmatprep.subr.mxu0 0.0
        %327 = vmatpush1.msra.mxu0 0.0
        %328 = vmatprep.subr.mxu0 0.0
        %329 = vmatpush1.msra.mxu0 0.0
        %330 = vmatprep.subr.mxu0 0.0
        %331 = vmatpush1.msra.mxu0 0.0
        %332 = vmatprep.subr.mxu0 0.0
        %333 = vmatpush1.msra.mxu0 0.0
        %334 = vmatprep.subr.mxu0 0.0
        %335 = vmatpush1.msra.mxu0 0.0
        %336 = vmatprep.subr.mxu0 0.0
        %337 = vmatpush1.msra.mxu0 0.0
        %338 = vmatprep.subr.mxu0 0.0
        %339 = vmatpush1.msra.mxu0 0.0
        %340 = vmatprep.subr.mxu0 0.0
        %341 = vmatpush1.msra.mxu0 0.0
        %342 = vmatprep.mubr.f32.mxu0 0.0
        %343 = vmatmul.mubr.f32.gmra.mrb[0].mxu0 %v273
        %v344 = vpop.f32.mrb[0].mxu0
        %v345 = vadd.f32 0.0, %v344
        %v346 = vpop.f32.mrb[0].mxu0
        %347 = vmatprep.mubr.f32.mxu0 0.0
        %348 = vmatmul.mubr.f32.gmra.mrb[0].mxu0 %v276
        %v349 = vpop.f32.mrb[0].mxu0
        %v350 = vadd.f32 0.0, %v349
        %v351 = vpop.f32.mrb[0].mxu0
        %352 = vdwg.mxu0
        %v353 = vld [vmem:[%s233] sm:$0x1]
        %v354 = vld [vmem:[%s233 + $0x1] sm:$0x1]
        %vm355 = vcmask 261120
        %v356 = vsel %vm355, %v345, 0.0
        %357 = vadd.xlane.f32.xlu0 %v356
        %v358 = vpop.xlane.xlu0 %357
        %v359 = vrcp.pop 32.0
        %v360 = vmul.f32 %v358, %v359
        %v361 = vsub.f32 %v345, %v360
        %v362 = vmul.f32 %v361, %v361
        %v363 = vsel %vm355, %v362, 0.0
        %364 = vadd.xlane.f32.xlu0 %v363
        %v365 = vpop.xlane.xlu0 %364
        %v366 = vmul.f32 %v365, %v359
        %v367 = vadd.f32 %v366, 1e-05
        %v368 = vrsqrt.pop %v367
        %v369 = vmul.f32 %v361, %v368
        %v370 = vld [vmem:[#allocation2 + $0x260] sm:$0x1]
        %v371 = vlaneseq
        %v372 = vshrl.u32 %v371, 7
        %v373 = vsub.s32 0, %v372
        %v374 = vrot.slane %v370, %v373
        %v375 = vmul.f32 %v369, %v374
        %v376 = vld [vmem:[#allocation2 + $0x261] sm:$0x1]
        %v377 = vlaneseq
        %v378 = vshrl.u32 %v377, 7
        %v379 = vsub.s32 0, %v378
        %v380 = vrot.slane %v376, %v379
        %v381 = vadd.f32 %v375, %v380
        %v382 = vld [vmem:[#allocation2 + $0x40] sm:$0xff]
        %v383 = vld [vmem:[#allocation2 + $0x48] sm:$0xff]
        %v384 = vld [vmem:[#allocation2 + $0x50] sm:$0xff]
        %v385 = vld [vmem:[#allocation2 + $0x58] sm:$0xff]
        %v386 = vld [vmem:[#allocation2 + $0x262] sm:$0x1]
        %v387 = vlaneseq
        %v388 = vshrl.u32 %v387, 7
        %v389 = vsub.s32 0, %v388
        %v390 = vrot.slane %v386, %v389
        %v392 = vsel %vm355, %v381, 0
        %394 = vmatprep.subr.mxu0 0.0
        %395 = vmatpush1.msra.mxu0 %v382
        %396 = vmatprep.subr.mxu0 0.0
        %397 = vmatpush1.msra.mxu0 %v383
        %398 = vmatprep.subr.mxu0 0.0
        %399 = vmatpush1.msra.mxu0 %v384
        %400 = vmatprep.subr.mxu0 0.0
        %401 = vmatpush1.msra.mxu0 %v385
        %402 = vmatprep.subr.mxu0 0.0
        %403 = vmatpush1.msra.mxu0 0.0
        %404 = vmatprep.subr.mxu0 0.0
        %405 = vmatpush1.msra.mxu0 0.0
        %406 = vmatprep.subr.mxu0 0.0
        %407 = vmatpush1.msra.mxu0 0.0
        %408 = vmatprep.subr.mxu0 0.0
        %409 = vmatpush1.msra.mxu0 0.0
        %410 = vmatprep.subr.mxu0 0.0
        %411 = vmatpush1.msra.mxu0 0.0
        %412 = vmatprep.subr.mxu0 0.0
        %413 = vmatpush1.msra.mxu0 0.0
        %414 = vmatprep.subr.mxu0 0.0
        %415 = vmatpush1.msra.mxu0 0.0
        %416 = vmatprep.subr.mxu0 0.0
        %417 = vmatpush1.msra.mxu0 0.0
        %418 = vmatprep.subr.mxu0 0.0
        %419 = vmatpush1.msra.mxu0 0.0
        %420 = vmatprep.subr.mxu0 0.0
        %421 = vmatpush1.msra.mxu0 0.0
        %422 = vmatprep.subr.mxu0 0.0
        %423 = vmatpush1.msra.mxu0 0.0
        %424 = vmatprep.subr.mxu0 0.0
        %425 = vmatpush1.msra.mxu0 0.0
        %426 = vmatprep.subr.mxu0 0.0
        %427 = vmatpush1.msra.mxu0 0.0
        %428 = vmatprep.subr.mxu0 0.0
        %429 = vmatpush1.msra.mxu0 0.0
        %430 = vmatprep.subr.mxu0 0.0
        %431 = vmatpush1.msra.mxu0 0.0
        %432 = vmatprep.subr.mxu0 0.0
        %433 = vmatpush1.msra.mxu0 0.0
        %434 = vmatprep.subr.mxu0 0.0
        %435 = vmatpush1.msra.mxu0 0.0
        %436 = vmatprep.subr.mxu0 0.0
        %437 = vmatpush1.msra.mxu0 0.0
        %438 = vmatprep.subr.mxu0 0.0
        %439 = vmatpush1.msra.mxu0 0.0
        %440 = vmatprep.subr.mxu0 0.0
        %441 = vmatpush1.msra.mxu0 0.0
        %442 = vmatprep.subr.mxu0 0.0
        %443 = vmatpush1.msra.mxu0 0.0
        %444 = vmatprep.subr.mxu0 0.0
        %445 = vmatpush1.msra.mxu0 0.0
        %446 = vmatprep.subr.mxu0 0.0
        %447 = vmatpush1.msra.mxu0 0.0
        %448 = vmatprep.subr.mxu0 0.0
        %449 = vmatpush1.msra.mxu0 0.0
        %450 = vmatprep.subr.mxu0 0.0
        %451 = vmatpush1.msra.mxu0 0.0
        %452 = vmatprep.subr.mxu0 0.0
        %453 = vmatpush1.msra.mxu0 0.0
        %454 = vmatprep.subr.mxu0 0.0
        %455 = vmatpush1.msra.mxu0 0.0
        %456 = vmatprep.subr.mxu0 0.0
        %457 = vmatpush1.msra.mxu0 0.0
        %458 = vmatprep.mubr.f32.mxu0 0.0
        %459 = vmatmul.mubr.f32.gmra.mrb[0].mxu0 %v392
        %v460 = vpop.f32.mrb[0].mxu0
        %v461 = vadd.f32 %v390, %v460
        %v462 = vpop.f32.mrb[0].mxu0
        %463 = vdwg.mxu0
        %v464 = vmul.f32 %v461, 0.25
        %v465 = vld [vmem:[#allocation2 + $0x60] sm:$0xff]
        %v466 = vld [vmem:[#allocation2 + $0x68] sm:$0xff]
        %v467 = vld [vmem:[#allocation2 + $0x70] sm:$0xff]
        %v468 = vld [vmem:[#allocation2 + $0x78] sm:$0xff]
        %v469 = vld [vmem:[#allocation2 + $0x263] sm:$0x1]
        %v470 = vlaneseq
        %v471 = vshrl.u32 %v470, 7
        %v472 = vsub.s32 0, %v471
        %v473 = vrot.slane %v469, %v472
        %474 = vmatprep.subr.mxu0 0.0
        %475 = vmatpush1.msra.mxu0 %v465
        %476 = vmatprep.subr.mxu0 0.0
        %477 = vmatpush1.msra.mxu0 %v466
        %478 = vmatprep.subr.mxu0 0.0
        %479 = vmatpush1.msra.mxu0 %v467
        %480 = vmatprep.subr.mxu0 0.0
        %481 = vmatpush1.msra.mxu0 %v468
        %482 = vmatprep.subr.mxu0 0.0
        %483 = vmatpush1.msra.mxu0 0.0
        %484 = vmatprep.subr.mxu0 0.0
        %485 = vmatpush1.msra.mxu0 0.0
        %486 = vmatprep.subr.mxu0 0.0
        %487 = vmatpush1.msra.mxu0 0.0
        %488 = vmatprep.subr.mxu0 0.0
        %489 = vmatpush1.msra.mxu0 0.0
        %490 = vmatprep.subr.mxu0 0.0
        %491 = vmatpush1.msra.mxu0 0.0
        %492 = vmatprep.subr.mxu0 0.0
        %493 = vmatpush1.msra.mxu0 0.0
        %494 = vmatprep.subr.mxu0 0.0
        %495 = vmatpush1.msra.mxu0 0.0
        %496 = vmatprep.subr.mxu0 0.0
        %497 = vmatpush1.msra.mxu0 0.0
        %498 = vmatprep.subr.mxu0 0.0
        %499 = vmatpush1.msra.mxu0 0.0
        %500 = vmatprep.subr.mxu0 0.0
        %501 = vmatpush1.msra.mxu0 0.0
        %502 = vmatprep.subr.mxu0 0.0
        %503 = vmatpush1.msra.mxu0 0.0
        %504 = vmatprep.subr.mxu0 0.0
        %505 = vmatpush1.msra.mxu0 0.0
        %506 = vmatprep.subr.mxu0 0.0
        %507 = vmatpush1.msra.mxu0 0.0
        %508 = vmatprep.subr.mxu0 0.0
        %509 = vmatpush1.msra.mxu0 0.0
        %510 = vmatprep.subr.mxu0 0.0
        %511 = vmatpush1.msra.mxu0 0.0
        %512 = vmatprep.subr.mxu0 0.0
        %513 = vmatpush1.msra.mxu0 0.0
        %514 = vmatprep.subr.mxu0 0.0
        %515 = vmatpush1.msra.mxu0 0.0
        %516 = vmatprep.subr.mxu0 0.0
        %517 = vmatpush1.msra.mxu0 0.0
        %518 = vmatprep.subr.mxu0 0.0
        %519 = vmatpush1.msra.mxu0 0.0
        %520 = vmatprep.subr.mxu0 0.0
        %521 = vmatpush1.msra.mxu0 0.0
        %522 = vmatprep.subr.mxu0 0.0
        %523 = vmatpush1.msra.mxu0 0.0
        %524 = vmatprep.subr.mxu0 0.0
        %525 = vmatpush1.msra.mxu0 0.0
        %526 = vmatprep.subr.mxu0 0.0
        %527 = vmatpush1.msra.mxu0 0.0
        %528 = vmatprep.subr.mxu0 0.0
        %529 = vmatpush1.msra.mxu0 0.0
        %530 = vmatprep.subr.mxu0 0.0
        %531 = vmatpush1.msra.mxu0 0.0
        %532 = vmatprep.subr.mxu0 0.0
        %533 = vmatpush1.msra.mxu0 0.0
        %534 = vmatprep.subr.mxu0 0.0
        %535 = vmatpush1.msra.mxu0 0.0
        %536 = vmatprep.subr.mxu0 0.0
        %537 = vmatpush1.msra.mxu0 0.0
        %538 = vmatprep.mubr.f32.mxu0 0.0
        %539 = vmatmul.mubr.f32.gmra.mrb[0].mxu0 %v392
        %v540 = vpop.f32.mrb[0].mxu0
        %v541 = vadd.f32 %v473, %v540
        %v542 = vpop.f32.mrb[0].mxu0
        %543 = vdwg.mxu0
        %v544 = vld [vmem:[#allocation2 + $0x80] sm:$0xff]
        %v545 = vld [vmem:[#allocation2 + $0x88] sm:$0xff]
        %v546 = vld [vmem:[#allocation2 + $0x90] sm:$0xff]
        %v547 = vld [vmem:[#allocation2 + $0x98] sm:$0xff]
        %v548 = vld [vmem:[#allocation2 + $0x264] sm:$0x1]
        %v549 = vlaneseq
        %v550 = vshrl.u32 %v549, 7
        %v551 = vsub.s32 0, %v550
        %v552 = vrot.slane %v548, %v551
        %553 = vmatprep.subr.mxu0 0.0
        %554 = vmatpush1.msra.mxu0 %v544
        %555 = vmatprep.subr.mxu0 0.0
        %556 = vmatpush1.msra.mxu0 %v545
        %557 = vmatprep.subr.mxu0 0.0
        %558 = vmatpush1.msra.mxu0 %v546
        %559 = vmatprep.subr.mxu0 0.0
        %560 = vmatpush1.msra.mxu0 %v547
        %561 = vmatprep.subr.mxu0 0.0
        %562 = vmatpush1.msra.mxu0 0.0
        %563 = vmatprep.subr.mxu0 0.0
        %564 = vmatpush1.msra.mxu0 0.0
        %565 = vmatprep.subr.mxu0 0.0
        %566 = vmatpush1.msra.mxu0 0.0
        %567 = vmatprep.subr.mxu0 0.0
        %568 = vmatpush1.msra.mxu0 0.0
        %569 = vmatprep.subr.mxu0 0.0
        %570 = vmatpush1.msra.mxu0 0.0
        %571 = vmatprep.subr.mxu0 0.0
        %572 = vmatpush1.msra.mxu0 0.0
        %573 = vmatprep.subr.mxu0 0.0
        %574 = vmatpush1.msra.mxu0 0.0
        %575 = vmatprep.subr.mxu0 0.0
        %576 = vmatpush1.msra.mxu0 0.0
        %577 = vmatprep.subr.mxu0 0.0
        %578 = vmatpush1.msra.mxu0 0.0
        %579 = vmatprep.subr.mxu0 0.0
        %580 = vmatpush1.msra.mxu0 0.0
        %581 = vmatprep.subr.mxu0 0.0
        %582 = vmatpush1.msra.mxu0 0.0
        %583 = vmatprep.subr.mxu0 0.0
        %584 = vmatpush1.msra.mxu0 0.0
        %585 = vmatprep.subr.mxu0 0.0
        %586 = vmatpush1.msra.mxu0 0.0
        %587 = vmatprep.subr.mxu0 0.0
        %588 = vmatpush1.msra.mxu0 0.0
        %589 = vmatprep.subr.mxu0 0.0
        %590 = vmatpush1.msra.mxu0 0.0
        %591 = vmatprep.subr.mxu0 0.0
        %592 = vmatpush1.msra.mxu0 0.0
        %593 = vmatprep.subr.mxu0 0.0
        %594 = vmatpush1.msra.mxu0 0.0
        %595 = vmatprep.subr.mxu0 0.0
        %596 = vmatpush1.msra.mxu0 0.0
        %597 = vmatprep.subr.mxu0 0.0
        %598 = vmatpush1.msra.mxu0 0.0
        %599 = vmatprep.subr.mxu0 0.0
        %600 = vmatpush1.msra.mxu0 0.0
        %601 = vmatprep.subr.mxu0 0.0
        %602 = vmatpush1.msra.mxu0 0.0
        %603 = vmatprep.subr.mxu0 0.0
        %604 = vmatpush1.msra.mxu0 0.0
        %605 = vmatprep.subr.mxu0 0.0
        %606 = vmatpush1.msra.mxu0 0.0
        %607 = vmatprep.subr.mxu0 0.0
        %608 = vmatpush1.msra.mxu0 0.0
        %609 = vmatprep.subr.mxu0 0.0
        %610 = vmatpush1.msra.mxu0 0.0
        %611 = vmatprep.subr.mxu0 0.0
        %612 = vmatpush1.msra.mxu0 0.0
        %613 = vmatprep.subr.mxu0 0.0
        %614 = vmatpush1.msra.mxu0 0.0
        %615 = vmatprep.subr.mxu0 0.0
        %616 = vmatpush1.msra.mxu0 0.0
        %617 = vmatprep.mubr.f32.mxu0 0.0
        %618 = vmatmul.mubr.f32.gmra.mrb[0].mxu0 %v392
        %v619 = vpop.f32.mrb[0].mxu0
        %v620 = vadd.f32 %v552, %v619
        %v621 = vpop.f32.mrb[0].mxu0
        %622 = vdwg.mxu0
        %v623 = vmul.f32 %v464, %v243
        %v624 = vlaneseq
        %v625 = vshrl.u32 %v624, 7
        %v626 = vsub.s32 0, %v625
        %v627 = vrot.slane %v353, %v626
        %v629 = vsel %vm355, %v623, 0
        %v632 = vsel %vm355, %v541, 0
        %634 = vmatprep.subr.mxu0 0.0
        %635 = vmatpush1.xpose.msra.mxu0 %v632
        %636 = vmatprep.subr.mxu0 0.0
        %637 = vmatpush1.xpose.msra.mxu0 0.0
        %638 = vmatprep.subr.mxu0 0.0
        %639 = vmatpush1.xpose.msra.mxu0 0.0
        %640 = vmatprep.subr.mxu0 0.0
        %641 = vmatpush1.xpose.msra.mxu0 0.0
        %642 = vmatprep.subr.mxu0 0.0
        %643 = vmatpush1.xpose.msra.mxu0 0.0
        %644 = vmatprep.subr.mxu0 0.0
        %645 = vmatpush1.xpose.msra.mxu0 0.0
        %646 = vmatprep.subr.mxu0 0.0
        %647 = vmatpush1.xpose.msra.mxu0 0.0
        %648 = vmatprep.subr.mxu0 0.0
        %649 = vmatpush1.xpose.msra.mxu0 0.0
        %650 = vmatprep.subr.mxu0 0.0
        %651 = vmatpush1.xpose.msra.mxu0 0.0
        %652 = vmatprep.subr.mxu0 0.0
        %653 = vmatpush1.xpose.msra.mxu0 0.0
        %654 = vmatprep.subr.mxu0 0.0
        %655 = vmatpush1.xpose.msra.mxu0 0.0
        %656 = vmatprep.subr.mxu0 0.0
        %657 = vmatpush1.xpose.msra.mxu0 0.0
        %658 = vmatprep.subr.mxu0 0.0
        %659 = vmatpush1.xpose.msra.mxu0 0.0
        %660 = vmatprep.subr.mxu0 0.0
        %661 = vmatpush1.xpose.msra.mxu0 0.0
        %662 = vmatprep.subr.mxu0 0.0
        %663 = vmatpush1.xpose.msra.mxu0 0.0
        %664 = vmatprep.subr.mxu0 0.0
        %665 = vmatpush1.xpose.msra.mxu0 0.0
        %666 = vmatprep.subr.mxu0 0.0
        %667 = vmatpush1.xpose.msra.mxu0 0.0
        %668 = vmatprep.subr.mxu0 0.0
        %669 = vmatpush1.xpose.msra.mxu0 0.0
        %670 = vmatprep.subr.mxu0 0.0
        %671 = vmatpush1.xpose.msra.mxu0 0.0
        %672 = vmatprep.subr.mxu0 0.0
        %673 = vmatpush1.xpose.msra.mxu0 0.0
        %674 = vmatprep.subr.mxu0 0.0
        %675 = vmatpush1.xpose.msra.mxu0 0.0
        %676 = vmatprep.subr.mxu0 0.0
        %677 = vmatpush1.xpose.msra.mxu0 0.0
        %678 = vmatprep.subr.mxu0 0.0
        %679 = vmatpush1.xpose.msra.mxu0 0.0
        %680 = vmatprep.subr.mxu0 0.0
        %681 = vmatpush1.xpose.msra.mxu0 0.0
        %682 = vmatprep.subr.mxu0 0.0
        %683 = vmatpush1.xpose.msra.mxu0 0.0
        %684 = vmatprep.subr.mxu0 0.0
        %685 = vmatpush1.xpose.msra.mxu0 0.0
        %686 = vmatprep.subr.mxu0 0.0
        %687 = vmatpush1.xpose.msra.mxu0 0.0
        %688 = vmatprep.subr.mxu0 0.0
        %689 = vmatpush1.xpose.msra.mxu0 0.0
        %690 = vmatprep.subr.mxu0 0.0
        %691 = vmatpush1.xpose.msra.mxu0 0.0
        %692 = vmatprep.subr.mxu0 0.0
        %693 = vmatpush1.xpose.msra.mxu0 0.0
        %694 = vmatprep.subr.mxu0 0.0
        %695 = vmatpush1.xpose.msra.mxu0 0.0
        %696 = vmatprep.subr.mxu0 0.0
        %697 = vmatpush1.xpose.msra.mxu0 0.0
        %698 = vmatprep.mubr.f32.mxu0 0.0
        %699 = vmatmul.mubr.f32.gmra.mrb[0].mxu0 %v629
        %v700 = vpop.f32.mrb[0].mxu0
        %v701 = vadd.f32 %v627, %v700
        %v702 = vpop.f32.mrb[0].mxu0
        %703 = vdwg.mxu0
        %vm704 = vcmask 64512
        %v705 = vsel %vm704, %v701, -inf
        %706 = vmax.xlane.f32.xlu0 %v705
        %v707 = vpop.xlane.xlu0 %706
        %v708 = vsub.f32 %v701, %v707
        %v709 = vmul.f32 %v708, 1.442695
        %v710 = vpow.pop %v709
        %v711 = vsel %vm704, %v710, 0.0
        %712 = vadd.xlane.f32.xlu0 %v711
        %v713 = vpop.xlane.xlu0 %712
        %v714 = vrcp.pop %v713
        %v715 = vmul.f32 %v710, %v714
        %v716 = vmul.f32 %v620, %v243
        %v717 = vmul.f32 %v464, %v248
        %v719 = vsel %vm355, %v717, 0
        %721 = vmatprep.subr.mxu0 0.0
        %722 = vmatpush1.xpose.msra.mxu0 %v632
        %723 = vmatprep.subr.mxu0 0.0
        %724 = vmatpush1.xpose.msra.mxu0 0.0
        %725 = vmatprep.subr.mxu0 0.0
        %726 = vmatpush1.xpose.msra.mxu0 0.0
        %727 = vmatprep.subr.mxu0 0.0
        %728 = vmatpush1.xpose.msra.mxu0 0.0
        %729 = vmatprep.subr.mxu0 0.0
        %730 = vmatpush1.xpose.msra.mxu0 0.0
        %731 = vmatprep.subr.mxu0 0.0
        %732 = vmatpush1.xpose.msra.mxu0 0.0
        %733 = vmatprep.subr.mxu0 0.0
        %734 = vmatpush1.xpose.msra.mxu0 0.0
        %735 = vmatprep.subr.mxu0 0.0
        %736 = vmatpush1.xpose.msra.mxu0 0.0
        %737 = vmatprep.subr.mxu0 0.0
        %738 = vmatpush1.xpose.msra.mxu0 0.0
        %739 = vmatprep.subr.mxu0 0.0
        %740 = vmatpush1.xpose.msra.mxu0 0.0
        %741 = vmatprep.subr.mxu0 0.0
        %742 = vmatpush1.xpose.msra.mxu0 0.0
        %743 = vmatprep.subr.mxu0 0.0
        %744 = vmatpush1.xpose.msra.mxu0 0.0
        %745 = vmatprep.subr.mxu0 0.0
        %746 = vmatpush1.xpose.msra.mxu0 0.0
        %747 = vmatprep.subr.mxu0 0.0
        %748 = vmatpush1.xpose.msra.mxu0 0.0
        %749 = vmatprep.subr.mxu0 0.0
        %750 = vmatpush1.xpose.msra.mxu0 0.0
        %751 = vmatprep.subr.mxu0 0.0
        %752 = vmatpush1.xpose.msra.mxu0 0.0
        %753 = vmatprep.subr.mxu0 0.0
        %754 = vmatpush1.xpose.msra.mxu0 0.0
        %755 = vmatprep.subr.mxu0 0.0
        %756 = vmatpush1.xpose.msra.mxu0 0.0
        %757 = vmatprep.subr.mxu0 0.0
        %758 = vmatpush1.xpose.msra.mxu0 0.0
        %759 = vmatprep.subr.mxu0 0.0
        %760 = vmatpush1.xpose.msra.mxu0 0.0
        %761 = vmatprep.subr.mxu0 0.0
        %762 = vmatpush1.xpose.msra.mxu0 0.0
        %763 = vmatprep.subr.mxu0 0.0
        %764 = vmatpush1.xpose.msra.mxu0 0.0
        %765 = vmatprep.subr.mxu0 0.0
        %766 = vmatpush1.xpose.msra.mxu0 0.0
        %767 = vmatprep.subr.mxu0 0.0
        %768 = vmatpush1.xpose.msra.mxu0 0.0
        %769 = vmatprep.subr.mxu0 0.0
        %770 = vmatpush1.xpose.msra.mxu0 0.0
        %771 = vmatprep.subr.mxu0 0.0
        %772 = vmatpush1.xpose.msra.mxu0 0.0
        %773 = vmatprep.subr.mxu0 0.0
        %774 = vmatpush1.xpose.msra.mxu0 0.0
        %775 = vmatprep.subr.mxu0 0.0
        %776 = vmatpush1.xpose.msra.mxu0 0.0
        %777 = vmatprep.subr.mxu0 0.0
        %778 = vmatpush1.xpose.msra.mxu0 0.0
        %779 = vmatprep.subr.mxu0 0.0
        %780 = vmatpush1.xpose.msra.mxu0 0.0
        %781 = vmatprep.subr.mxu0 0.0
        %782 = vmatpush1.xpose.msra.mxu0 0.0
        %783 = vmatprep.subr.mxu0 0.0
        %784 = vmatpush1.xpose.msra.mxu0 0.0
        %785 = vmatprep.mubr.f32.mxu0 0.0
        %786 = vmatmul.mubr.f32.gmra.mrb[0].mxu0 %v719
        %v787 = vpop.f32.mrb[0].mxu0
        %v788 = vadd.f32 %v627, %v787
        %v789 = vpop.f32.mrb[0].mxu0
        %790 = vdwg.mxu0
        %v791 = vsel %vm704, %v788, -inf
        %792 = vmax.xlane.f32.xlu0 %v791
        %v793 = vpop.xlane.xlu0 %792
        %v794 = vsub.f32 %v788, %v793
        %v795 = vmul.f32 %v794, 1.442695
        %v796 = vpow.pop %v795
        %v797 = vsel %vm704, %v796, 0.0
        %798 = vadd.xlane.f32.xlu0 %v797
        %v799 = vpop.xlane.xlu0 %798
        %v800 = vrcp.pop %v799
        %v801 = vmul.f32 %v796, %v800
        %v802 = vmul.f32 %v620, %v248
        %v804 = vsel %vm704, %v801, 0
        %806 = vmatprep.subr.mxu0 0.0
        %807 = vmatpush1.msra.mxu0 %v802
        %808 = vmatprep.subr.mxu0 0.0
        %809 = vmatpush1.msra.mxu0 0.0
        %810 = vmatprep.subr.mxu0 0.0
        %811 = vmatpush1.msra.mxu0 0.0
        %812 = vmatprep.subr.mxu0 0.0
        %813 = vmatpush1.msra.mxu0 0.0
        %814 = vmatprep.subr.mxu0 0.0
        %815 = vmatpush1.msra.mxu0 0.0
        %816 = vmatprep.subr.mxu0 0.0
        %817 = vmatpush1.msra.mxu0 0.0
        %818 = vmatprep.subr.mxu0 0.0
        %819 = vmatpush1.msra.mxu0 0.0
        %820 = vmatprep.subr.mxu0 0.0
        %821 = vmatpush1.msra.mxu0 0.0
        %822 = vmatprep.subr.mxu0 0.0
        %823 = vmatpush1.msra.mxu0 0.0
        %824 = vmatprep.subr.mxu0 0.0
        %825 = vmatpush1.msra.mxu0 0.0
        %826 = vmatprep.subr.mxu0 0.0
        %827 = vmatpush1.msra.mxu0 0.0
        %828 = vmatprep.subr.mxu0 0.0
        %829 = vmatpush1.msra.mxu0 0.0
        %830 = vmatprep.subr.mxu0 0.0
        %831 = vmatpush1.msra.mxu0 0.0
        %832 = vmatprep.subr.mxu0 0.0
        %833 = vmatpush1.msra.mxu0 0.0
        %834 = vmatprep.subr.mxu0 0.0
        %835 = vmatpush1.msra.mxu0 0.0
        %836 = vmatprep.subr.mxu0 0.0
        %837 = vmatpush1.msra.mxu0 0.0
        %838 = vmatprep.subr.mxu0 0.0
        %839 = vmatpush1.msra.mxu0 0.0
        %840 = vmatprep.subr.mxu0 0.0
        %841 = vmatpush1.msra.mxu0 0.0
        %842 = vmatprep.subr.mxu0 0.0
        %843 = vmatpush1.msra.mxu0 0.0
        %844 = vmatprep.subr.mxu0 0.0
        %845 = vmatpush1.msra.mxu0 0.0
        %846 = vmatprep.subr.mxu0 0.0
        %847 = vmatpush1.msra.mxu0 0.0
        %848 = vmatprep.subr.mxu0 0.0
        %849 = vmatpush1.msra.mxu0 0.0
        %850 = vmatprep.subr.mxu0 0.0
        %851 = vmatpush1.msra.mxu0 0.0
        %852 = vmatprep.subr.mxu0 0.0
        %853 = vmatpush1.msra.mxu0 0.0
        %854 = vmatprep.subr.mxu0 0.0
        %855 = vmatpush1.msra.mxu0 0.0
        %856 = vmatprep.subr.mxu0 0.0
        %857 = vmatpush1.msra.mxu0 0.0
        %858 = vmatprep.subr.mxu0 0.0
        %859 = vmatpush1.msra.mxu0 0.0
        %860 = vmatprep.subr.mxu0 0.0
        %861 = vmatpush1.msra.mxu0 0.0
        %862 = vmatprep.subr.mxu0 0.0
        %863 = vmatpush1.msra.mxu0 0.0
        %864 = vmatprep.subr.mxu0 0.0
        %865 = vmatpush1.msra.mxu0 0.0
        %866 = vmatprep.subr.mxu0 0.0
        %867 = vmatpush1.msra.mxu0 0.0
        %868 = vmatprep.subr.mxu0 0.0
        %869 = vmatpush1.msra.mxu0 0.0
        %870 = vmatprep.mubr.f32.mxu0 0.0
        %871 = vmatmul.mubr.f32.gmra.mrb[0].mxu0 %v804
        %v872 = vpop.f32.mrb[0].mxu0
        %v873 = vadd.f32 0.0, %v872
        %v874 = vpop.f32.mrb[0].mxu0
        %875 = vdwg.mxu0
        %v877 = vsel %vm704, %v715, 0
        %879 = vmatprep.subr.mxu0 0.0
        %880 = vmatpush1.msra.mxu0 %v716
        %881 = vmatprep.subr.mxu0 0.0
        %882 = vmatpush1.msra.mxu0 0.0
        %883 = vmatprep.subr.mxu0 0.0
        %884 = vmatpush1.msra.mxu0 0.0
        %885 = vmatprep.subr.mxu0 0.0
        %886 = vmatpush1.msra.mxu0 0.0
        %887 = vmatprep.subr.mxu0 0.0
        %888 = vmatpush1.msra.mxu0 0.0
        %889 = vmatprep.subr.mxu0 0.0
        %890 = vmatpush1.msra.mxu0 0.0
        %891 = vmatprep.subr.mxu0 0.0
        %892 = vmatpush1.msra.mxu0 0.0
        %893 = vmatprep.subr.mxu0 0.0
        %894 = vmatpush1.msra.mxu0 0.0
        %895 = vmatprep.subr.mxu0 0.0
        %896 = vmatpush1.msra.mxu0 0.0
        %897 = vmatprep.subr.mxu0 0.0
        %898 = vmatpush1.msra.mxu0 0.0
        %899 = vmatprep.subr.mxu0 0.0
        %900 = vmatpush1.msra.mxu0 0.0
        %901 = vmatprep.subr.mxu0 0.0
        %902 = vmatpush1.msra.mxu0 0.0
        %903 = vmatprep.subr.mxu0 0.0
        %904 = vmatpush1.msra.mxu0 0.0
        %905 = vmatprep.subr.mxu0 0.0
        %906 = vmatpush1.msra.mxu0 0.0
        %907 = vmatprep.subr.mxu0 0.0
        %908 = vmatpush1.msra.mxu0 0.0
        %909 = vmatprep.subr.mxu0 0.0
        %910 = vmatpush1.msra.mxu0 0.0
        %911 = vmatprep.subr.mxu0 0.0
        %912 = vmatpush1.msra.mxu0 0.0
        %913 = vmatprep.subr.mxu0 0.0
        %914 = vmatpush1.msra.mxu0 0.0
        %915 = vmatprep.subr.mxu0 0.0
        %916 = vmatpush1.msra.mxu0 0.0
        %917 = vmatprep.subr.mxu0 0.0
        %918 = vmatpush1.msra.mxu0 0.0
        %919 = vmatprep.subr.mxu0 0.0
        %920 = vmatpush1.msra.mxu0 0.0
        %921 = vmatprep.subr.mxu0 0.0
        %922 = vmatpush1.msra.mxu0 0.0
        %923 = vmatprep.subr.mxu0 0.0
        %924 = vmatpush1.msra.mxu0 0.0
        %925 = vmatprep.subr.mxu0 0.0
        %926 = vmatpush1.msra.mxu0 0.0
        %927 = vmatprep.subr.mxu0 0.0
        %928 = vmatpush1.msra.mxu0 0.0
        %929 = vmatprep.subr.mxu0 0.0
        %930 = vmatpush1.msra.mxu0 0.0
        %931 = vmatprep.subr.mxu0 0.0
        %932 = vmatpush1.msra.mxu0 0.0
        %933 = vmatprep.subr.mxu0 0.0
        %934 = vmatpush1.msra.mxu0 0.0
        %935 = vmatprep.subr.mxu0 0.0
        %936 = vmatpush1.msra.mxu0 0.0
        %937 = vmatprep.subr.mxu0 0.0
        %938 = vmatpush1.msra.mxu0 0.0
        %939 = vmatprep.subr.mxu0 0.0
        %940 = vmatpush1.msra.mxu0 0.0
        %941 = vmatprep.subr.mxu0 0.0
        %942 = vmatpush1.msra.mxu0 0.0
        %943 = vmatprep.mubr.f32.mxu0 0.0
        %944 = vmatmul.mubr.f32.gmra.mrb[0].mxu0 %v877
        %v945 = vpop.f32.mrb[0].mxu0
        %v946 = vadd.f32 %v873, %v945
        %v947 = vpop.f32.mrb[0].mxu0
        %948 = vdwg.mxu0
        %v949 = vld [vmem:[#allocation2 + $0xa0] sm:$0xff]
        %v950 = vld [vmem:[#allocation2 + $0xa8] sm:$0xff]
        %v951 = vld [vmem:[#allocation2 + $0xb0] sm:$0xff]
        %v952 = vld [vmem:[#allocation2 + $0xb8] sm:$0xff]
        %v953 = vld [vmem:[#allocation2 + $0x265] sm:$0x1]
        %v954 = vlaneseq
        %v955 = vshrl.u32 %v954, 7
        %v956 = vsub.s32 0, %v955
        %v957 = vrot.slane %v953, %v956
        %v959 = vsel %vm355, %v946, 0
        %961 = vmatprep.subr.mxu0 0.0
        %962 = vmatpush1.msra.mxu0 %v949
        %963 = vmatprep.subr.mxu0 0.0
        %964 = vmatpush1.msra.mxu0 %v950
        %965 = vmatprep.subr.mxu0 0.0
        %966 = vmatpush1.msra.mxu0 %v951
        %967 = vmatprep.subr.mxu0 0.0
        %968 = vmatpush1.msra.mxu0 %v952
        %969 = vmatprep.subr.mxu0 0.0
        %970 = vmatpush1.msra.mxu0 0.0
        %971 = vmatprep.subr.mxu0 0.0
        %972 = vmatpush1.msra.mxu0 0.0
        %973 = vmatprep.subr.mxu0 0.0
        %974 = vmatpush1.msra.mxu0 0.0
        %975 = vmatprep.subr.mxu0 0.0
        %976 = vmatpush1.msra.mxu0 0.0
        %977 = vmatprep.subr.mxu0 0.0
        %978 = vmatpush1.msra.mxu0 0.0
        %979 = vmatprep.subr.mxu0 0.0
        %980 = vmatpush1.msra.mxu0 0.0
        %981 = vmatprep.subr.mxu0 0.0
        %982 = vmatpush1.msra.mxu0 0.0
        %983 = vmatprep.subr.mxu0 0.0
        %984 = vmatpush1.msra.mxu0 0.0
        %985 = vmatprep.subr.mxu0 0.0
        %986 = vmatpush1.msra.mxu0 0.0
        %987 = vmatprep.subr.mxu0 0.0
        %988 = vmatpush1.msra.mxu0 0.0
        %989 = vmatprep.subr.mxu0 0.0
        %990 = vmatpush1.msra.mxu0 0.0
        %991 = vmatprep.subr.mxu0 0.0
        %992 = vmatpush1.msra.mxu0 0.0
        %993 = vmatprep.subr.mxu0 0.0
        %994 = vmatpush1.msra.mxu0 0.0
        %995 = vmatprep.subr.mxu0 0.0
        %996 = vmatpush1.msra.mxu0 0.0
        %997 = vmatprep.subr.mxu0 0.0
        %998 = vmatpush1.msra.mxu0 0.0
        %999 = vmatprep.subr.mxu0 0.0
        %1000 = vmatpush1.msra.mxu0 0.0
        %1001 = vmatprep.subr.mxu0 0.0
        %1002 = vmatpush1.msra.mxu0 0.0
        %1003 = vmatprep.subr.mxu0 0.0
        %1004 = vmatpush1.msra.mxu0 0.0
        %1005 = vmatprep.subr.mxu0 0.0
        %1006 = vmatpush1.msra.mxu0 0.0
        %1007 = vmatprep.subr.mxu0 0.0
        %1008 = vmatpush1.msra.mxu0 0.0
        %1009 = vmatprep.subr.mxu0 0.0
        %1010 = vmatpush1.msra.mxu0 0.0
        %1011 = vmatprep.subr.mxu0 0.0
        %1012 = vmatpush1.msra.mxu0 0.0
        %1013 = vmatprep.subr.mxu0 0.0
        %1014 = vmatpush1.msra.mxu0 0.0
        %1015 = vmatprep.subr.mxu0 0.0
        %1016 = vmatpush1.msra.mxu0 0.0
        %1017 = vmatprep.subr.mxu0 0.0
        %1018 = vmatpush1.msra.mxu0 0.0
        %1019 = vmatprep.subr.mxu0 0.0
        %1020 = vmatpush1.msra.mxu0 0.0
        %1021 = vmatprep.subr.mxu0 0.0
        %1022 = vmatpush1.msra.mxu0 0.0
        %1023 = vmatprep.subr.mxu0 0.0
        %1024 = vmatpush1.msra.mxu0 0.0
        %1025 = vmatprep.mubr.f32.mxu0 0.0
        %1026 = vmatmul.mubr.f32.gmra.mrb[0].mxu0 %v959
        %v1027 = vpop.f32.mrb[0].mxu0
        %v1028 = vadd.f32 %v957, %v1027
        %v1029 = vpop.f32.mrb[0].mxu0
        %1030 = vdwg.mxu0
        %v1031 = vadd.f32 %v345, %v1028
        %v1032 = vsel %vm355, %v1031, 0.0
        %1033 = vadd.xlane.f32.xlu0 %v1032
        %v1034 = vpop.xlane.xlu0 %1033
        %v1035 = vmul.f32 %v1034, %v359
        %v1036 = vsub.f32 %v1031, %v1035
        %v1037 = vmul.f32 %v1036, %v1036
        %v1038 = vsel %vm355, %v1037, 0.0
        %1039 = vadd.xlane.f32.xlu0 %v1038
        %v1040 = vpop.xlane.xlu0 %1039
        %v1041 = vmul.f32 %v1040, %v359
        %v1042 = vadd.f32 %v1041, 1e-05
        %v1043 = vrsqrt.pop %v1042
        %v1044 = vmul.f32 %v1036, %v1043
        %v1045 = vld [vmem:[#allocation2 + $0x266] sm:$0x1]
        %v1046 = vlaneseq
        %v1047 = vshrl.u32 %v1046, 7
        %v1048 = vsub.s32 0, %v1047
        %v1049 = vrot.slane %v1045, %v1048
        %v1050 = vmul.f32 %v1044, %v1049
        %v1051 = vld [vmem:[#allocation2 + $0x267] sm:$0x1]
        %v1052 = vlaneseq
        %v1053 = vshrl.u32 %v1052, 7
        %v1054 = vsub.s32 0, %v1053
        %v1055 = vrot.slane %v1051, %v1054
        %v1056 = vadd.f32 %v1050, %v1055
        %v1057 = vld [vmem:[#allocation2 + $0xc0] sm:$0xff]
        %v1058 = vld [vmem:[#allocation2 + $0xc8] sm:$0xff]
        %v1059 = vld [vmem:[#allocation2 + $0xd0] sm:$0xff]
        %v1060 = vld [vmem:[#allocation2 + $0xd8] sm:$0xff]
        %v1061 = vld [vmem:[#allocation2 + $0x268] sm:$0x1]
        %v1062 = vlaneseq
        %v1063 = vshrl.u32 %v1062, 7
        %v1064 = vsub.s32 0, %v1063
        %v1065 = vrot.slane %v1061, %v1064
        %v1067 = vsel %vm355, %v1056, 0
        %1069 = vmatprep.subr.mxu0 0.0
        %1070 = vmatpush1.msra.mxu0 %v1057
        %1071 = vmatprep.subr.mxu0 0.0
        %1072 = vmatpush1.msra.mxu0 %v1058
        %1073 = vmatprep.subr.mxu0 0.0
        %1074 = vmatpush1.msra.mxu0 %v1059
        %1075 = vmatprep.subr.mxu0 0.0
        %1076 = vmatpush1.msra.mxu0 %v1060
        %1077 = vmatprep.subr.mxu0 0.0
        %1078 = vmatpush1.msra.mxu0 0.0
        %1079 = vmatprep.subr.mxu0 0.0
        %1080 = vmatpush1.msra.mxu0 0.0
        %1081 = vmatprep.subr.mxu0 0.0
        %1082 = vmatpush1.msra.mxu0 0.0
        %1083 = vmatprep.subr.mxu0 0.0
        %1084 = vmatpush1.msra.mxu0 0.0
        %1085 = vmatprep.subr.mxu0 0.0
        %1086 = vmatpush1.msra.mxu0 0.0
        %1087 = vmatprep.subr.mxu0 0.0
        %1088 = vmatpush1.msra.mxu0 0.0
        %1089 = vmatprep.subr.mxu0 0.0
        %1090 = vmatpush1.msra.mxu0 0.0
        %1091 = vmatprep.subr.mxu0 0.0
        %1092 = vmatpush1.msra.mxu0 0.0
        %1093 = vmatprep.subr.mxu0 0.0
        %1094 = vmatpush1.msra.mxu0 0.0
        %1095 = vmatprep.subr.mxu0 0.0
        %1096 = vmatpush1.msra.mxu0 0.0
        %1097 = vmatprep.subr.mxu0 0.0
        %1098 = vmatpush1.msra.mxu0 0.0
        %1099 = vmatprep.subr.mxu0 0.0
        %1100 = vmatpush1.msra.mxu0 0.0
        %1101 = vmatprep.subr.mxu0 0.0
        %1102 = vmatpush1.msra.mxu0 0.0
        %1103 = vmatprep.subr.mxu0 0.0
        %1104 = vmatpush1.msra.mxu0 0.0
        %1105 = vmatprep.subr.mxu0 0.0
        %1106 = vmatpush1.msra.mxu0 0.0
        %1107 = vmatprep.subr.mxu0 0.0
        %1108 = vmatpush1.msra.mxu0 0.0
        %1109 = vmatprep.subr.mxu0 0.0
        %1110 = vmatpush1.msra.mxu0 0.0
        %1111 = vmatprep.subr.mxu0 0.0
        %1112 = vmatpush1.msra.mxu0 0.0
        %1113 = vmatprep.subr.mxu0 0.0
        %1114 = vmatpush1.msra.mxu0 0.0
        %1115 = vmatprep.subr.mxu0 0.0
        %1116 = vmatpush1.msra.mxu0 0.0
        %1117 = vmatprep.subr.mxu0 0.0
        %1118 = vmatpush1.msra.mxu0 0.0
        %1119 = vmatprep.subr.mxu0 0.0
        %1120 = vmatpush1.msra.mxu0 0.0
        %1121 = vmatprep.subr.mxu0 0.0
        %1122 = vmatpush1.msra.mxu0 0.0
        %1123 = vmatprep.subr.mxu0 0.0
        %1124 = vmatpush1.msra.mxu0 0.0
        %1125 = vmatprep.subr.mxu0 0.0
        %1126 = vmatpush1.msra.mxu0 0.0
        %1127 = vmatprep.subr.mxu0 0.0
        %1128 = vmatpush1.msra.mxu0 0.0
        %1129 = vmatprep.subr.mxu0 0.0
        %1130 = vmatpush1.msra.mxu0 0.0
        %1131 = vmatprep.subr.mxu0 0.0
        %1132 = vmatpush1.msra.mxu0 0.0
        %1133 = vmatprep.mubr.f32.mxu0 0.0
        %1134 = vmatmul.mubr.f32.gmra.mrb[0].mxu0 %v1067
        %v1135 = vpop.f32.mrb[0].mxu0
        %v1136 = vadd.f32 %v1065, %v1135
        %v1137 = vpop.f32.mrb[0].mxu0
        %1138 = vdwg.mxu0
        %v1139 = vmax.f32 %v1136, 0.0
        %v1140 = vld [vmem:[#allocation2 + $0xe0] sm:$0xff]
        %v1141 = vld [vmem:[#allocation2 + $0xe8] sm:$0xff]
        %v1142 = vld [vmem:[#allocation2 + $0xf0] sm:$0xff]
        %v1143 = vld [vmem:[#allocation2 + $0xf8] sm:$0xff]
        %v1144 = vld [vmem:[#allocation2 + $0x269] sm:$0x1]
        %v1145 = vlaneseq
        %v1146 = vshrl.u32 %v1145, 7
        %v1147 = vsub.s32 0, %v1146
        %v1148 = vrot.slane %v1144, %v1147
        %v1150 = vsel %vm355, %v1139, 0
        %1152 = vmatprep.subr.mxu0 0.0
        %1153 = vmatpush1.msra.mxu0 %v1140
        %1154 = vmatprep.subr.mxu0 0.0
        %1155 = vmatpush1.msra.mxu0 %v1141
        %1156 = vmatprep.subr.mxu0 0.0
        %1157 = vmatpush1.msra.mxu0 %v1142
        %1158 = vmatprep.subr.mxu0 0.0
        %1159 = vmatpush1.msra.mxu0 %v1143
        %1160 = vmatprep.subr.mxu0 0.0
        %1161 = vmatpush1.msra.mxu0 0.0
        %1162 = vmatprep.subr.mxu0 0.0
        %1163 = vmatpush1.msra.mxu0 0.0
        %1164 = vmatprep.subr.mxu0 0.0
        %1165 = vmatpush1.msra.mxu0 0.0
        %1166 = vmatprep.subr.mxu0 0.0
        %1167 = vmatpush1.msra.mxu0 0.0
        %1168 = vmatprep.subr.mxu0 0.0
        %1169 = vmatpush1.msra.mxu0 0.0
        %1170 = vmatprep.subr.mxu0 0.0
        %1171 = vmatpush1.msra.mxu0 0.0
        %1172 = vmatprep.subr.mxu0 0.0
        %1173 = vmatpush1.msra.mxu0 0.0
        %1174 = vmatprep.subr.mxu0 0.0
        %1175 = vmatpush1.msra.mxu0 0.0
        %1176 = vmatprep.subr.mxu0 0.0
        %1177 = vmatpush1.msra.mxu0 0.0
        %1178 = vmatprep.subr.mxu0 0.0
        %1179 = vmatpush1.msra.mxu0 0.0
        %1180 = vmatprep.subr.mxu0 0.0
        %1181 = vmatpush1.msra.mxu0 0.0
        %1182 = vmatprep.subr.mxu0 0.0
        %1183 = vmatpush1.msra.mxu0 0.0
        %1184 = vmatprep.subr.mxu0 0.0
        %1185 = vmatpush1.msra.mxu0 0.0
        %1186 = vmatprep.subr.mxu0 0.0
        %1187 = vmatpush1.msra.mxu0 0.0
        %1188 = vmatprep.subr.mxu0 0.0
        %1189 = vmatpush1.msra.mxu0 0.0
        %1190 = vmatprep.subr.mxu0 0.0
        %1191 = vmatpush1.msra.mxu0 0.0
        %1192 = vmatprep.subr.mxu0 0.0
        %1193 = vmatpush1.msra.mxu0 0.0
        %1194 = vmatprep.subr.mxu0 0.0
        %1195 = vmatpush1.msra.mxu0 0.0
        %1196 = vmatprep.subr.mxu0 0.0
        %1197 = vmatpush1.msra.mxu0 0.0
        %1198 = vmatprep.subr.mxu0 0.0
        %1199 = vmatpush1.msra.mxu0 0.0
        %1200 = vmatprep.subr.mxu0 0.0
        %1201 = vmatpush1.msra.mxu0 0.0
        %1202 = vmatprep.subr.mxu0 0.0
        %1203 = vmatpush1.msra.mxu0 0.0
        %1204 = vmatprep.subr.mxu0 0.0
        %1205 = vmatpush1.msra.mxu0 0.0
        %1206 = vmatprep.subr.mxu0 0.0
        %1207 = vmatpush1.msra.mxu0 0.0
        %1208 = vmatprep.subr.mxu0 0.0
        %1209 = vmatpush1.msra.mxu0 0.0
        %1210 = vmatprep.subr.mxu0 0.0
        %1211 = vmatpush1.msra.mxu0 0.0
        %1212 = vmatprep.subr.mxu0 0.0
        %1213 = vmatpush1.msra.mxu0 0.0
        %1214 = vmatprep.subr.mxu0 0.0
        %1215 = vmatpush1.msra.mxu0 0.0
        %1216 = vmatprep.mubr.f32.mxu0 0.0
        %1217 = vmatmul.mubr.f32.gmra.mrb[0].mxu0 %v1150
        %v1218 = vpop.f32.mrb[0].mxu0
        %v1219 = vadd.f32 %v1148, %v1218
        %v1220 = vpop.f32.mrb[0].mxu0
        %1221 = vdwg.mxu0
        %v1222 = vadd.f32 %v1031, %v1219
        %v1223 = vsel %vm355, %v1222, 0.0
        %1224 = vadd.xlane.f32.xlu0 %v1223
        %v1225 = vpop.xlane.xlu0 %1224
        %v1226 = vmul.f32 %v1225, %v359
        %v1227 = vsub.f32 %v1222, %v1226
        %v1228 = vmul.f32 %v1227, %v1227
        %v1229 = vsel %vm355, %v1228, 0.0
        %1230 = vadd.xlane.f32.xlu0 %v1229
        %v1231 = vpop.xlane.xlu0 %1230
        %v1232 = vmul.f32 %v1231, %v359
        %v1233 = vadd.f32 %v1232, 1e-05
        %v1234 = vrsqrt.pop %v1233
        %v1235 = vmul.f32 %v1227, %v1234
        %v1236 = vld [vmem:[#allocation2 + $0x26a] sm:$0x1]
        %v1237 = vlaneseq
        %v1238 = vshrl.u32 %v1237, 7
        %v1239 = vsub.s32 0, %v1238
        %v1240 = vrot.slane %v1236, %v1239
        %v1241 = vmul.f32 %v1235, %v1240
        %v1242 = vld [vmem:[#allocation2 + $0x26b] sm:$0x1]
        %v1243 = vlaneseq
        %v1244 = vshrl.u32 %v1243, 7
        %v1245 = vsub.s32 0, %v1244
        %v1246 = vrot.slane %v1242, %v1245
        %v1247 = vadd.f32 %v1241, %v1246
        %v1248 = vsel %vm355, %v350, 0.0
        %1249 = vadd.xlane.f32.xlu0 %v1248
        %v1250 = vpop.xlane.xlu0 %1249
        %v1251 = vmul.f32 %v1250, %v359
        %v1252 = vsub.f32 %v350, %v1251
        %v1253 = vmul.f32 %v1252, %v1252
        %v1254 = vsel %vm355, %v1253, 0.0
        %1255 = vadd.xlane.f32.xlu0 %v1254
        %v1256 = vpop.xlane.xlu0 %1255
        %v1257 = vmul.f32 %v1256, %v359
        %v1258 = vadd.f32 %v1257, 1e-05
        %v1259 = vrsqrt.pop %v1258
        %v1260 = vmul.f32 %v1252, %v1259
        %v1261 = vld [vmem:[#allocation2 + $0x26c] sm:$0x1]
        %v1262 = vlaneseq
        %v1263 = vshrl.u32 %v1262, 7
        %v1264 = vsub.s32 0, %v1263
        %v1265 = vrot.slane %v1261, %v1264
        %v1266 = vmul.f32 %v1260, %v1265
        %v1267 = vld [vmem:[#allocation2 + $0x26d] sm:$0x1]
        %v1268 = vlaneseq
        %v1269 = vshrl.u32 %v1268, 7
        %v1270 = vsub.s32 0, %v1269
        %v1271 = vrot.slane %v1267, %v1270
        %v1272 = vadd.f32 %v1266, %v1271
        %v1273 = vld [vmem:[#allocation2 + $0x100] sm:$0xff]
        %v1274 = vld [vmem:[#allocation2 + $0x108] sm:$0xff]
        %v1275 = vld [vmem:[#allocation2 + $0x110] sm:$0xff]
        %v1276 = vld [vmem:[#allocation2 + $0x118] sm:$0xff]
        %v1277 = vld [vmem:[#allocation2 + $0x26e] sm:$0x1]
        %v1278 = vlaneseq
        %v1279 = vshrl.u32 %v1278, 7
        %v1280 = vsub.s32 0, %v1279
        %v1281 = vrot.slane %v1277, %v1280
        %v1283 = vsel %vm355, %v1272, 0
        %1285 = vmatprep.subr.mxu0 0.0
        %1286 = vmatpush1.msra.mxu0 %v1273
        %1287 = vmatprep.subr.mxu0 0.0
        %1288 = vmatpush1.msra.mxu0 %v1274
        %1289 = vmatprep.subr.mxu0 0.0
        %1290 = vmatpush1.msra.mxu0 %v1275
        %1291 = vmatprep.subr.mxu0 0.0
        %1292 = vmatpush1.msra.mxu0 %v1276
        %1293 = vmatprep.subr.mxu0 0.0
        %1294 = vmatpush1.msra.mxu0 0.0
        %1295 = vmatprep.subr.mxu0 0.0
        %1296 = vmatpush1.msra.mxu0 0.0
        %1297 = vmatprep.subr.mxu0 0.0
        %1298 = vmatpush1.msra.mxu0 0.0
        %1299 = vmatprep.subr.mxu0 0.0
        %1300 = vmatpush1.msra.mxu0 0.0
        %1301 = vmatprep.subr.mxu0 0.0
        %1302 = vmatpush1.msra.mxu0 0.0
        %1303 = vmatprep.subr.mxu0 0.0
        %1304 = vmatpush1.msra.mxu0 0.0
        %1305 = vmatprep.subr.mxu0 0.0
        %1306 = vmatpush1.msra.mxu0 0.0
        %1307 = vmatprep.subr.mxu0 0.0
        %1308 = vmatpush1.msra.mxu0 0.0
        %1309 = vmatprep.subr.mxu0 0.0
        %1310 = vmatpush1.msra.mxu0 0.0
        %1311 = vmatprep.subr.mxu0 0.0
        %1312 = vmatpush1.msra.mxu0 0.0
        %1313 = vmatprep.subr.mxu0 0.0
        %1314 = vmatpush1.msra.mxu0 0.0
        %1315 = vmatprep.subr.mxu0 0.0
        %1316 = vmatpush1.msra.mxu0 0.0
        %1317 = vmatprep.subr.mxu0 0.0
        %1318 = vmatpush1.msra.mxu0 0.0
        %1319 = vmatprep.subr.mxu0 0.0
        %1320 = vmatpush1.msra.mxu0 0.0
        %1321 = vmatprep.subr.mxu0 0.0
        %1322 = vmatpush1.msra.mxu0 0.0
        %1323 = vmatprep.subr.mxu0 0.0
        %1324 = vmatpush1.msra.mxu0 0.0
        %1325 = vmatprep.subr.mxu0 0.0
        %1326 = vmatpush1.msra.mxu0 0.0
        %1327 = vmatprep.subr.mxu0 0.0
        %1328 = vmatpush1.msra.mxu0 0.0
        %1329 = vmatprep.subr.mxu0 0.0
        %1330 = vmatpush1.msra.mxu0 0.0
        %1331 = vmatprep.subr.mxu0 0.0
        %1332 = vmatpush1.msra.mxu0 0.0
        %1333 = vmatprep.subr.mxu0 0.0
        %1334 = vmatpush1.msra.mxu0 0.0
        %1335 = vmatprep.subr.mxu0 0.0
        %1336 = vmatpush1.msra.mxu0 0.0
        %1337 = vmatprep.subr.mxu0 0.0
        %1338 = vmatpush1.msra.mxu0 0.0
        %1339 = vmatprep.subr.mxu0 0.0
        %1340 = vmatpush1.msra.mxu0 0.0
        %1341 = vmatprep.subr.mxu0 0.0
        %1342 = vmatpush1.msra.mxu0 0.0
        %1343 = vmatprep.subr.mxu0 0.0
        %1344 = vmatpush1.msra.mxu0 0.0
        %1345 = vmatprep.subr.mxu0 0.0
        %1346 = vmatpush1.msra.mxu0 0.0
        %1347 = vmatprep.subr.mxu0 0.0
        %1348 = vmatpush1.msra.mxu0 0.0
        %1349 = vmatprep.mubr.f32.mxu0 0.0
        %1350 = vmatmul.mubr.f32.gmra.mrb[0].mxu0 %v1283
        %v1351 = vpop.f32.mrb[0].mxu0
        %v1352 = vadd.f32 %v1281, %v1351
        %v1353 = vpop.f32.mrb[0].mxu0
        %1354 = vdwg.mxu0
        %v1355 = vmul.f32 %v1352, 0.25
        %v1356 = vld [vmem:[#allocation2 + $0x120] sm:$0xff]
        %v1357 = vld [vmem:[#allocation2 + $0x128] sm:$0xff]
        %v1358 = vld [vmem:[#allocation2 + $0x130] sm:$0xff]
        %v1359 = vld [vmem:[#allocation2 + $0x138] sm:$0xff]
        %v1360 = vld [vmem:[#allocation2 + $0x26f] sm:$0x1]
        %v1361 = vlaneseq
        %v1362 = vshrl.u32 %v1361, 7
        %v1363 = vsub.s32 0, %v1362
        %v1364 = vrot.slane %v1360, %v1363
        %1365 = vmatprep.subr.mxu0 0.0
        %1366 = vmatpush1.msra.mxu0 %v1356
        %1367 = vmatprep.subr.mxu0 0.0
        %1368 = vmatpush1.msra.mxu0 %v1357
        %1369 = vmatprep.subr.mxu0 0.0
        %1370 = vmatpush1.msra.mxu0 %v1358
        %1371 = vmatprep.subr.mxu0 0.0
        %1372 = vmatpush1.msra.mxu0 %v1359
        %1373 = vmatprep.subr.mxu0 0.0
        %1374 = vmatpush1.msra.mxu0 0.0
        %1375 = vmatprep.subr.mxu0 0.0
        %1376 = vmatpush1.msra.mxu0 0.0
        %1377 = vmatprep.subr.mxu0 0.0
        %1378 = vmatpush1.msra.mxu0 0.0
        %1379 = vmatprep.subr.mxu0 0.0
        %1380 = vmatpush1.msra.mxu0 0.0
        %1381 = vmatprep.subr.mxu0 0.0
        %1382 = vmatpush1.msra.mxu0 0.0
        %1383 = vmatprep.subr.mxu0 0.0
        %1384 = vmatpush1.msra.mxu0 0.0
        %1385 = vmatprep.subr.mxu0 0.0
        %1386 = vmatpush1.msra.mxu0 0.0
        %1387 = vmatprep.subr.mxu0 0.0
        %1388 = vmatpush1.msra.mxu0 0.0
        %1389 = vmatprep.subr.mxu0 0.0
        %1390 = vmatpush1.msra.mxu0 0.0
        %1391 = vmatprep.subr.mxu0 0.0
        %1392 = vmatpush1.msra.mxu0 0.0
        %1393 = vmatprep.subr.mxu0 0.0
        %1394 = vmatpush1.msra.mxu0 0.0
        %1395 = vmatprep.subr.mxu0 0.0
        %1396 = vmatpush1.msra.mxu0 0.0
        %1397 = vmatprep.subr.mxu0 0.0
        %1398 = vmatpush1.msra.mxu0 0.0
        %1399 = vmatprep.subr.mxu0 0.0
        %1400 = vmatpush1.msra.mxu0 0.0
        %1401 = vmatprep.subr.mxu0 0.0
        %1402 = vmatpush1.msra.mxu0 0.0
        %1403 = vmatprep.subr.mxu0 0.0
        %1404 = vmatpush1.msra.mxu0 0.0
        %1405 = vmatprep.subr.mxu0 0.0
        %1406 = vmatpush1.msra.mxu0 0.0
        %1407 = vmatprep.subr.mxu0 0.0
        %1408 = vmatpush1.msra.mxu0 0.0
        %1409 = vmatprep.subr.mxu0 0.0
        %1410 = vmatpush1.msra.mxu0 0.0
        %1411 = vmatprep.subr.mxu0 0.0
        %1412 = vmatpush1.msra.mxu0 0.0
        %1413 = vmatprep.subr.mxu0 0.0
        %1414 = vmatpush1.msra.mxu0 0.0
        %1415 = vmatprep.subr.mxu0 0.0
        %1416 = vmatpush1.msra.mxu0 0.0
        %1417 = vmatprep.subr.mxu0 0.0
        %1418 = vmatpush1.msra.mxu0 0.0
        %1419 = vmatprep.subr.mxu0 0.0
        %1420 = vmatpush1.msra.mxu0 0.0
        %1421 = vmatprep.subr.mxu0 0.0
        %1422 = vmatpush1.msra.mxu0 0.0
        %1423 = vmatprep.subr.mxu0 0.0
        %1424 = vmatpush1.msra.mxu0 0.0
        %1425 = vmatprep.subr.mxu0 0.0
        %1426 = vmatpush1.msra.mxu0 0.0
        %1427 = vmatprep.subr.mxu0 0.0
        %1428 = vmatpush1.msra.mxu0 0.0
        %1429 = vmatprep.mubr.f32.mxu0 0.0
        %1430 = vmatmul.mubr.f32.gmra.mrb[0].mxu0 %v1283
        %v1431 = vpop.f32.mrb[0].mxu0
        %v1432 = vadd.f32 %v1364, %v1431
        %v1433 = vpop.f32.mrb[0].mxu0
        %1434 = vdwg.mxu0
        %v1435 = vld [vmem:[#allocation2 + $0x140] sm:$0xff]
        %v1436 = vld [vmem:[#allocation2 + $0x148] sm:$0xff]
        %v1437 = vld [vmem:[#allocation2 + $0x150] sm:$0xff]
        %v1438 = vld [vmem:[#allocation2 + $0x158] sm:$0xff]
        %v1439 = vld [vmem:[#allocation2 + $0x270] sm:$0x1]
        %v1440 = vlaneseq
        %v1441 = vshrl.u32 %v1440, 7
        %v1442 = vsub.s32 0, %v1441
        %v1443 = vrot.slane %v1439, %v1442
        %1444 = vmatprep.subr.mxu0 0.0
        %1445 = vmatpush1.msra.mxu0 %v1435
        %1446 = vmatprep.subr.mxu0 0.0
        %1447 = vmatpush1.msra.mxu0 %v1436
        %1448 = vmatprep.subr.mxu0 0.0
        %1449 = vmatpush1.msra.mxu0 %v1437
        %1450 = vmatprep.subr.mxu0 0.0
        %1451 = vmatpush1.msra.mxu0 %v1438
        %1452 = vmatprep.subr.mxu0 0.0
        %1453 = vmatpush1.msra.mxu0 0.0
        %1454 = vmatprep.subr.mxu0 0.0
        %1455 = vmatpush1.msra.mxu0 0.0
        %1456 = vmatprep.subr.mxu0 0.0
        %1457 = vmatpush1.msra.mxu0 0.0
        %1458 = vmatprep.subr.mxu0 0.0
        %1459 = vmatpush1.msra.mxu0 0.0
        %1460 = vmatprep.subr.mxu0 0.0
        %1461 = vmatpush1.msra.mxu0 0.0
        %1462 = vmatprep.subr.mxu0 0.0
        %1463 = vmatpush1.msra.mxu0 0.0
        %1464 = vmatprep.subr.mxu0 0.0
        %1465 = vmatpush1.msra.mxu0 0.0
        %1466 = vmatprep.subr.mxu0 0.0
        %1467 = vmatpush1.msra.mxu0 0.0
        %1468 = vmatprep.subr.mxu0 0.0
        %1469 = vmatpush1.msra.mxu0 0.0
        %1470 = vmatprep.subr.mxu0 0.0
        %1471 = vmatpush1.msra.mxu0 0.0
        %1472 = vmatprep.subr.mxu0 0.0
        %1473 = vmatpush1.msra.mxu0 0.0
        %1474 = vmatprep.subr.mxu0 0.0
        %1475 = vmatpush1.msra.mxu0 0.0
        %1476 = vmatprep.subr.mxu0 0.0
        %1477 = vmatpush1.msra.mxu0 0.0
        %1478 = vmatprep.subr.mxu0 0.0
        %1479 = vmatpush1.msra.mxu0 0.0
        %1480 = vmatprep.subr.mxu0 0.0
        %1481 = vmatpush1.msra.mxu0 0.0
        %1482 = vmatprep.subr.mxu0 0.0
        %1483 = vmatpush1.msra.mxu0 0.0
        %1484 = vmatprep.subr.mxu0 0.0
        %1485 = vmatpush1.msra.mxu0 0.0
        %1486 = vmatprep.subr.mxu0 0.0
        %1487 = vmatpush1.msra.mxu0 0.0
        %1488 = vmatprep.subr.mxu0 0.0
        %1489 = vmatpush1.msra.mxu0 0.0
        %1490 = vmatprep.subr.mxu0 0.0
        %1491 = vmatpush1.msra.mxu0 0.0
        %1492 = vmatprep.subr.mxu0 0.0
        %1493 = vmatpush1.msra.mxu0 0.0
        %1494 = vmatprep.subr.mxu0 0.0
        %1495 = vmatpush1.msra.mxu0 0.0
        %1496 = vmatprep.subr.mxu0 0.0
        %1497 = vmatpush1.msra.mxu0 0.0
        %1498 = vmatprep.subr.mxu0 0.0
        %1499 = vmatpush1.msra.mxu0 0.0
        %1500 = vmatprep.subr.mxu0 0.0
        %1501 = vmatpush1.msra.mxu0 0.0
        %1502 = vmatprep.subr.mxu0 0.0
        %1503 = vmatpush1.msra.mxu0 0.0
        %1504 = vmatprep.subr.mxu0 0.0
        %1505 = vmatpush1.msra.mxu0 0.0
        %1506 = vmatprep.subr.mxu0 0.0
        %1507 = vmatpush1.msra.mxu0 0.0
        %1508 = vmatprep.mubr.f32.mxu0 0.0
        %1509 = vmatmul.mubr.f32.gmra.mrb[0].mxu0 %v1283
        %v1510 = vpop.f32.mrb[0].mxu0
        %v1511 = vadd.f32 %v1443, %v1510
        %v1512 = vpop.f32.mrb[0].mxu0
        %1513 = vdwg.mxu0
        %v1514 = vmul.f32 %v1355, %v243
        %v1515 = vlaneseq
        %v1516 = vshrl.u32 %v1515, 7
        %v1517 = vsub.s32 0, %v1516
        %v1518 = vrot.slane %v354, %v1517
        %v1520 = vsel %vm355, %v1514, 0
        %v1523 = vsel %vm355, %v1432, 0
        %1525 = vmatprep.subr.mxu0 0.0
        %1526 = vmatpush1.xpose.msra.mxu0 %v1523
        %1527 = vmatprep.subr.mxu0 0.0
        %1528 = vmatpush1.xpose.msra.mxu0 0.0
        %1529 = vmatprep.subr.mxu0 0.0
        %1530 = vmatpush1.xpose.msra.mxu0 0.0
        %1531 = vmatprep.subr.mxu0 0.0
        %1532 = vmatpush1.xpose.msra.mxu0 0.0
        %1533 = vmatprep.subr.mxu0 0.0
        %1534 = vmatpush1.xpose.msra.mxu0 0.0
        %1535 = vmatprep.subr.mxu0 0.0
        %1536 = vmatpush1.xpose.msra.mxu0 0.0
        %1537 = vmatprep.subr.mxu0 0.0
        %1538 = vmatpush1.xpose.msra.mxu0 0.0
        %1539 = vmatprep.subr.mxu0 0.0
        %1540 = vmatpush1.xpose.msra.mxu0 0.0
        %1541 = vmatprep.subr.mxu0 0.0
        %1542 = vmatpush1.xpose.msra.mxu0 0.0
        %1543 = vmatprep.subr.mxu0 0.0
        %1544 = vmatpush1.xpose.msra.mxu0 0.0
        %1545 = vmatprep.subr.mxu0 0.0
        %1546 = vmatpush1.xpose.msra.mxu0 0.0
        %1547 = vmatprep.subr.mxu0 0.0
        %1548 = vmatpush1.xpose.msra.mxu0 0.0
        %1549 = vmatprep.subr.mxu0 0.0
        %1550 = vmatpush1.xpose.msra.mxu0 0.0
        %1551 = vmatprep.subr.mxu0 0.0
        %1552 = vmatpush1.xpose.msra.mxu0 0.0
        %1553 = vmatprep.subr.mxu0 0.0
        %1554 = vmatpush1.xpose.msra.mxu0 0.0
        %1555 = vmatprep.subr.mxu0 0.0
        %1556 = vmatpush1.xpose.msra.mxu0 0.0
        %1557 = vmatprep.subr.mxu0 0.0
        %1558 = vmatpush1.xpose.msra.mxu0 0.0
        %1559 = vmatprep.subr.mxu0 0.0
        %1560 = vmatpush1.xpose.msra.mxu0 0.0
        %1561 = vmatprep.subr.mxu0 0.0
        %1562 = vmatpush1.xpose.msra.mxu0 0.0
        %1563 = vmatprep.subr.mxu0 0.0
        %1564 = vmatpush1.xpose.msra.mxu0 0.0
        %1565 = vmatprep.subr.mxu0 0.0
        %1566 = vmatpush1.xpose.msra.mxu0 0.0
        %1567 = vmatprep.subr.mxu0 0.0
        %1568 = vmatpush1.xpose.msra.mxu0 0.0
        %1569 = vmatprep.subr.mxu0 0.0
        %1570 = vmatpush1.xpose.msra.mxu0 0.0
        %1571 = vmatprep.subr.mxu0 0.0
        %1572 = vmatpush1.xpose.msra.mxu0 0.0
        %1573 = vmatprep.subr.mxu0 0.0
        %1574 = vmatpush1.xpose.msra.mxu0 0.0
        %1575 = vmatprep.subr.mxu0 0.0
        %1576 = vmatpush1.xpose.msra.mxu0 0.0
        %1577 = vmatprep.subr.mxu0 0.0
        %1578 = vmatpush1.xpose.msra.mxu0 0.0
        %1579 = vmatprep.subr.mxu0 0.0
        %1580 = vmatpush1.xpose.msra.mxu0 0.0
        %1581 = vmatprep.subr.mxu0 0.0
        %1582 = vmatpush1.xpose.msra.mxu0 0.0
        %1583 = vmatprep.subr.mxu0 0.0
        %1584 = vmatpush1.xpose.msra.mxu0 0.0
        %1585 = vmatprep.subr.mxu0 0.0
        %1586 = vmatpush1.xpose.msra.mxu0 0.0
        %1587 = vmatprep.subr.mxu0 0.0
        %1588 = vmatpush1.xpose.msra.mxu0 0.0
        %1589 = vmatprep.mubr.f32.mxu0 0.0
        %1590 = vmatmul.mubr.f32.gmra.mrb[0].mxu0 %v1520
        %v1591 = vpop.f32.mrb[0].mxu0
        %v1592 = vadd.f32 %v1518, %v1591
        %v1593 = vpop.f32.mrb[0].mxu0
        %1594 = vdwg.mxu0
        %v1595 = vsel %vm704, %v1592, -inf
        %1596 = vmax.xlane.f32.xlu0 %v1595
        %v1597 = vpop.xlane.xlu0 %1596
        %v1598 = vsub.f32 %v1592, %v1597
        %v1599 = vmul.f32 %v1598, 1.442695
        %v1600 = vpow.pop %v1599
        %v1601 = vsel %vm704, %v1600, 0.0
        %1602 = vadd.xlane.f32.xlu0 %v1601
        %v1603 = vpop.xlane.xlu0 %1602
        %v1604 = vrcp.pop %v1603
        %v1605 = vmul.f32 %v1600, %v1604
        %v1606 = vmul.f32 %v1511, %v243
        %v1607 = vmul.f32 %v1355, %v248
        %v1609 = vsel %vm355, %v1607, 0
        %1611 = vmatprep.subr.mxu0 0.0
        %1612 = vmatpush1.xpose.msra.mxu0 %v1523
        %1613 = vmatprep.subr.mxu0 0.0
        %1614 = vmatpush1.xpose.msra.mxu0 0.0
        %1615 = vmatprep.subr.mxu0 0.0
        %1616 = vmatpush1.xpose.msra.mxu0 0.0
        %1617 = vmatprep.subr.mxu0 0.0
        %1618 = vmatpush1.xpose.msra.mxu0 0.0
        %1619 = vmatprep.subr.mxu0 0.0
        %1620 = vmatpush1.xpose.msra.mxu0 0.0
        %1621 = vmatprep.subr.mxu0 0.0
        %1622 = vmatpush1.xpose.msra.mxu0 0.0
        %1623 = vmatprep.subr.mxu0 0.0
        %1624 = vmatpush1.xpose.msra.mxu0 0.0
        %1625 = vmatprep.subr.mxu0 0.0
        %1626 = vmatpush1.xpose.msra.mxu0 0.0
        %1627 = vmatprep.subr.mxu0 0.0
        %1628 = vmatpush1.xpose.msra.mxu0 0.0
        %1629 = vmatprep.subr.mxu0 0.0
        %1630 = vmatpush1.xpose.msra.mxu0 0.0
        %1631 = vmatprep.subr.mxu0 0.0
        %1632 = vmatpush1.xpose.msra.mxu0 0.0
        %1633 = vmatprep.subr.mxu0 0.0
        %1634 = vmatpush1.xpose.msra.mxu0 0.0
        %1635 = vmatprep.subr.mxu0 0.0
        %1636 = vmatpush1.xpose.msra.mxu0 0.0
        %1637 = vmatprep.subr.mxu0 0.0
        %1638 = vmatpush1.xpose.msra.mxu0 0.0
        %1639 = vmatprep.subr.mxu0 0.0
        %1640 = vmatpush1.xpose.msra.mxu0 0.0
        %1641 = vmatprep.subr.mxu0 0.0
        %1642 = vmatpush1.xpose.msra.mxu0 0.0
        %1643 = vmatprep.subr.mxu0 0.0
        %1644 = vmatpush1.xpose.msra.mxu0 0.0
        %1645 = vmatprep.subr.mxu0 0.0
        %1646 = vmatpush1.xpose.msra.mxu0 0.0
        %1647 = vmatprep.subr.mxu0 0.0
        %1648 = vmatpush1.xpose.msra.mxu0 0.0
        %1649 = vmatprep.subr.mxu0 0.0
        %1650 = vmatpush1.xpose.msra.mxu0 0.0
        %1651 = vmatprep.subr.mxu0 0.0
        %1652 = vmatpush1.xpose.msra.mxu0 0.0
        %1653 = vmatprep.subr.mxu0 0.0
        %1654 = vmatpush1.xpose.msra.mxu0 0.0
        %1655 = vmatprep.subr.mxu0 0.0
        %1656 = vmatpush1.xpose.msra.mxu0 0.0
        %1657 = vmatprep.subr.mxu0 0.0
        %1658 = vmatpush1.xpose.msra.mxu0 0.0
        %1659 = vmatprep.subr.mxu0 0.0
        %1660 = vmatpush1.xpose.msra.mxu0 0.0
        %1661 = vmatprep.subr.mxu0 0.0
        %1662 = vmatpush1.xpose.msra.mxu0 0.0
        %1663 = vmatprep.subr.mxu0 0.0
        %1664 = vmatpush1.xpose.msra.mxu0 0.0
        %1665 = vmatprep.subr.mxu0 0.0
        %1666 = vmatpush1.xpose.msra.mxu0 0.0
        %1667 = vmatprep.subr.mxu0 0.0
        %1668 = vmatpush1.xpose.msra.mxu0 0.0
        %1669 = vmatprep.subr.mxu0 0.0
        %1670 = vmatpush1.xpose.msra.mxu0 0.0
        %1671 = vmatprep.subr.mxu0 0.0
        %1672 = vmatpush1.xpose.msra.mxu0 0.0
        %1673 = vmatprep.subr.mxu0 0.0
        %1674 = vmatpush1.xpose.msra.mxu0 0.0
        %1675 = vmatprep.mubr.f32.mxu0 0.0
        %1676 = vmatmul.mubr.f32.gmra.mrb[0].mxu0 %v1609
        %v1677 = vpop.f32.mrb[0].mxu0
        %v1678 = vadd.f32 %v1518, %v1677
        %v1679 = vpop.f32.mrb[0].mxu0
        %1680 = vdwg.mxu0
        %v1681 = vsel %vm704, %v1678, -inf
        %1682 = vmax.xlane.f32.xlu0 %v1681
        %v1683 = vpop.xlane.xlu0 %1682
        %v1684 = vsub.f32 %v1678, %v1683
        %v1685 = vmul.f32 %v1684, 1.442695
        %v1686 = vpow.pop %v1685
        %v1687 = vsel %vm704, %v1686, 0.0
        %1688 = vadd.xlane.f32.xlu0 %v1687
        %v1689 = vpop.xlane.xlu0 %1688
        %v1690 = vrcp.pop %v1689
        %v1691 = vmul.f32 %v1686, %v1690
        %v1692 = vmul.f32 %v1511, %v248
        %v1694 = vsel %vm704, %v1691, 0
        %1696 = vmatprep.subr.mxu0 0.0
        %1697 = vmatpush1.msra.mxu0 %v1692
        %1698 = vmatprep.subr.mxu0 0.0
        %1699 = vmatpush1.msra.mxu0 0.0
        %1700 = vmatprep.subr.mxu0 0.0
        %1701 = vmatpush1.msra.mxu0 0.0
        %1702 = vmatprep.subr.mxu0 0.0
        %1703 = vmatpush1.msra.mxu0 0.0
        %1704 = vmatprep.subr.mxu0 0.0
        %1705 = vmatpush1.msra.mxu0 0.0
        %1706 = vmatprep.subr.mxu0 0.0
        %1707 = vmatpush1.msra.mxu0 0.0
        %1708 = vmatprep.subr.mxu0 0.0
        %1709 = vmatpush1.msra.mxu0 0.0
        %1710 = vmatprep.subr.mxu0 0.0
        %1711 = vmatpush1.msra.mxu0 0.0
        %1712 = vmatprep.subr.mxu0 0.0
        %1713 = vmatpush1.msra.mxu0 0.0
        %1714 = vmatprep.subr.mxu0 0.0
        %1715 = vmatpush1.msra.mxu0 0.0
        %1716 = vmatprep.subr.mxu0 0.0
        %1717 = vmatpush1.msra.mxu0 0.0
        %1718 = vmatprep.subr.mxu0 0.0
        %1719 = vmatpush1.msra.mxu0 0.0
        %1720 = vmatprep.subr.mxu0 0.0
        %1721 = vmatpush1.msra.mxu0 0.0
        %1722 = vmatprep.subr.mxu0 0.0
        %1723 = vmatpush1.msra.mxu0 0.0
        %1724 = vmatprep.subr.mxu0 0.0
        %1725 = vmatpush1.msra.mxu0 0.0
        %1726 = vmatprep.subr.mxu0 0.0
        %1727 = vmatpush1.msra.mxu0 0.0
        %1728 = vmatprep.subr.mxu0 0.0
        %1729 = vmatpush1.msra.mxu0 0.0
        %1730 = vmatprep.subr.mxu0 0.0
        %1731 = vmatpush1.msra.mxu0 0.0
        %1732 = vmatprep.subr.mxu0 0.0
        %1733 = vmatpush1.msra.mxu0 0.0
        %1734 = vmatprep.subr.mxu0 0.0
        %1735 = vmatpush1.msra.mxu0 0.0
        %1736 = vmatprep.subr.mxu0 0.0
        %1737 = vmatpush1.msra.mxu0 0.0
        %1738 = vmatprep.subr.mxu0 0.0
        %1739 = vmatpush1.msra.mxu0 0.0
        %1740 = vmatprep.subr.mxu0 0.0
        %1741 = vmatpush1.msra.mxu0 0.0
        %1742 = vmatprep.subr.mxu0 0.0
        %1743 = vmatpush1.msra.mxu0 0.0
        %1744 = vmatprep.subr.mxu0 0.0
        %1745 = vmatpush1.msra.mxu0 0.0
        %1746 = vmatprep.subr.mxu0 0.0
        %1747 = vmatpush1.msra.mxu0 0.0
        %1748 = vmatprep.subr.mxu0 0.0
        %1749 = vmatpush1.msra.mxu0 0.0
        %1750 = vmatprep.subr.mxu0 0.0
        %1751 = vmatpush1.msra.mxu0 0.0
        %1752 = vmatprep.subr.mxu0 0.0
        %1753 = vmatpush1.msra.mxu0 0.0
        %1754 = vmatprep.subr.mxu0 0.0
        %1755 = vmatpush1.msra.mxu0 0.0
        %1756 = vmatprep.subr.mxu0 0.0
        %1757 = vmatpush1.msra.mxu0 0.0
        %1758 = vmatprep.subr.mxu0 0.0
        %1759 = vmatpush1.msra.mxu0 0.0
        %1760 = vmatprep.mubr.f32.mxu0 0.0
        %1761 = vmatmul.mubr.f32.gmra.mrb[0].mxu0 %v1694
        %v1762 = vpop.f32.mrb[0].mxu0
        %v1763 = vadd.f32 0.0, %v1762
        %v1764 = vpop.f32.mrb[0].mxu0
        %1765 = vdwg.mxu0
        %v1767 = vsel %vm704, %v1605, 0
        %1769 = vmatprep.subr.mxu0 0.0
        %1770 = vmatpush1.msra.mxu0 %v1606
        %1771 = vmatprep.subr.mxu0 0.0
        %1772 = vmatpush1.msra.mxu0 0.0
        %1773 = vmatprep.subr.mxu0 0.0
        %1774 = vmatpush1.msra.mxu0 0.0
        %1775 = vmatprep.subr.mxu0 0.0
        %1776 = vmatpush1.msra.mxu0 0.0
        %1777 = vmatprep.subr.mxu0 0.0
        %1778 = vmatpush1.msra.mxu0 0.0
        %1779 = vmatprep.subr.mxu0 0.0
        %1780 = vmatpush1.msra.mxu0 0.0
        %1781 = vmatprep.subr.mxu0 0.0
        %1782 = vmatpush1.msra.mxu0 0.0
        %1783 = vmatprep.subr.mxu0 0.0
        %1784 = vmatpush1.msra.mxu0 0.0
        %1785 = vmatprep.subr.mxu0 0.0
        %1786 = vmatpush1.msra.mxu0 0.0
        %1787 = vmatprep.subr.mxu0 0.0
        %1788 = vmatpush1.msra.mxu0 0.0
        %1789 = vmatprep.subr.mxu0 0.0
        %1790 = vmatpush1.msra.mxu0 0.0
        %1791 = vmatprep.subr.mxu0 0.0
        %1792 = vmatpush1.msra.mxu0 0.0
        %1793 = vmatprep.subr.mxu0 0.0
        %1794 = vmatpush1.msra.mxu0 0.0
        %1795 = vmatprep.subr.mxu0 0.0
        %1796 = vmatpush1.msra.mxu0 0.0
        %1797 = vmatprep.subr.mxu0 0.0
        %1798 = vmatpush1.msra.mxu0 0.0
        %1799 = vmatprep.subr.mxu0 0.0
        %1800 = vmatpush1.msra.mxu0 0.0
        %1801 = vmatprep.subr.mxu0 0.0
        %1802 = vmatpush1.msra.mxu0 0.0
        %1803 = vmatprep.subr.mxu0 0.0
        %1804 = vmatpush1.msra.mxu0 0.0
        %1805 = vmatprep.subr.mxu0 0.0
        %1806 = vmatpush1.msra.mxu0 0.0
        %1807 = vmatprep.subr.mxu0 0.0
        %1808 = vmatpush1.msra.mxu0 0.0
        %1809 = vmatprep.subr.mxu0 0.0
        %1810 = vmatpush1.msra.mxu0 0.0
        %1811 = vmatprep.subr.mxu0 0.0
        %1812 = vmatpush1.msra.mxu0 0.0
        %1813 = vmatprep.subr.mxu0 0.0
        %1814 = vmatpush1.msra.mxu0 0.0
        %1815 = vmatprep.subr.mxu0 0.0
        %1816 = vmatpush1.msra.mxu0 0.0
        %1817 = vmatprep.subr.mxu0 0.0
        %1818 = vmatpush1.msra.mxu0 0.0
        %1819 = vmatprep.subr.mxu0 0.0
        %1820 = vmatpush1.msra.mxu0 0.0
        %1821 = vmatprep.subr.mxu0 0.0
        %1822 = vmatpush1.msra.mxu0 0.0
        %1823 = vmatprep.subr.mxu0 0.0
        %1824 = vmatpush1.msra.mxu0 0.0
        %1825 = vmatprep.subr.mxu0 0.0
        %1826 = vmatpush1.msra.mxu0 0.0
        %1827 = vmatprep.subr.mxu0 0.0
        %1828 = vmatpush1.msra.mxu0 0.0
        %1829 = vmatprep.subr.mxu0 0.0
        %1830 = vmatpush1.msra.mxu0 0.0
        %1831 = vmatprep.subr.mxu0 0.0
        %1832 = vmatpush1.msra.mxu0 0.0
        %1833 = vmatprep.mubr.f32.mxu0 0.0
        %1834 = vmatmul.mubr.f32.gmra.mrb[0].mxu0 %v1767
        %v1835 = vpop.f32.mrb[0].mxu0
        %v1836 = vadd.f32 %v1763, %v1835
        %v1837 = vpop.f32.mrb[0].mxu0
        %1838 = vdwg.mxu0
        %v1839 = vld [vmem:[#allocation2 + $0x160] sm:$0xff]
        %v1840 = vld [vmem:[#allocation2 + $0x168] sm:$0xff]
        %v1841 = vld [vmem:[#allocation2 + $0x170] sm:$0xff]
        %v1842 = vld [vmem:[#allocation2 + $0x178] sm:$0xff]
        %v1843 = vld [vmem:[#allocation2 + $0x271] sm:$0x1]
        %v1844 = vlaneseq
        %v1845 = vshrl.u32 %v1844, 7
        %v1846 = vsub.s32 0, %v1845
        %v1847 = vrot.slane %v1843, %v1846
        %v1849 = vsel %vm355, %v1836, 0
        %1851 = vmatprep.subr.mxu0 0.0
        %1852 = vmatpush1.msra.mxu0 %v1839
        %1853 = vmatprep.subr.mxu0 0.0
        %1854 = vmatpush1.msra.mxu0 %v1840
        %1855 = vmatprep.subr.mxu0 0.0
        %1856 = vmatpush1.msra.mxu0 %v1841
        %1857 = vmatprep.subr.mxu0 0.0
        %1858 = vmatpush1.msra.mxu0 %v1842
        %1859 = vmatprep.subr.mxu0 0.0
        %1860 = vmatpush1.msra.mxu0 0.0
        %1861 = vmatprep.subr.mxu0 0.0
        %1862 = vmatpush1.msra.mxu0 0.0
        %1863 = vmatprep.subr.mxu0 0.0
        %1864 = vmatpush1.msra.mxu0 0.0
        %1865 = vmatprep.subr.mxu0 0.0
        %1866 = vmatpush1.msra.mxu0 0.0
        %1867 = vmatprep.subr.mxu0 0.0
        %1868 = vmatpush1.msra.mxu0 0.0
        %1869 = vmatprep.subr.mxu0 0.0
        %1870 = vmatpush1.msra.mxu0 0.0
        %1871 = vmatprep.subr.mxu0 0.0
        %1872 = vmatpush1.msra.mxu0 0.0
        %1873 = vmatprep.subr.mxu0 0.0
        %1874 = vmatpush1.msra.mxu0 0.0
        %1875 = vmatprep.subr.mxu0 0.0
        %1876 = vmatpush1.msra.mxu0 0.0
        %1877 = vmatprep.subr.mxu0 0.0
        %1878 = vmatpush1.msra.mxu0 0.0
        %1879 = vmatprep.subr.mxu0 0.0
        %1880 = vmatpush1.msra.mxu0 0.0
        %1881 = vmatprep.subr.mxu0 0.0
        %1882 = vmatpush1.msra.mxu0 0.0
        %1883 = vmatprep.subr.mxu0 0.0
        %1884 = vmatpush1.msra.mxu0 0.0
        %1885 = vmatprep.subr.mxu0 0.0
        %1886 = vmatpush1.msra.mxu0 0.0
        %1887 = vmatprep.subr.mxu0 0.0
        %1888 = vmatpush1.msra.mxu0 0.0
        %1889 = vmatprep.subr.mxu0 0.0
        %1890 = vmatpush1.msra.mxu0 0.0
        %1891 = vmatprep.subr.mxu0 0.0
        %1892 = vmatpush1.msra.mxu0 0.0
        %1893 = vmatprep.subr.mxu0 0.0
        %1894 = vmatpush1.msra.mxu0 0.0
        %1895 = vmatprep.subr.mxu0 0.0
        %1896 = vmatpush1.msra.mxu0 0.0
        %1897 = vmatprep.subr.mxu0 0.0
        %1898 = vmatpush1.msra.mxu0 0.0
        %1899 = vmatprep.subr.mxu0 0.0
        %1900 = vmatpush1.msra.mxu0 0.0
        %1901 = vmatprep.subr.mxu0 0.0
        %1902 = vmatpush1.msra.mxu0 0.0
        %1903 = vmatprep.subr.mxu0 0.0
        %1904 = vmatpush1.msra.mxu0 0.0
        %1905 = vmatprep.subr.mxu0 0.0
        %1906 = vmatpush1.msra.mxu0 0.0
        %1907 = vmatprep.subr.mxu0 0.0
        %1908 = vmatpush1.msra.mxu0 0.0
        %1909 = vmatprep.subr.mxu0 0.0
        %1910 = vmatpush1.msra.mxu0 0.0
        %1911 = vmatprep.subr.mxu0 0.0
        %1912 = vmatpush1.msra.mxu0 0.0
        %1913 = vmatprep.subr.mxu0 0.0
        %1914 = vmatpush1.msra.mxu0 0.0
        %1915 = vmatprep.mubr.f32.mxu0 0.0
        %1916 = vmatmul.mubr.f32.gmra.mrb[0].mxu0 %v1849
        %v1917 = vpop.f32.mrb[0].mxu0
        %v1918 = vadd.f32 %v1847, %v1917
        %v1919 = vpop.f32.mrb[0].mxu0
        %1920 = vdwg.mxu0
        %v1921 = vadd.f32 %v350, %v1918
        %v1922 = vsel %vm355, %v1921, 0.0
        %1923 = vadd.xlane.f32.xlu0 %v1922
        %v1924 = vpop.xlane.xlu0 %1923
        %v1925 = vmul.f32 %v1924, %v359
        %v1926 = vsub.f32 %v1921, %v1925
        %v1927 = vmul.f32 %v1926, %v1926
        %v1928 = vsel %vm355, %v1927, 0.0
        %1929 = vadd.xlane.f32.xlu0 %v1928
        %v1930 = vpop.xlane.xlu0 %1929
        %v1931 = vmul.f32 %v1930, %v359
        %v1932 = vadd.f32 %v1931, 1e-05
        %v1933 = vrsqrt.pop %v1932
        %v1934 = vmul.f32 %v1926, %v1933
        %v1935 = vld [vmem:[#allocation2 + $0x272] sm:$0x1]
        %v1936 = vlaneseq
        %v1937 = vshrl.u32 %v1936, 7
        %v1938 = vsub.s32 0, %v1937
        %v1939 = vrot.slane %v1935, %v1938
        %v1940 = vmul.f32 %v1934, %v1939
        %v1941 = vld [vmem:[#allocation2 + $0x273] sm:$0x1]
        %v1942 = vlaneseq
        %v1943 = vshrl.u32 %v1942, 7
        %v1944 = vsub.s32 0, %v1943
        %v1945 = vrot.slane %v1941, %v1944
        %v1946 = vadd.f32 %v1940, %v1945
        %v1947 = vld [vmem:[#allocation2 + $0x180] sm:$0xff]
        %v1948 = vld [vmem:[#allocation2 + $0x188] sm:$0xff]
        %v1949 = vld [vmem:[#allocation2 + $0x190] sm:$0xff]
        %v1950 = vld [vmem:[#allocation2 + $0x198] sm:$0xff]
        %v1951 = vld [vmem:[#allocation2 + $0x274] sm:$0x1]
        %v1952 = vlaneseq
        %v1953 = vshrl.u32 %v1952, 7
        %v1954 = vsub.s32 0, %v1953
        %v1955 = vrot.slane %v1951, %v1954
        %v1957 = vsel %vm355, %v1946, 0
        %1959 = vmatprep.subr.mxu0 0.0
        %1960 = vmatpush1.msra.mxu0 %v1947
        %1961 = vmatprep.subr.mxu0 0.0
        %1962 = vmatpush1.msra.mxu0 %v1948
        %1963 = vmatprep.subr.mxu0 0.0
        %1964 = vmatpush1.msra.mxu0 %v1949
        %1965 = vmatprep.subr.mxu0 0.0
        %1966 = vmatpush1.msra.mxu0 %v1950
        %1967 = vmatprep.subr.mxu0 0.0
        %1968 = vmatpush1.msra.mxu0 0.0
        %1969 = vmatprep.subr.mxu0 0.0
        %1970 = vmatpush1.msra.mxu0 0.0
        %1971 = vmatprep.subr.mxu0 0.0
        %1972 = vmatpush1.msra.mxu0 0.0
        %1973 = vmatprep.subr.mxu0 0.0
        %1974 = vmatpush1.msra.mxu0 0.0
        %1975 = vmatprep.subr.mxu0 0.0
        %1976 = vmatpush1.msra.mxu0 0.0
        %1977 = vmatprep.subr.mxu0 0.0
        %1978 = vmatpush1.msra.mxu0 0.0
        %1979 = vmatprep.subr.mxu0 0.0
        %1980 = vmatpush1.msra.mxu0 0.0
        %1981 = vmatprep.subr.mxu0 0.0
        %1982 = vmatpush1.msra.mxu0 0.0
        %1983 = vmatprep.subr.mxu0 0.0
        %1984 = vmatpush1.msra.mxu0 0.0
        %1985 = vmatprep.subr.mxu0 0.0
        %1986 = vmatpush1.msra.mxu0 0.0
        %1987 = vmatprep.subr.mxu0 0.0
        %1988 = vmatpush1.msra.mxu0 0.0
        %1989 = vmatprep.subr.mxu0 0.0
        %1990 = vmatpush1.msra.mxu0 0.0
        %1991 = vmatprep.subr.mxu0 0.0
        %1992 = vmatpush1.msra.mxu0 0.0
        %1993 = vmatprep.subr.mxu0 0.0
        %1994 = vmatpush1.msra.mxu0 0.0
        %1995 = vmatprep.subr.mxu0 0.0
        %1996 = vmatpush1.msra.mxu0 0.0
        %1997 = vmatprep.subr.mxu0 0.0
        %1998 = vmatpush1.msra.mxu0 0.0
        %1999 = vmatprep.subr.mxu0 0.0
        %2000 = vmatpush1.msra.mxu0 0.0
        %2001 = vmatprep.subr.mxu0 0.0
        %2002 = vmatpush1.msra.mxu0 0.0
        %2003 = vmatprep.subr.mxu0 0.0
        %2004 = vmatpush1.msra.mxu0 0.0
        %2005 = vmatprep.subr.mxu0 0.0
        %2006 = vmatpush1.msra.mxu0 0.0
        %2007 = vmatprep.subr.mxu0 0.0
        %2008 = vmatpush1.msra.mxu0 0.0
        %2009 = vmatprep.subr.mxu0 0.0
        %2010 = vmatpush1.msra.mxu0 0.0
        %2011 = vmatprep.subr.mxu0 0.0
        %2012 = vmatpush1.msra.mxu0 0.0
        %2013 = vmatprep.subr.mxu0 0.0
        %2014 = vmatpush1.msra.mxu0 0.0
        %2015 = vmatprep.subr.mxu0 0.0
        %2016 = vmatpush1.msra.mxu0 0.0
        %2017 = vmatprep.subr.mxu0 0.0
        %2018 = vmatpush1.msra.mxu0 0.0
        %2019 = vmatprep.subr.mxu0 0.0
        %2020 = vmatpush1.msra.mxu0 0.0
        %2021 = vmatprep.subr.mxu0 0.0
        %2022 = vmatpush1.msra.mxu0 0.0
        %2023 = vmatprep.mubr.f32.mxu0 0.0
        %2024 = vmatmul.mubr.f32.gmra.mrb[0].mxu0 %v1957
        %v2025 = vpop.f32.mrb[0].mxu0
        %v2026 = vadd.f32 %v1955, %v2025
        %v2027 = vpop.f32.mrb[0].mxu0
        %2028 = vdwg.mxu0
        %v2029 = vmul.f32 %v2026, 0.25
        %v2030 = vld [vmem:[#allocation2 + $0x1a0] sm:$0xff]
        %v2031 = vld [vmem:[#allocation2 + $0x1a8] sm:$0xff]
        %v2032 = vld [vmem:[#allocation2 + $0x1b0] sm:$0xff]
        %v2033 = vld [vmem:[#allocation2 + $0x1b8] sm:$0xff]
        %v2034 = vld [vmem:[#allocation2 + $0x275] sm:$0x1]
        %v2035 = vlaneseq
        %v2036 = vshrl.u32 %v2035, 7
        %v2037 = vsub.s32 0, %v2036
        %v2038 = vrot.slane %v2034, %v2037
        %v2040 = vsel %vm355, %v1247, 0
        %2042 = vmatprep.subr.mxu0 0.0
        %2043 = vmatpush1.msra.mxu0 %v2030
        %2044 = vmatprep.subr.mxu0 0.0
        %2045 = vmatpush1.msra.mxu0 %v2031
        %2046 = vmatprep.subr.mxu0 0.0
        %2047 = vmatpush1.msra.mxu0 %v2032
        %2048 = vmatprep.subr.mxu0 0.0
        %2049 = vmatpush1.msra.mxu0 %v2033
        %2050 = vmatprep.subr.mxu0 0.0
        %2051 = vmatpush1.msra.mxu0 0.0
        %2052 = vmatprep.subr.mxu0 0.0
        %2053 = vmatpush1.msra.mxu0 0.0
        %2054 = vmatprep.subr.mxu0 0.0
        %2055 = vmatpush1.msra.mxu0 0.0
        %2056 = vmatprep.subr.mxu0 0.0
        %2057 = vmatpush1.msra.mxu0 0.0
        %2058 = vmatprep.subr.mxu0 0.0
        %2059 = vmatpush1.msra.mxu0 0.0
        %2060 = vmatprep.subr.mxu0 0.0
        %2061 = vmatpush1.msra.mxu0 0.0
        %2062 = vmatprep.subr.mxu0 0.0
        %2063 = vmatpush1.msra.mxu0 0.0
        %2064 = vmatprep.subr.mxu0 0.0
        %2065 = vmatpush1.msra.mxu0 0.0
        %2066 = vmatprep.subr.mxu0 0.0
        %2067 = vmatpush1.msra.mxu0 0.0
        %2068 = vmatprep.subr.mxu0 0.0
        %2069 = vmatpush1.msra.mxu0 0.0
        %2070 = vmatprep.subr.mxu0 0.0
        %2071 = vmatpush1.msra.mxu0 0.0
        %2072 = vmatprep.subr.mxu0 0.0
        %2073 = vmatpush1.msra.mxu0 0.0
        %2074 = vmatprep.subr.mxu0 0.0
        %2075 = vmatpush1.msra.mxu0 0.0
        %2076 = vmatprep.subr.mxu0 0.0
        %2077 = vmatpush1.msra.mxu0 0.0
        %2078 = vmatprep.subr.mxu0 0.0
        %2079 = vmatpush1.msra.mxu0 0.0
        %2080 = vmatprep.subr.mxu0 0.0
        %2081 = vmatpush1.msra.mxu0 0.0
        %2082 = vmatprep.subr.mxu0 0.0
        %2083 = vmatpush1.msra.mxu0 0.0
        %2084 = vmatprep.subr.mxu0 0.0
        %2085 = vmatpush1.msra.mxu0 0.0
        %2086 = vmatprep.subr.mxu0 0.0
        %2087 = vmatpush1.msra.mxu0 0.0
        %2088 = vmatprep.subr.mxu0 0.0
        %2089 = vmatpush1.msra.mxu0 0.0
        %2090 = vmatprep.subr.mxu0 0.0
        %2091 = vmatpush1.msra.mxu0 0.0
        %2092 = vmatprep.subr.mxu0 0.0
        %2093 = vmatpush1.msra.mxu0 0.0
        %2094 = vmatprep.subr.mxu0 0.0
        %2095 = vmatpush1.msra.mxu0 0.0
        %2096 = vmatprep.subr.mxu0 0.0
        %2097 = vmatpush1.msra.mxu0 0.0
        %2098 = vmatprep.subr.mxu0 0.0
        %2099 = vmatpush1.msra.mxu0 0.0
        %2100 = vmatprep.subr.mxu0 0.0
        %2101 = vmatpush1.msra.mxu0 0.0
        %2102 = vmatprep.subr.mxu0 0.0
        %2103 = vmatpush1.msra.mxu0 0.0
        %2104 = vmatprep.subr.mxu0 0.0
        %2105 = vmatpush1.msra.mxu0 0.0
        %2106 = vmatprep.mubr.f32.mxu0 0.0
        %2107 = vmatmul.mubr.f32.gmra.mrb[0].mxu0 %v2040
        %v2108 = vpop.f32.mrb[0].mxu0
        %v2109 = vadd.f32 %v2038, %v2108
        %v2110 = vpop.f32.mrb[0].mxu0
        %2111 = vdwg.mxu0
        %v2112 = vld [vmem:[#allocation2 + $0x1c0] sm:$0xff]
        %v2113 = vld [vmem:[#allocation2 + $0x1c8] sm:$0xff]
        %v2114 = vld [vmem:[#allocation2 + $0x1d0] sm:$0xff]
        %v2115 = vld [vmem:[#allocation2 + $0x1d8] sm:$0xff]
        %v2116 = vld [vmem:[#allocation2 + $0x276] sm:$0x1]
        %v2117 = vlaneseq
        %v2118 = vshrl.u32 %v2117, 7
        %v2119 = vsub.s32 0, %v2118
        %v2120 = vrot.slane %v2116, %v2119
        %2121 = vmatprep.subr.mxu0 0.0
        %2122 = vmatpush1.msra.mxu0 %v2112
        %2123 = vmatprep.subr.mxu0 0.0
        %2124 = vmatpush1.msra.mxu0 %v2113
        %2125 = vmatprep.subr.mxu0 0.0
        %2126 = vmatpush1.msra.mxu0 %v2114
        %2127 = vmatprep.subr.mxu0 0.0
        %2128 = vmatpush1.msra.mxu0 %v2115
        %2129 = vmatprep.subr.mxu0 0.0
        %2130 = vmatpush1.msra.mxu0 0.0
        %2131 = vmatprep.subr.mxu0 0.0
        %2132 = vmatpush1.msra.mxu0 0.0
        %2133 = vmatprep.subr.mxu0 0.0
        %2134 = vmatpush1.msra.mxu0 0.0
        %2135 = vmatprep.subr.mxu0 0.0
        %2136 = vmatpush1.msra.mxu0 0.0
        %2137 = vmatprep.subr.mxu0 0.0
        %2138 = vmatpush1.msra.mxu0 0.0
        %2139 = vmatprep.subr.mxu0 0.0
        %2140 = vmatpush1.msra.mxu0 0.0
        %2141 = vmatprep.subr.mxu0 0.0
        %2142 = vmatpush1.msra.mxu0 0.0
        %2143 = vmatprep.subr.mxu0 0.0
        %2144 = vmatpush1.msra.mxu0 0.0
        %2145 = vmatprep.subr.mxu0 0.0
        %2146 = vmatpush1.msra.mxu0 0.0
        %2147 = vmatprep.subr.mxu0 0.0
        %2148 = vmatpush1.msra.mxu0 0.0
        %2149 = vmatprep.subr.mxu0 0.0
        %2150 = vmatpush1.msra.mxu0 0.0
        %2151 = vmatprep.subr.mxu0 0.0
        %2152 = vmatpush1.msra.mxu0 0.0
        %2153 = vmatprep.subr.mxu0 0.0
        %2154 = vmatpush1.msra.mxu0 0.0
        %2155 = vmatprep.subr.mxu0 0.0
        %2156 = vmatpush1.msra.mxu0 0.0
        %2157 = vmatprep.subr.mxu0 0.0
        %2158 = vmatpush1.msra.mxu0 0.0
        %2159 = vmatprep.subr.mxu0 0.0
        %2160 = vmatpush1.msra.mxu0 0.0
        %2161 = vmatprep.subr.mxu0 0.0
        %2162 = vmatpush1.msra.mxu0 0.0
        %2163 = vmatprep.subr.mxu0 0.0
        %2164 = vmatpush1.msra.mxu0 0.0
        %2165 = vmatprep.subr.mxu0 0.0
        %2166 = vmatpush1.msra.mxu0 0.0
        %2167 = vmatprep.subr.mxu0 0.0
        %2168 = vmatpush1.msra.mxu0 0.0
        %2169 = vmatprep.subr.mxu0 0.0
        %2170 = vmatpush1.msra.mxu0 0.0
        %2171 = vmatprep.subr.mxu0 0.0
        %2172 = vmatpush1.msra.mxu0 0.0
        %2173 = vmatprep.subr.mxu0 0.0
        %2174 = vmatpush1.msra.mxu0 0.0
        %2175 = vmatprep.subr.mxu0 0.0
        %2176 = vmatpush1.msra.mxu0 0.0
        %2177 = vmatprep.subr.mxu0 0.0
        %2178 = vmatpush1.msra.mxu0 0.0
        %2179 = vmatprep.subr.mxu0 0.0
        %2180 = vmatpush1.msra.mxu0 0.0
        %2181 = vmatprep.subr.mxu0 0.0
        %2182 = vmatpush1.msra.mxu0 0.0
        %2183 = vmatprep.subr.mxu0 0.0
        %2184 = vmatpush1.msra.mxu0 0.0
        %2185 = vmatprep.mubr.f32.mxu0 0.0
        %2186 = vmatmul.mubr.f32.gmra.mrb[0].mxu0 %v2040
        %v2187 = vpop.f32.mrb[0].mxu0
        %v2188 = vadd.f32 %v2120, %v2187
        %v2189 = vpop.f32.mrb[0].mxu0
        %2190 = vdwg.mxu0
        %v2191 = vmul.f32 %v2029, %v243
        %v2193 = vsel %vm355, %v2191, 0
        %v2196 = vsel %vm355, %v2109, 0
        %2198 = vmatprep.subr.mxu0 0.0
        %2199 = vmatpush1.xpose.msra.mxu0 %v2196
        %2200 = vmatprep.subr.mxu0 0.0
        %2201 = vmatpush1.xpose.msra.mxu0 0.0
        %2202 = vmatprep.subr.mxu0 0.0
        %2203 = vmatpush1.xpose.msra.mxu0 0.0
        %2204 = vmatprep.subr.mxu0 0.0
        %2205 = vmatpush1.xpose.msra.mxu0 0.0
        %2206 = vmatprep.subr.mxu0 0.0
        %2207 = vmatpush1.xpose.msra.mxu0 0.0
        %2208 = vmatprep.subr.mxu0 0.0
        %2209 = vmatpush1.xpose.msra.mxu0 0.0
        %2210 = vmatprep.subr.mxu0 0.0
        %2211 = vmatpush1.xpose.msra.mxu0 0.0
        %2212 = vmatprep.subr.mxu0 0.0
        %2213 = vmatpush1.xpose.msra.mxu0 0.0
        %2214 = vmatprep.subr.mxu0 0.0
        %2215 = vmatpush1.xpose.msra.mxu0 0.0
        %2216 = vmatprep.subr.mxu0 0.0
        %2217 = vmatpush1.xpose.msra.mxu0 0.0
        %2218 = vmatprep.subr.mxu0 0.0
        %2219 = vmatpush1.xpose.msra.mxu0 0.0
        %2220 = vmatprep.subr.mxu0 0.0
        %2221 = vmatpush1.xpose.msra.mxu0 0.0
        %2222 = vmatprep.subr.mxu0 0.0
        %2223 = vmatpush1.xpose.msra.mxu0 0.0
        %2224 = vmatprep.subr.mxu0 0.0
        %2225 = vmatpush1.xpose.msra.mxu0 0.0
        %2226 = vmatprep.subr.mxu0 0.0
        %2227 = vmatpush1.xpose.msra.mxu0 0.0
        %2228 = vmatprep.subr.mxu0 0.0
        %2229 = vmatpush1.xpose.msra.mxu0 0.0
        %2230 = vmatprep.subr.mxu0 0.0
        %2231 = vmatpush1.xpose.msra.mxu0 0.0
        %2232 = vmatprep.subr.mxu0 0.0
        %2233 = vmatpush1.xpose.msra.mxu0 0.0
        %2234 = vmatprep.subr.mxu0 0.0
        %2235 = vmatpush1.xpose.msra.mxu0 0.0
        %2236 = vmatprep.subr.mxu0 0.0
        %2237 = vmatpush1.xpose.msra.mxu0 0.0
        %2238 = vmatprep.subr.mxu0 0.0
        %2239 = vmatpush1.xpose.msra.mxu0 0.0
        %2240 = vmatprep.subr.mxu0 0.0
        %2241 = vmatpush1.xpose.msra.mxu0 0.0
        %2242 = vmatprep.subr.mxu0 0.0
        %2243 = vmatpush1.xpose.msra.mxu0 0.0
        %2244 = vmatprep.subr.mxu0 0.0
        %2245 = vmatpush1.xpose.msra.mxu0 0.0
        %2246 = vmatprep.subr.mxu0 0.0
        %2247 = vmatpush1.xpose.msra.mxu0 0.0
        %2248 = vmatprep.subr.mxu0 0.0
        %2249 = vmatpush1.xpose.msra.mxu0 0.0
        %2250 = vmatprep.subr.mxu0 0.0
        %2251 = vmatpush1.xpose.msra.mxu0 0.0
        %2252 = vmatprep.subr.mxu0 0.0
        %2253 = vmatpush1.xpose.msra.mxu0 0.0
        %2254 = vmatprep.subr.mxu0 0.0
        %2255 = vmatpush1.xpose.msra.mxu0 0.0
        %2256 = vmatprep.subr.mxu0 0.0
        %2257 = vmatpush1.xpose.msra.mxu0 0.0
        %2258 = vmatprep.subr.mxu0 0.0
        %2259 = vmatpush1.xpose.msra.mxu0 0.0
        %2260 = vmatprep.subr.mxu0 0.0
        %2261 = vmatpush1.xpose.msra.mxu0 0.0
        %2262 = vmatprep.mubr.f32.mxu0 0.0
        %2263 = vmatmul.mubr.f32.gmra.mrb[0].mxu0 %v2193
        %v2264 = vpop.f32.mrb[0].mxu0
        %v2265 = vadd.f32 0.0, %v2264
        %v2266 = vpop.f32.mrb[0].mxu0
        %2267 = vdwg.mxu0
        %v2268 = vsel %vm704, %v2265, -inf
        %2269 = vmax.xlane.f32.xlu0 %v2268
        %v2270 = vpop.xlane.xlu0 %2269
        %v2271 = vsub.f32 %v2265, %v2270
        %v2272 = vmul.f32 %v2271, 1.442695
        %v2273 = vpow.pop %v2272
        %v2274 = vsel %vm704, %v2273, 0.0
        %2275 = vadd.xlane.f32.xlu0 %v2274
        %v2276 = vpop.xlane.xlu0 %2275
        %v2277 = vrcp.pop %v2276
        %v2278 = vmul.f32 %v2273, %v2277
        %v2279 = vmul.f32 %v2188, %v243
        %v2280 = vmul.f32 %v2029, %v248
        %v2282 = vsel %vm355, %v2280, 0
        %2284 = vmatprep.subr.mxu0 0.0
        %2285 = vmatpush1.xpose.msra.mxu0 %v2196
        %2286 = vmatprep.subr.mxu0 0.0
        %2287 = vmatpush1.xpose.msra.mxu0 0.0
        %2288 = vmatprep.subr.mxu0 0.0
        %2289 = vmatpush1.xpose.msra.mxu0 0.0
        %2290 = vmatprep.subr.mxu0 0.0
        %2291 = vmatpush1.xpose.msra.mxu0 0.0
        %2292 = vmatprep.subr.mxu0 0.0
        %2293 = vmatpush1.xpose.msra.mxu0 0.0
        %2294 = vmatprep.subr.mxu0 0.0
        %2295 = vmatpush1.xpose.msra.mxu0 0.0
        %2296 = vmatprep.subr.mxu0 0.0
        %2297 = vmatpush1.xpose.msra.mxu0 0.0
        %2298 = vmatprep.subr.mxu0 0.0
        %2299 = vmatpush1.xpose.msra.mxu0 0.0
        %2300 = vmatprep.subr.mxu0 0.0
        %2301 = vmatpush1.xpose.msra.mxu0 0.0
        %2302 = vmatprep.subr.mxu0 0.0
        %2303 = vmatpush1.xpose.msra.mxu0 0.0
        %2304 = vmatprep.subr.mxu0 0.0
        %2305 = vmatpush1.xpose.msra.mxu0 0.0
        %2306 = vmatprep.subr.mxu0 0.0
        %2307 = vmatpush1.xpose.msra.mxu0 0.0
        %2308 = vmatprep.subr.mxu0 0.0
        %2309 = vmatpush1.xpose.msra.mxu0 0.0
        %2310 = vmatprep.subr.mxu0 0.0
        %2311 = vmatpush1.xpose.msra.mxu0 0.0
        %2312 = vmatprep.subr.mxu0 0.0
        %2313 = vmatpush1.xpose.msra.mxu0 0.0
        %2314 = vmatprep.subr.mxu0 0.0
        %2315 = vmatpush1.xpose.msra.mxu0 0.0
        %2316 = vmatprep.subr.mxu0 0.0
        %2317 = vmatpush1.xpose.msra.mxu0 0.0
        %2318 = vmatprep.subr.mxu0 0.0
        %2319 = vmatpush1.xpose.msra.mxu0 0.0
        %2320 = vmatprep.subr.mxu0 0.0
        %2321 = vmatpush1.xpose.msra.mxu0 0.0
        %2322 = vmatprep.subr.mxu0 0.0
        %2323 = vmatpush1.xpose.msra.mxu0 0.0
        %2324 = vmatprep.subr.mxu0 0.0
        %2325 = vmatpush1.xpose.msra.mxu0 0.0
        %2326 = vmatprep.subr.mxu0 0.0
        %2327 = vmatpush1.xpose.msra.mxu0 0.0
        %2328 = vmatprep.subr.mxu0 0.0
        %2329 = vmatpush1.xpose.msra.mxu0 0.0
        %2330 = vmatprep.subr.mxu0 0.0
        %2331 = vmatpush1.xpose.msra.mxu0 0.0
        %2332 = vmatprep.subr.mxu0 0.0
        %2333 = vmatpush1.xpose.msra.mxu0 0.0
        %2334 = vmatprep.subr.mxu0 0.0
        %2335 = vmatpush1.xpose.msra.mxu0 0.0
        %2336 = vmatprep.subr.mxu0 0.0
        %2337 = vmatpush1.xpose.msra.mxu0 0.0
        %2338 = vmatprep.subr.mxu0 0.0
        %2339 = vmatpush1.xpose.msra.mxu0 0.0
        %2340 = vmatprep.subr.mxu0 0.0
        %2341 = vmatpush1.xpose.msra.mxu0 0.0
        %2342 = vmatprep.subr.mxu0 0.0
        %2343 = vmatpush1.xpose.msra.mxu0 0.0
        %2344 = vmatprep.subr.mxu0 0.0
        %2345 = vmatpush1.xpose.msra.mxu0 0.0
        %2346 = vmatprep.subr.mxu0 0.0
        %2347 = vmatpush1.xpose.msra.mxu0 0.0
        %2348 = vmatprep.mubr.f32.mxu0 0.0
        %2349 = vmatmul.mubr.f32.gmra.mrb[0].mxu0 %v2282
        %v2350 = vpop.f32.mrb[0].mxu0
        %v2351 = vadd.f32 0.0, %v2350
        %v2352 = vpop.f32.mrb[0].mxu0
        %2353 = vdwg.mxu0
        %v2354 = vsel %vm704, %v2351, -inf
        %2355 = vmax.xlane.f32.xlu0 %v2354
        %v2356 = vpop.xlane.xlu0 %2355
        %v2357 = vsub.f32 %v2351, %v2356
        %v2358 = vmul.f32 %v2357, 1.442695
        %v2359 = vpow.pop %v2358
        %v2360 = vsel %vm704, %v2359, 0.0
        %2361 = vadd.xlane.f32.xlu0 %v2360
        %v2362 = vpop.xlane.xlu0 %2361
        %v2363 = vrcp.pop %v2362
        %v2364 = vmul.f32 %v2359, %v2363
        %v2365 = vmul.f32 %v2188, %v248
        %v2367 = vsel %vm704, %v2364, 0
        %2369 = vmatprep.subr.mxu0 0.0
        %2370 = vmatpush1.msra.mxu0 %v2365
        %2371 = vmatprep.subr.mxu0 0.0
        %2372 = vmatpush1.msra.mxu0 0.0
        %2373 = vmatprep.subr.mxu0 0.0
        %2374 = vmatpush1.msra.mxu0 0.0
        %2375 = vmatprep.subr.mxu0 0.0
        %2376 = vmatpush1.msra.mxu0 0.0
        %2377 = vmatprep.subr.mxu0 0.0
        %2378 = vmatpush1.msra.mxu0 0.0
        %2379 = vmatprep.subr.mxu0 0.0
        %2380 = vmatpush1.msra.mxu0 0.0
        %2381 = vmatprep.subr.mxu0 0.0
        %2382 = vmatpush1.msra.mxu0 0.0
        %2383 = vmatprep.subr.mxu0 0.0
        %2384 = vmatpush1.msra.mxu0 0.0
        %2385 = vmatprep.subr.mxu0 0.0
        %2386 = vmatpush1.msra.mxu0 0.0
        %2387 = vmatprep.subr.mxu0 0.0
        %2388 = vmatpush1.msra.mxu0 0.0
        %2389 = vmatprep.subr.mxu0 0.0
        %2390 = vmatpush1.msra.mxu0 0.0
        %2391 = vmatprep.subr.mxu0 0.0
        %2392 = vmatpush1.msra.mxu0 0.0
        %2393 = vmatprep.subr.mxu0 0.0
        %2394 = vmatpush1.msra.mxu0 0.0
        %2395 = vmatprep.subr.mxu0 0.0
        %2396 = vmatpush1.msra.mxu0 0.0
        %2397 = vmatprep.subr.mxu0 0.0
        %2398 = vmatpush1.msra.mxu0 0.0
        %2399 = vmatprep.subr.mxu0 0.0
        %2400 = vmatpush1.msra.mxu0 0.0
        %2401 = vmatprep.subr.mxu0 0.0
        %2402 = vmatpush1.msra.mxu0 0.0
        %2403 = vmatprep.subr.mxu0 0.0
        %2404 = vmatpush1.msra.mxu0 0.0
        %2405 = vmatprep.subr.mxu0 0.0
        %2406 = vmatpush1.msra.mxu0 0.0
        %2407 = vmatprep.subr.mxu0 0.0
        %2408 = vmatpush1.msra.mxu0 0.0
        %2409 = vmatprep.subr.mxu0 0.0
        %2410 = vmatpush1.msra.mxu0 0.0
        %2411 = vmatprep.subr.mxu0 0.0
        %2412 = vmatpush1.msra.mxu0 0.0
        %2413 = vmatprep.subr.mxu0 0.0
        %2414 = vmatpush1.msra.mxu0 0.0
        %2415 = vmatprep.subr.mxu0 0.0
        %2416 = vmatpush1.msra.mxu0 0.0
        %2417 = vmatprep.subr.mxu0 0.0
        %2418 = vmatpush1.msra.mxu0 0.0
        %2419 = vmatprep.subr.mxu0 0.0
        %2420 = vmatpush1.msra.mxu0 0.0
        %2421 = vmatprep.subr.mxu0 0.0
        %2422 = vmatpush1.msra.mxu0 0.0
        %2423 = vmatprep.subr.mxu0 0.0
        %2424 = vmatpush1.msra.mxu0 0.0
        %2425 = vmatprep.subr.mxu0 0.0
        %2426 = vmatpush1.msra.mxu0 0.0
        %2427 = vmatprep.subr.mxu0 0.0
        %2428 = vmatpush1.msra.mxu0 0.0
        %2429 = vmatprep.subr.mxu0 0.0
        %2430 = vmatpush1.msra.mxu0 0.0
        %2431 = vmatprep.subr.mxu0 0.0
        %2432 = vmatpush1.msra.mxu0 0.0
        %2433 = vmatprep.mubr.f32.mxu0 0.0
        %2434 = vmatmul.mubr.f32.gmra.mrb[0].mxu0 %v2367
        %v2435 = vpop.f32.mrb[0].mxu0
        %v2436 = vadd.f32 0.0, %v2435
        %v2437 = vpop.f32.mrb[0].mxu0
        %2438 = vdwg.mxu0
        %v2440 = vsel %vm704, %v2278, 0
        %2442 = vmatprep.subr.mxu0 0.0
        %2443 = vmatpush1.msra.mxu0 %v2279
        %2444 = vmatprep.subr.mxu0 0.0
        %2445 = vmatpush1.msra.mxu0 0.0
        %2446 = vmatprep.subr.mxu0 0.0
        %2447 = vmatpush1.msra.mxu0 0.0
        %2448 = vmatprep.subr.mxu0 0.0
        %2449 = vmatpush1.msra.mxu0 0.0
        %2450 = vmatprep.subr.mxu0 0.0
        %2451 = vmatpush1.msra.mxu0 0.0
        %2452 = vmatprep.subr.mxu0 0.0
        %2453 = vmatpush1.msra.mxu0 0.0
        %2454 = vmatprep.subr.mxu0 0.0
        %2455 = vmatpush1.msra.mxu0 0.0
        %2456 = vmatprep.subr.mxu0 0.0
        %2457 = vmatpush1.msra.mxu0 0.0
        %2458 = vmatprep.subr.mxu0 0.0
        %2459 = vmatpush1.msra.mxu0 0.0
        %2460 = vmatprep.subr.mxu0 0.0
        %2461 = vmatpush1.msra.mxu0 0.0
        %2462 = vmatprep.subr.mxu0 0.0
        %2463 = vmatpush1.msra.mxu0 0.0
        %2464 = vmatprep.subr.mxu0 0.0
        %2465 = vmatpush1.msra.mxu0 0.0
        %2466 = vmatprep.subr.mxu0 0.0
        %2467 = vmatpush1.msra.mxu0 0.0
        %2468 = vmatprep.subr.mxu0 0.0
        %2469 = vmatpush1.msra.mxu0 0.0
        %2470 = vmatprep.subr.mxu0 0.0
        %2471 = vmatpush1.msra.mxu0 0.0
        %2472 = vmatprep.subr.mxu0 0.0
        %2473 = vmatpush1.msra.mxu0 0.0
        %2474 = vmatprep.subr.mxu0 0.0
        %2475 = vmatpush1.msra.mxu0 0.0
        %2476 = vmatprep.subr.mxu0 0.0
        %2477 = vmatpush1.msra.mxu0 0.0
        %2478 = vmatprep.subr.mxu0 0.0
        %2479 = vmatpush1.msra.mxu0 0.0
        %2480 = vmatprep.subr.mxu0 0.0
        %2481 = vmatpush1.msra.mxu0 0.0
        %2482 = vmatprep.subr.mxu0 0.0
        %2483 = vmatpush1.msra.mxu0 0.0
        %2484 = vmatprep.subr.mxu0 0.0
        %2485 = vmatpush1.msra.mxu0 0.0
        %2486 = vmatprep.subr.mxu0 0.0
        %2487 = vmatpush1.msra.mxu0 0.0
        %2488 = vmatprep.subr.mxu0 0.0
        %2489 = vmatpush1.msra.mxu0 0.0
        %2490 = vmatprep.subr.mxu0 0.0
        %2491 = vmatpush1.msra.mxu0 0.0
        %2492 = vmatprep.subr.mxu0 0.0
        %2493 = vmatpush1.msra.mxu0 0.0
        %2494 = vmatprep.subr.mxu0 0.0
        %2495 = vmatpush1.msra.mxu0 0.0
        %2496 = vmatprep.subr.mxu0 0.0
        %2497 = vmatpush1.msra.mxu0 0.0
        %2498 = vmatprep.subr.mxu0 0.0
        %2499 = vmatpush1.msra.mxu0 0.0
        %2500 = vmatprep.subr.mxu0 0.0
        %2501 = vmatpush1.msra.mxu0 0.0
        %2502 = vmatprep.subr.mxu0 0.0
        %2503 = vmatpush1.msra.mxu0 0.0
        %2504 = vmatprep.subr.mxu0 0.0
        %2505 = vmatpush1.msra.mxu0 0.0
        %2506 = vmatprep.mubr.f32.mxu0 0.0
        %2507 = vmatmul.mubr.f32.gmra.mrb[0].mxu0 %v2440
        %v2508 = vpop.f32.mrb[0].mxu0
        %v2509 = vadd.f32 %v2436, %v2508
        %v2510 = vpop.f32.mrb[0].mxu0
        %2511 = vdwg.mxu0
        %v2512 = vld [vmem:[#allocation2 + $0x1e0] sm:$0xff]
        %v2513 = vld [vmem:[#allocation2 + $0x1e8] sm:$0xff]
        %v2514 = vld [vmem:[#allocation2 + $0x1f0] sm:$0xff]
        %v2515 = vld [vmem:[#allocation2 + $0x1f8] sm:$0xff]
        %v2516 = vld [vmem:[#allocation2 + $0x277] sm:$0x1]
        %v2517 = vlaneseq
        %v2518 = vshrl.u32 %v2517, 7
        %v2519 = vsub.s32 0, %v2518
        %v2520 = vrot.slane %v2516, %v2519
        %v2522 = vsel %vm355, %v2509, 0
        %2524 = vmatprep.subr.mxu0 0.0
        %2525 = vmatpush1.msra.mxu0 %v2512
        %2526 = vmatprep.subr.mxu0 0.0
        %2527 = vmatpush1.msra.mxu0 %v2513
        %2528 = vmatprep.subr.mxu0 0.0
        %2529 = vmatpush1.msra.mxu0 %v2514
        %2530 = vmatprep.subr.mxu0 0.0
        %2531 = vmatpush1.msra.mxu0 %v2515
        %2532 = vmatprep.subr.mxu0 0.0
        %2533 = vmatpush1.msra.mxu0 0.0
        %2534 = vmatprep.subr.mxu0 0.0
        %2535 = vmatpush1.msra.mxu0 0.0
        %2536 = vmatprep.subr.mxu0 0.0
        %2537 = vmatpush1.msra.mxu0 0.0
        %2538 = vmatprep.subr.mxu0 0.0
        %2539 = vmatpush1.msra.mxu0 0.0
        %2540 = vmatprep.subr.mxu0 0.0
        %2541 = vmatpush1.msra.mxu0 0.0
        %2542 = vmatprep.subr.mxu0 0.0
        %2543 = vmatpush1.msra.mxu0 0.0
        %2544 = vmatprep.subr.mxu0 0.0
        %2545 = vmatpush1.msra.mxu0 0.0
        %2546 = vmatprep.subr.mxu0 0.0
        %2547 = vmatpush1.msra.mxu0 0.0
        %2548 = vmatprep.subr.mxu0 0.0
        %2549 = vmatpush1.msra.mxu0 0.0
        %2550 = vmatprep.subr.mxu0 0.0
        %2551 = vmatpush1.msra.mxu0 0.0
        %2552 = vmatprep.subr.mxu0 0.0
        %2553 = vmatpush1.msra.mxu0 0.0
        %2554 = vmatprep.subr.mxu0 0.0
        %2555 = vmatpush1.msra.mxu0 0.0
        %2556 = vmatprep.subr.mxu0 0.0
        %2557 = vmatpush1.msra.mxu0 0.0
        %2558 = vmatprep.subr.mxu0 0.0
        %2559 = vmatpush1.msra.mxu0 0.0
        %2560 = vmatprep.subr.mxu0 0.0
        %2561 = vmatpush1.msra.mxu0 0.0
        %2562 = vmatprep.subr.mxu0 0.0
        %2563 = vmatpush1.msra.mxu0 0.0
        %2564 = vmatprep.subr.mxu0 0.0
        %2565 = vmatpush1.msra.mxu0 0.0
        %2566 = vmatprep.subr.mxu0 0.0
        %2567 = vmatpush1.msra.mxu0 0.0
        %2568 = vmatprep.subr.mxu0 0.0
        %2569 = vmatpush1.msra.mxu0 0.0
        %2570 = vmatprep.subr.mxu0 0.0
        %2571 = vmatpush1.msra.mxu0 0.0
        %2572 = vmatprep.subr.mxu0 0.0
        %2573 = vmatpush1.msra.mxu0 0.0
        %2574 = vmatprep.subr.mxu0 0.0
        %2575 = vmatpush1.msra.mxu0 0.0
        %2576 = vmatprep.subr.mxu0 0.0
        %2577 = vmatpush1.msra.mxu0 0.0
        %2578 = vmatprep.subr.mxu0 0.0
        %2579 = vmatpush1.msra.mxu0 0.0
        %2580 = vmatprep.subr.mxu0 0.0
        %2581 = vmatpush1.msra.mxu0 0.0
        %2582 = vmatprep.subr.mxu0 0.0
        %2583 = vmatpush1.msra.mxu0 0.0
        %2584 = vmatprep.subr.mxu0 0.0
        %2585 = vmatpush1.msra.mxu0 0.0
        %2586 = vmatprep.subr.mxu0 0.0
        %2587 = vmatpush1.msra.mxu0 0.0
        %2588 = vmatprep.mubr.f32.mxu0 0.0
        %2589 = vmatmul.mubr.f32.gmra.mrb[0].mxu0 %v2522
        %v2590 = vpop.f32.mrb[0].mxu0
        %v2591 = vadd.f32 %v2520, %v2590
        %v2592 = vpop.f32.mrb[0].mxu0
        %2593 = vdwg.mxu0
        %v2594 = vadd.f32 %v1921, %v2591
        %v2595 = vsel %vm355, %v2594, 0.0
        %2596 = vadd.xlane.f32.xlu0 %v2595
        %v2597 = vpop.xlane.xlu0 %2596
        %v2598 = vmul.f32 %v2597, %v359
        %v2599 = vsub.f32 %v2594, %v2598
        %v2600 = vmul.f32 %v2599, %v2599
        %v2601 = vsel %vm355, %v2600, 0.0
        %2602 = vadd.xlane.f32.xlu0 %v2601
        %v2603 = vpop.xlane.xlu0 %2602
        %v2604 = vmul.f32 %v2603, %v359
        %v2605 = vadd.f32 %v2604, 1e-05
        %v2606 = vrsqrt.pop %v2605
        %v2607 = vmul.f32 %v2599, %v2606
        %v2608 = vld [vmem:[#allocation2 + $0x278] sm:$0x1]
        %v2609 = vlaneseq
        %v2610 = vshrl.u32 %v2609, 7
        %v2611 = vsub.s32 0, %v2610
        %v2612 = vrot.slane %v2608, %v2611
        %v2613 = vmul.f32 %v2607, %v2612
        %v2614 = vld [vmem:[#allocation2 + $0x279] sm:$0x1]
        %v2615 = vlaneseq
        %v2616 = vshrl.u32 %v2615, 7
        %v2617 = vsub.s32 0, %v2616
        %v2618 = vrot.slane %v2614, %v2617
        %v2619 = vadd.f32 %v2613, %v2618
        %v2620 = vld [vmem:[#allocation2 + $0x200] sm:$0xff]
        %v2621 = vld [vmem:[#allocation2 + $0x208] sm:$0xff]
        %v2622 = vld [vmem:[#allocation2 + $0x210] sm:$0xff]
        %v2623 = vld [vmem:[#allocation2 + $0x218] sm:$0xff]
        %v2624 = vld [vmem:[#allocation2 + $0x27a] sm:$0x1]
        %v2625 = vlaneseq
        %v2626 = vshrl.u32 %v2625, 7
        %v2627 = vsub.s32 0, %v2626
        %v2628 = vrot.slane %v2624, %v2627
        %v2630 = vsel %vm355, %v2619, 0
        %2632 = vmatprep.subr.mxu0 0.0
        %2633 = vmatpush1.msra.mxu0 %v2620
        %2634 = vmatprep.subr.mxu0 0.0
        %2635 = vmatpush1.msra.mxu0 %v2621
        %2636 = vmatprep.subr.mxu0 0.0
        %2637 = vmatpush1.msra.mxu0 %v2622
        %2638 = vmatprep.subr.mxu0 0.0
        %2639 = vmatpush1.msra.mxu0 %v2623
        %2640 = vmatprep.subr.mxu0 0.0
        %2641 = vmatpush1.msra.mxu0 0.0
        %2642 = vmatprep.subr.mxu0 0.0
        %2643 = vmatpush1.msra.mxu0 0.0
        %2644 = vmatprep.subr.mxu0 0.0
        %2645 = vmatpush1.msra.mxu0 0.0
        %2646 = vmatprep.subr.mxu0 0.0
        %2647 = vmatpush1.msra.mxu0 0.0
        %2648 = vmatprep.subr.mxu0 0.0
        %2649 = vmatpush1.msra.mxu0 0.0
        %2650 = vmatprep.subr.mxu0 0.0
        %2651 = vmatpush1.msra.mxu0 0.0
        %2652 = vmatprep.subr.mxu0 0.0
        %2653 = vmatpush1.msra.mxu0 0.0
        %2654 = vmatprep.subr.mxu0 0.0
        %2655 = vmatpush1.msra.mxu0 0.0
        %2656 = vmatprep.subr.mxu0 0.0
        %2657 = vmatpush1.msra.mxu0 0.0
        %2658 = vmatprep.subr.mxu0 0.0
        %2659 = vmatpush1.msra.mxu0 0.0
        %2660 = vmatprep.subr.mxu0 0.0
        %2661 = vmatpush1.msra.mxu0 0.0
        %2662 = vmatprep.subr.mxu0 0.0
        %2663 = vmatpush1.msra.mxu0 0.0
        %2664 = vmatprep.subr.mxu0 0.0
        %2665 = vmatpush1.msra.mxu0 0.0
        %2666 = vmatprep.subr.mxu0 0.0
        %2667 = vmatpush1.msra.mxu0 0.0
        %2668 = vmatprep.subr.mxu0 0.0
        %2669 = vmatpush1.msra.mxu0 0.0
        %2670 = vmatprep.subr.mxu0 0.0
        %2671 = vmatpush1.msra.mxu0 0.0
        %2672 = vmatprep.subr.mxu0 0.0
        %2673 = vmatpush1.msra.mxu0 0.0
        %2674 = vmatprep.subr.mxu0 0.0
        %2675 = vmatpush1.msra.mxu0 0.0
        %2676 = vmatprep.subr.mxu0 0.0
        %2677 = vmatpush1.msra.mxu0 0.0
        %2678 = vmatprep.subr.mxu0 0.0
        %2679 = vmatpush1.msra.mxu0 0.0
        %2680 = vmatprep.subr.mxu0 0.0
        %2681 = vmatpush1.msra.mxu0 0.0
        %2682 = vmatprep.subr.mxu0 0.0
        %2683 = vmatpush1.msra.mxu0 0.0
        %2684 = vmatprep.subr.mxu0 0.0
        %2685 = vmatpush1.msra.mxu0 0.0
        %2686 = vmatprep.subr.mxu0 0.0
        %2687 = vmatpush1.msra.mxu0 0.0
        %2688 = vmatprep.subr.mxu0 0.0
        %2689 = vmatpush1.msra.mxu0 0.0
        %2690 = vmatprep.subr.mxu0 0.0
        %2691 = vmatpush1.msra.mxu0 0.0
        %2692 = vmatprep.subr.mxu0 0.0
        %2693 = vmatpush1.msra.mxu0 0.0
        %2694 = vmatprep.subr.mxu0 0.0
        %2695 = vmatpush1.msra.mxu0 0.0
        %2696 = vmatprep.mubr.f32.mxu0 0.0
        %2697 = vmatmul.mubr.f32.gmra.mrb[0].mxu0 %v2630
        %v2698 = vpop.f32.mrb[0].mxu0
        %v2699 = vadd.f32 %v2628, %v2698
        %v2700 = vpop.f32.mrb[0].mxu0
        %2701 = vdwg.mxu0
        %v2702 = vmax.f32 %v2699, 0.0
        %v2703 = vld [vmem:[#allocation2 + $0x220] sm:$0xff]
        %v2704 = vld [vmem:[#allocation2 + $0x228] sm:$0xff]
        %v2705 = vld [vmem:[#allocation2 + $0x230] sm:$0xff]
        %v2706 = vld [vmem:[#allocation2 + $0x238] sm:$0xff]
        %v2707 = vld [vmem:[#allocation2 + $0x27b] sm:$0x1]
        %v2708 = vlaneseq
        %v2709 = vshrl.u32 %v2708, 7
        %v2710 = vsub.s32 0, %v2709
        %v2711 = vrot.slane %v2707, %v2710
        %v2713 = vsel %vm355, %v2702, 0
        %2715 = vmatprep.subr.mxu0 0.0
        %2716 = vmatpush1.msra.mxu0 %v2703
        %2717 = vmatprep.subr.mxu0 0.0
        %2718 = vmatpush1.msra.mxu0 %v2704
        %2719 = vmatprep.subr.mxu0 0.0
        %2720 = vmatpush1.msra.mxu0 %v2705
        %2721 = vmatprep.subr.mxu0 0.0
        %2722 = vmatpush1.msra.mxu0 %v2706
        %2723 = vmatprep.subr.mxu0 0.0
        %2724 = vmatpush1.msra.mxu0 0.0
        %2725 = vmatprep.subr.mxu0 0.0
        %2726 = vmatpush1.msra.mxu0 0.0
        %2727 = vmatprep.subr.mxu0 0.0
        %2728 = vmatpush1.msra.mxu0 0.0
        %2729 = vmatprep.subr.mxu0 0.0
        %2730 = vmatpush1.msra.mxu0 0.0
        %2731 = vmatprep.subr.mxu0 0.0
        %2732 = vmatpush1.msra.mxu0 0.0
        %2733 = vmatprep.subr.mxu0 0.0
        %2734 = vmatpush1.msra.mxu0 0.0
        %2735 = vmatprep.subr.mxu0 0.0
        %2736 = vmatpush1.msra.mxu0 0.0
        %2737 = vmatprep.subr.mxu0 0.0
        %2738 = vmatpush1.msra.mxu0 0.0
        %2739 = vmatprep.subr.mxu0 0.0
        %2740 = vmatpush1.msra.mxu0 0.0
        %2741 = vmatprep.subr.mxu0 0.0
        %2742 = vmatpush1.msra.mxu0 0.0
        %2743 = vmatprep.subr.mxu0 0.0
        %2744 = vmatpush1.msra.mxu0 0.0
        %2745 = vmatprep.subr.mxu0 0.0
        %2746 = vmatpush1.msra.mxu0 0.0
        %2747 = vmatprep.subr.mxu0 0.0
        %2748 = vmatpush1.msra.mxu0 0.0
        %2749 = vmatprep.subr.mxu0 0.0
        %2750 = vmatpush1.msra.mxu0 0.0
        %2751 = vmatprep.subr.mxu0 0.0
        %2752 = vmatpush1.msra.mxu0 0.0
        %2753 = vmatprep.subr.mxu0 0.0
        %2754 = vmatpush1.msra.mxu0 0.0
        %2755 = vmatprep.subr.mxu0 0.0
        %2756 = vmatpush1.msra.mxu0 0.0
        %2757 = vmatprep.subr.mxu0 0.0
        %2758 = vmatpush1.msra.mxu0 0.0
        %2759 = vmatprep.subr.mxu0 0.0
        %2760 = vmatpush1.msra.mxu0 0.0
        %2761 = vmatprep.subr.mxu0 0.0
        %2762 = vmatpush1.msra.mxu0 0.0
        %2763 = vmatprep.subr.mxu0 0.0
        %2764 = vmatpush1.msra.mxu0 0.0
        %2765 = vmatprep.subr.mxu0 0.0
        %2766 = vmatpush1.msra.mxu0 0.0
        %2767 = vmatprep.subr.mxu0 0.0
        %2768 = vmatpush1.msra.mxu0 0.0
        %2769 = vmatprep.subr.mxu0 0.0
        %2770 = vmatpush1.msra.mxu0 0.0
        %2771 = vmatprep.subr.mxu0 0.0
        %2772 = vmatpush1.msra.mxu0 0.0
        %2773 = vmatprep.subr.mxu0 0.0
        %2774 = vmatpush1.msra.mxu0 0.0
        %2775 = vmatprep.subr.mxu0 0.0
        %2776 = vmatpush1.msra.mxu0 0.0
        %2777 = vmatprep.subr.mxu0 0.0
        %2778 = vmatpush1.msra.mxu0 0.0
        %2779 = vmatprep.mubr.f32.mxu0 0.0
        %2780 = vmatmul.mubr.f32.gmra.mrb[0].mxu0 %v2713
        %v2781 = vpop.f32.mrb[0].mxu0
        %v2782 = vadd.f32 %v2711, %v2781
        %v2783 = vpop.f32.mrb[0].mxu0
        %2784 = vdwg.mxu0
        %v2785 = vadd.f32 %v2594, %v2782
        %v2786 = vsel %vm355, %v2785, 0.0
        %2787 = vadd.xlane.f32.xlu0 %v2786
        %v2788 = vpop.xlane.xlu0 %2787
        %v2789 = vmul.f32 %v2788, %v359
        %v2790 = vsub.f32 %v2785, %v2789
        %v2791 = vmul.f32 %v2790, %v2790
        %v2792 = vsel %vm355, %v2791, 0.0
        %2793 = vadd.xlane.f32.xlu0 %v2792
        %v2794 = vpop.xlane.xlu0 %2793
        %v2795 = vmul.f32 %v2794, %v359
        %v2796 = vadd.f32 %v2795, 1e-05
        %v2797 = vrsqrt.pop %v2796
        %v2798 = vmul.f32 %v2790, %v2797
        %v2799 = vld [vmem:[#allocation2 + $0x27c] sm:$0x1]
        %v2800 = vlaneseq
        %v2801 = vshrl.u32 %v2800, 7
        %v2802 = vsub.s32 0, %v2801
        %v2803 = vrot.slane %v2799, %v2802
        %v2804 = vmul.f32 %v2798, %v2803
        %v2805 = vld [vmem:[#allocation2 + $0x27d] sm:$0x1]
        %v2806 = vlaneseq
        %v2807 = vshrl.u32 %v2806, 7
        %v2808 = vsub.s32 0, %v2807
        %v2809 = vrot.slane %v2805, %v2808
        %v2810 = vadd.f32 %v2804, %v2809
        %v2811 = vld [vmem:[#allocation2 + $0x240] sm:$0xff]
        %v2812 = vld [vmem:[#allocation2 + $0x248] sm:$0xff]
        %v2813 = vld [vmem:[#allocation2 + $0x250] sm:$0xff]
        %v2814 = vld [vmem:[#allocation2 + $0x258] sm:$0xff]
        %v2815 = vld [vmem:[#allocation2 + $0x27e] sm:$0x1]
        %v2816 = vlaneseq
        %v2817 = vshrl.u32 %v2816, 7
        %v2818 = vsub.s32 0, %v2817
        %v2819 = vrot.slane %v2815, %v2818
        %v2821 = vsel %vm355, %v2810, 0
        %2823 = vmatprep.subr.mxu0 0.0
        %2824 = vmatpush1.msra.mxu0 %v2811
        %2825 = vmatprep.subr.mxu0 0.0
        %2826 = vmatpush1.msra.mxu0 %v2812
        %2827 = vmatprep.subr.mxu0 0.0
        %2828 = vmatpush1.msra.mxu0 %v2813
        %2829 = vmatprep.subr.mxu0 0.0
        %2830 = vmatpush1.msra.mxu0 %v2814
        %2831 = vmatprep.subr.mxu0 0.0
        %2832 = vmatpush1.msra.mxu0 0.0
        %2833 = vmatprep.subr.mxu0 0.0
        %2834 = vmatpush1.msra.mxu0 0.0
        %2835 = vmatprep.subr.mxu0 0.0
        %2836 = vmatpush1.msra.mxu0 0.0
        %2837 = vmatprep.subr.mxu0 0.0
        %2838 = vmatpush1.msra.mxu0 0.0
        %2839 = vmatprep.subr.mxu0 0.0
        %2840 = vmatpush1.msra.mxu0 0.0
        %2841 = vmatprep.subr.mxu0 0.0
        %2842 = vmatpush1.msra.mxu0 0.0
        %2843 = vmatprep.subr.mxu0 0.0
        %2844 = vmatpush1.msra.mxu0 0.0
        %2845 = vmatprep.subr.mxu0 0.0
        %2846 = vmatpush1.msra.mxu0 0.0
        %2847 = vmatprep.subr.mxu0 0.0
        %2848 = vmatpush1.msra.mxu0 0.0
        %2849 = vmatprep.subr.mxu0 0.0
        %2850 = vmatpush1.msra.mxu0 0.0
        %2851 = vmatprep.subr.mxu0 0.0
        %2852 = vmatpush1.msra.mxu0 0.0
        %2853 = vmatprep.subr.mxu0 0.0
        %2854 = vmatpush1.msra.mxu0 0.0
        %2855 = vmatprep.subr.mxu0 0.0
        %2856 = vmatpush1.msra.mxu0 0.0
        %2857 = vmatprep.subr.mxu0 0.0
        %2858 = vmatpush1.msra.mxu0 0.0
        %2859 = vmatprep.subr.mxu0 0.0
        %2860 = vmatpush1.msra.mxu0 0.0
        %2861 = vmatprep.subr.mxu0 0.0
        %2862 = vmatpush1.msra.mxu0 0.0
        %2863 = vmatprep.subr.mxu0 0.0
        %2864 = vmatpush1.msra.mxu0 0.0
        %2865 = vmatprep.subr.mxu0 0.0
        %2866 = vmatpush1.msra.mxu0 0.0
        %2867 = vmatprep.subr.mxu0 0.0
        %2868 = vmatpush1.msra.mxu0 0.0
        %2869 = vmatprep.subr.mxu0 0.0
        %2870 = vmatpush1.msra.mxu0 0.0
        %2871 = vmatprep.subr.mxu0 0.0
        %2872 = vmatpush1.msra.mxu0 0.0
        %2873 = vmatprep.subr.mxu0 0.0
        %2874 = vmatpush1.msra.mxu0 0.0
        %2875 = vmatprep.subr.mxu0 0.0
        %2876 = vmatpush1.msra.mxu0 0.0
        %2877 = vmatprep.subr.mxu0 0.0
        %2878 = vmatpush1.msra.mxu0 0.0
        %2879 = vmatprep.subr.mxu0 0.0
        %2880 = vmatpush1.msra.mxu0 0.0
        %2881 = vmatprep.subr.mxu0 0.0
        %2882 = vmatpush1.msra.mxu0 0.0
        %2883 = vmatprep.subr.mxu0 0.0
        %2884 = vmatpush1.msra.mxu0 0.0
        %2885 = vmatprep.subr.mxu0 0.0
        %2886 = vmatpush1.msra.mxu0 0.0
        %2887 = vmatprep.mubr.f32.mxu0 0.0
        %2888 = vmatmul.mubr.f32.gmra.mrb[0].mxu0 %v2821
        %v2889 = vpop.f32.mrb[0].mxu0
        %v2890 = vadd.f32 %v2819, %v2889
        %v2891 = vpop.f32.mrb[0].mxu0
        %2892 = vdwg.mxu0
        %2893 = vst [vmem:[%s219] sm:$0xff] %v2890
        %vm2894 = vcmp.lt.s32.totalorder %v238, 64
        %v2895 = vld [vmem:[%s229 + $0x10] sm:$0xff]
        %v2896 = vsel %vm2894, %v2890, -1e+30
        %2897 = vmax.xlane.f32.xlu0 %v2896
        %v2898 = vpop.xlane.xlu0 %2897
        %v2899 = vsub.f32 %v2890, %v2898
        %v2900 = vmul.f32 %v2899, 1.442695
        %v2901 = vpow.pop %v2900
        %v2902 = vsel %vm2894, %v2901, 0.0
        %2903 = vadd.xlane.f32.xlu0 %v2902
        %v2904 = vpop.xlane.xlu0 %2903
        %v2905 = vlog2.pop %v2904
        %v2906 = vmul.f32 %v2905, 0.6931472
        %v2907 = vadd.f32 %v2906, %v2898
        %2908 = vset.pattern.permute.xlu0 0
        %2909 = vperm.xlu0 %2908, %v2895
        %v2910 = vpop.permute.xlu0 %2909
        %vm2911 = vcmp.eq.s32.totalorder %v238, %v2910
        %v2912 = vsel %vm2911, %v2890, 0.0
        %2913 = vadd.xlane.f32.xlu0 %v2912
        %v2914 = vpop.xlane.xlu0 %2913
        %v2915 = vsub.f32 %v2907, %v2914
        %vm2916 = vcmp.ne.s32.totalorder %v2895, 0
        %v2917 = vsel %vm2916, 1, 0
        %v2918 = vcvt.s32.f32 %v2917
        %v2919 = vmul.f32 %v2915, %v2918
        %vm2920 = vcmask 7168
        %v2921 = vsel %vm2920, %v2919, 0.0
        %v2922 = vrot.slane %v2921, 4
        %v2923 = vadd.f32 %v2921, %v2922
        %v2924 = vrot.slane %v2923, 2
        %v2925 = vadd.f32 %v2923, %v2924
        %v2926 = vrot.slane %v2925, 1
        %v2927 = vadd.f32 %v2925, %v2926
        %v2928 = vsel %vm2920, %v2918, 0.0
        %v2929 = vrot.slane %v2928, 4
        %v2930 = vadd.f32 %v2928, %v2929
        %v2931 = vrot.slane %v2930, 2
        %v2932 = vadd.f32 %v2930, %v2931
        %v2933 = vrot.slane %v2932, 1
        %v2934 = vadd.f32 %v2932, %v2933
        %vm2935 = vcmp.eq.s32.totalorder %v238, 0
        %2937 = vset.pattern.permute.xlu0 0
        %2938 = vperm.xlu0 %2937, %v2927
        %v2939 = vpop.permute.xlu0 %2938
        %v2941 = vsel %vm2935, %v2939, 0.0
        %vm2942 = vcmp.eq.s32.totalorder %v238, 1
        %2944 = vset.pattern.permute.xlu0 0
        %2945 = vperm.xlu0 %2944, %v2934
        %v2946 = vpop.permute.xlu0 %2945
        %v2948 = vsel %vm2942, %v2946, 0.0
        %v2949 = vadd.f32 %v2941, %v2948
        %2950 = vst [vmem:[%s236] sm:$0x1] %v2949
        %s2951 = sand.u32 %s101, 1
        %s2952 = scalar_lea.sflag [#allocation4], %s2951
        %s2953 = sand.u32 %s101, 1
        %s2954 = smul.addr %s2953, 8
        %s2955 = scalar_lea.vmem [#allocation5], %s2954
        %p2956 = scmp.lt.s32.totalorder %s20, 1
        %s2957 = scalar_select %p2956, %s20, 1
        %s2958 = scalar_lea.vmem %s4, %s2957
        // Predicated region
        $region37: #{model_forward.1} parent=31 // pred_check
          %p2959 = pneg %p111
        $region38: #{model_forward.1} parent=31 // pred_check_branch
          %2961 = sbr.rel (%p2959) target = $region40
        $region39: #{model_forward.1} parent=31 // pred_region
          %s2963 = ssub.s32 128, 128
          %2964 = vsyncadd %s2952, %s2963
          %s2965 = smul.addr %s20, 128
          %s2966 = scalar_lea.hbm %s3, %s2965
          %s2968 = sshll.u32 %s2955, 4
          %s2969 = int_to_ptr.vmem [resolvable:$true] %s2968
          %2971 = dma.vmem_to_hbm [thread:$0]  %s2969, 128, %s2966, %s2952
        $region40: #{model_forward.1} parent=31 // pred_fallthru
          _
        // Predicated region
        $region41: #{model_forward.1} parent=31 // pred_check
          %p2972 = pneg %p137
        $region42: #{model_forward.1} parent=31 // pred_check_branch
          %2974 = sbr.rel (%p2972) target = $region44
        $region43: #{model_forward.1} parent=31 // pred_region
          _
        $region44: #{model_forward.1} parent=31 // pred_fallthru
          _
      $region32: #{model_forward.1} parent=5 // pred_fallthru
        _
      %p2975 = scmp.le.s32.totalorder 2, %s15
      // Predicated region
      $region45: #{model_forward.1} parent=5 // pred_check
        %p2976 = pneg %p2975
      $region46: #{model_forward.1} parent=5 // pred_check_branch
        %2978 = sbr.rel (%p2976) target = $region48
      $region47: #{model_forward.1} parent=5 // pred_region
        %s2979 = ssub.s32 %s15, 2
        // Predicated region
        $region49: #{model_forward.1} parent=47 // pred_check
          %p2980 = pneg %p117
        $region50: #{model_forward.1} parent=47 // pred_check_branch
          %2982 = sbr.rel (%p2980) target = $region52
        $region51: #{model_forward.1} parent=47 // pred_region
          %s2983 = sand.u32 %s102, 1
          %s2984 = scalar_lea.sflag [#allocation4], %s2983
          %s2985 = sand.u32 %s102, 1
          %s2986 = smul.addr %s2985, 8
          %s2987 = scalar_lea.vmem [#allocation5], %s2986
          %2988 = dma.done %s2984, 128
        $region52: #{model_forward.1} parent=47 // pred_fallthru
          _
        // Predicated region
        $region53: #{model_forward.1} parent=47 // pred_check
          %p2989 = pneg %p143
        $region54: #{model_forward.1} parent=47 // pred_check_branch
          %2991 = sbr.rel (%p2989) target = $region56
        $region55: #{model_forward.1} parent=47 // pred_region
          %p2992 = scmp.lt.s32.totalorder %s21, 1
          %s2993 = scalar_select %p2992, %s21, 1
          %s2994 = scalar_lea.vmem %s4, %s2993
        $region56: #{model_forward.1} parent=47 // pred_fallthru
          _
      $region48: #{model_forward.1} parent=5 // pred_fallthru
        _
    $region6: #{model_forward.1} parent=1 // loop_footer
      %s19 = sadd.s32 1, %s15
    $region7: #{model_forward.1} parent=1 // loop_footer_branch
      %14 = sbr.rel target = $region3
    $region8: #{model_forward.1} parent=1 // loop_exit
      _
    %2995 = vsyncpa [#allocation3], 1
    %s2996 = scalar_lea.sflag [#allocation3], 1
    %2997 = vsyncpa %s2996, 1
    %2998 = vsyncpa [#allocation4], 1
    %s2999 = scalar_lea.sflag [#allocation4], 1
    %3000 = vsyncpa %s2999, 1

</llo_original>
